<compile_context>
chip_gen: v6e
topology: v6e:2x2x1
jax: 0.10.0
libtpu: 0.0.40
codegen_flags: <defaults>
</compile_context>

<pallas_src>
import jax
import jax.numpy as jnp
from jax.experimental import pallas as pl
from jax.experimental.pallas import tpu as pltpu

_HIGHEST = jax.lax.Precision.HIGHEST
_VMEM_LIMIT_BYTES = 48 * 1024 * 1024   # > v5e's 16 MiB scoped default, < v7x's 64 MiB physical
_SPLIT_MIN_BATCH = 32768               # force >=2 grid steps above this (v7x megacore)


def rbf_dict_kernel(xp_ref, ap_ref, bp_ref, mx_ref, mr_ref, bias_ref, out_ref):
    """One packed batch tile.

    xp_ref:   [S, 128]                 packed x: lane l -> (batch l//dim within group, d = l%dim)
    ap_ref:   [numRBF, 128]            0.5*steep, replicated per-lane pattern
    bp_ref:   [numRBF, 128]            0.5*steep*center, same pattern
    mx_ref:   [128, P*koopDim]         block_diag_P( W[:, 1:1+dim].T )
    mr_ref:   [numRBF, 128, P*koopDim] block_diag_P( rows = -0.25*W[:, 1+dim+r] )
    bias_ref: [1, P*koopDim]           tiled ( W[:,0] + 0.25*dim*rowsum(W[:,1+dim:]) )
    out_ref:  [S, P*koopDim]           packed output; free-reshapes to [P*S, koopDim]
    """
    xp = xp_ref[...]                                       # [S, 128] (dense lanes)
    ap = ap_ref[...]
    bp = bp_ref[...]
    mr = mr_ref[...]

    # x-contribution + (implicit) ones-column bias handled by mx / bias.
    acc = jnp.dot(xp, mx_ref[...], preferred_element_type=jnp.float32,
                  precision=_HIGHEST)                      # [S, P*koopDim]

    # RBF dictionary: e/(1+e)^2 == 0.25*(1 - tanh(z/2)^2); all constants are
    # pre-folded, so per element only a*x - b, tanh, and t*t remain.  The
    # per-dim reduce and the Koopman columns ride the same MXU dot.
    for r in range(ap.shape[0]):                           # numRBF is small & static
        t = jnp.tanh(ap[r:r + 1, :] * xp - bp[r:r + 1, :])
        acc = acc + jnp.dot(t * t, mr[r], preferred_element_type=jnp.float32,
                            precision=_HIGHEST)

    out_ref[...] = (acc + bias_ref[...]).astype(out_ref.dtype)


def _round_up(n, m):
    return ((n + m - 1) // m) * m


def _choose_tiling(batch, quantum, max_b_tile):
    """Pick (n_steps, b_tile) with padding bounded by ~one granule per step,
    tiles capped at max_b_tile, and even >=2-step grids for v7x megacore."""
    n_steps = max(1, pl.cdiv(batch, max_b_tile))
    if n_steps == 1 and batch >= _SPLIT_MIN_BATCH:
        n_steps = 2                       # enough work: use both v7x TensorCores
    if n_steps > 1 and n_steps % 2:
        n_steps += 1                      # even step count -> balanced core split
    b_tile = _round_up(pl.cdiv(batch, n_steps), quantum)
    return n_steps, b_tile


def rbf_dict_forward(x, centers, steepnesses, koopman_weight, *, max_b_tile=65536):
    """x: [batch, dim]; centers/steepnesses: [numRBF, dim];
    koopman_weight: [koopDim, koopDim] (PyTorch Linear convention).
    Returns [batch, koopDim]."""
    batch, dim = x.shape
    num_rbf = centers.shape[0]
    koop_dim = 1 + dim + num_rbf
    assert koopman_weight.shape == (koop_dim, koop_dim)
    # TODO(synk): the lane-packing assumes 128 % dim == 0 (true for this module's
    # dim=4); other dims would need a padded packing scheme.
    assert 128 % dim == 0, "packed layout requires dim to divide 128"

    p = 128 // dim                 # batch rows packed per 128-lane row (32 for dim=4)
    out_w = p * koop_dim           # packed output width (256 here -> lane-dense stores)
    quantum = 8 * p                # b_tile granularity so VMEM sublane counts are x8

    n_steps, b_tile = _choose_tiling(batch, quantum, max_b_tile)
    b_pad = b_tile * n_steps
    s_tile = b_tile // p

    # ---- wrapper glue: free contiguous reshapes only (+ a bounded, small pad) ----
    if b_pad != batch:
        x = jnp.pad(x, ((0, b_pad - batch), (0, 0)))
    xp = x.reshape(b_pad // p, 128)                        # free: row-major reinterpret

    # ---- pre-folded tiny constants (dozens..hundreds of elements, built once) ----
    a = 0.5 * steepnesses                                  # [numRBF, dim]
    b = a * centers
    ap = jnp.tile(a, (1, p))                               # [numRBF, 128]
    bp = jnp.tile(b, (1, p))

    eye_p = jnp.eye(p, dtype=jnp.float32)
    w_x_t = koopman_weight[:, 1:1 + dim].T                 # [dim, koopDim]
    w_r = koopman_weight[:, 1 + dim:]                      # [koopDim, numRBF]
    mx = jnp.kron(eye_p, w_x_t)                            # [128, out_w]
    mr = jnp.stack(
        [jnp.kron(eye_p,
                  jnp.broadcast_to(-0.25 * w_r[:, r][None, :], (dim, koop_dim)))
         for r in range(num_rbf)], axis=0)                 # [numRBF, 128, out_w]
    bias_vec = koopman_weight[:, 0] + 0.25 * dim * jnp.sum(w_r, axis=1)
    bias_row = jnp.tile(bias_vec, p)[None, :]              # [1, out_w]

    out_packed = pl.pallas_call(
        rbf_dict_kernel,
        out_shape=jax.ShapeDtypeStruct((b_pad // p, out_w), jnp.float32),
        grid_spec=pltpu.PrefetchScalarGridSpec(
            num_scalar_prefetch=0,
            grid=(n_steps,),
            in_specs=[
                pl.BlockSpec((s_tile, 128), lambda i: (i, 0)),            # packed x (tiled)
                pl.BlockSpec((num_rbf, 128), lambda i: (0, 0)),           # a (resident)
                pl.BlockSpec((num_rbf, 128), lambda i: (0, 0)),           # b (resident)
                pl.BlockSpec((128, out_w), lambda i: (0, 0)),             # block-diag Wx
                pl.BlockSpec((num_rbf, 128, out_w), lambda i: (0, 0, 0)), # block-diag Wrbf
                pl.BlockSpec((1, out_w), lambda i: (0, 0)),               # folded bias row
            ],
            out_specs=pl.BlockSpec((s_tile, out_w), lambda i: (i, 0)),
        ),
        compiler_params=pltpu.CompilerParams(
            dimension_semantics=("parallel",),
            vmem_limit_bytes=_VMEM_LIMIT_BYTES),
    )(xp, ap, bp, mx, mr, bias_row)

    # Free metadata reshape back to [b_pad, koopDim]; slice drops padded rows.
    return out_packed.reshape(b_pad, koop_dim)[:batch]


def rbf_dict_forward_ref(x, centers, steepnesses, koopman_weight):
    """Pure-JAX reference mirroring the PyTorch code (naive e/(1+e)^2 form)."""
    e = jnp.exp(steepnesses[None, :, :] * (x[:, None, :] - centers[None, :, :]))
    rbfs = jnp.sum(e / ((1.0 + e) ** 2), axis=2)                      # [B, numRBF]
    lifted = jnp.concatenate(
        [jnp.ones((x.shape[0], 1), x.dtype), x, rbfs], axis=1)        # [B, koopDim]
    return jnp.dot(lifted, koopman_weight.T, precision=_HIGHEST)


if __name__ == "__main__":
    # Module hyper-parameters (small, consistent with the forward pass)
    batch, dim, num_rbf = 16, 4, 3
    koop_dim = 1 + dim + num_rbf

    key = jax.random.PRNGKey(0)
    k_x, k_c, k_s, k_w, k_x2 = jax.random.split(key, 5)

    # Deterministic parameter init matching __init__ distributions:
    #   centers/steepnesses ~ U(0, 10); Koopman ~ kaiming_normal (fan_in mode)
    x = jax.random.normal(k_x, (batch, dim), dtype=jnp.float32)
    centers = jax.random.uniform(k_c, (num_rbf, dim), minval=0.0, maxval=10.0,
                                 dtype=jnp.float32)
    steepnesses = jax.random.uniform(k_s, (num_rbf, dim), minval=0.0, maxval=10.0,
                                     dtype=jnp.float32)
    kaiming_std = (2.0 / koop_dim) ** 0.5
    koopman_w = kaiming_std * jax.random.normal(k_w, (koop_dim, koop_dim),
                                                dtype=jnp.float32)

    # Check 1: tiny batch (single grid step, padded to one granule).
    out = jax.block_until_ready(rbf_dict_forward(x, centers, steepnesses, koopman_w))
    ref = rbf_dict_forward_ref(x, centers, steepnesses, koopman_w)
    assert out.shape == (batch, koop_dim)
    assert jnp.allclose(out, ref, atol=1e-4, rtol=1e-4), \
        float(jnp.max(jnp.abs(out - ref)))

    # Check 2: batch=1000 exercises the padding path (1000 -> 1024).
    x2 = jax.random.normal(k_x2, (1000, dim), dtype=jnp.float32)
    out2 = jax.block_until_ready(rbf_dict_forward(x2, centers, steepnesses, koopman_w))
    ref2 = rbf_dict_forward_ref(x2, centers, steepnesses, koopman_w)
    assert out2.shape == (1000, koop_dim)
    assert jnp.allclose(out2, ref2, atol=1e-4, rtol=1e-4), \
        float(jnp.max(jnp.abs(out2 - ref2)))

    # Check 3: small tile override forces a multi-step (even) grid, grid=(2,).
    out3 = jax.block_until_ready(
        rbf_dict_forward(x2, centers, steepnesses, koopman_w, max_b_tile=512))
    assert jnp.allclose(out3, ref2, atol=1e-4, rtol=1e-4), \
        float(jnp.max(jnp.abs(out3 - ref2)))

    print("KERNEL_OK")
</pallas_src>

<mosaic_0001>
module attributes {stable_mosaic.version = 11 : i64} {
  func.func @rbf_dict_kernel(%arg0: i32, %arg1: memref<8x128xf32, #tpu.memory_space<vmem>>, %arg2: memref<3x128xf32, #tpu.memory_space<vmem>>, %arg3: memref<3x128xf32, #tpu.memory_space<vmem>>, %arg4: memref<128x256xf32, #tpu.memory_space<vmem>>, %arg5: memref<3x128x256xf32, #tpu.memory_space<vmem>>, %arg6: memref<1x256xf32, #tpu.memory_space<vmem>>, %arg7: memref<8x256xf32, #tpu.memory_space<vmem>>) attributes {dimension_semantics = [#tpu.dimension_semantics<parallel>], iteration_bounds = array<i64: 1>, scalar_prefetch = 0 : i64, scratch_operands = 0 : i64, tpu.core_type = #tpu.core_type<tc>, window_params = [{transform_indices = @transform_0, window_bounds = array<i64: 8, 128>}, {pipeline_mode = #tpu.pipeline_mode<synchronous>, transform_indices = @transform_1, window_bounds = array<i64: 3, 128>}, {pipeline_mode = #tpu.pipeline_mode<synchronous>, transform_indices = @transform_2, window_bounds = array<i64: 3, 128>}, {pipeline_mode = #tpu.pipeline_mode<synchronous>, transform_indices = @transform_3, window_bounds = array<i64: 128, 256>}, {pipeline_mode = #tpu.pipeline_mode<synchronous>, transform_indices = @transform_4, window_bounds = array<i64: 3, 128, 256>}, {pipeline_mode = #tpu.pipeline_mode<synchronous>, transform_indices = @transform_5, window_bounds = array<i64: 1, 256>}, {transform_indices = @transform_6, window_bounds = array<i64: 8, 256>}]} {
    %c0 = arith.constant 0 : index
    %c0_0 = arith.constant 0 : index
    %0 = vector.load %arg1[%c0, %c0_0] : memref<8x128xf32, #tpu.memory_space<vmem>>, vector<8x128xf32>
    %c0_1 = arith.constant 0 : index
    %c0_2 = arith.constant 0 : index
    %1 = vector.load %arg2[%c0_1, %c0_2] : memref<3x128xf32, #tpu.memory_space<vmem>>, vector<3x128xf32>
    %c0_3 = arith.constant 0 : index
    %c0_4 = arith.constant 0 : index
    %2 = vector.load %arg3[%c0_3, %c0_4] : memref<3x128xf32, #tpu.memory_space<vmem>>, vector<3x128xf32>
    %c0_5 = arith.constant 0 : index
    %c0_6 = arith.constant 0 : index
    %c0_7 = arith.constant 0 : index
    %3 = vector.load %arg5[%c0_5, %c0_6, %c0_7] : memref<3x128x256xf32, #tpu.memory_space<vmem>>, vector<3x128x256xf32>
    %c0_8 = arith.constant 0 : index
    %c0_9 = arith.constant 0 : index
    %4 = vector.load %arg4[%c0_8, %c0_9] : memref<128x256xf32, #tpu.memory_space<vmem>>, vector<128x256xf32>
    %cst = arith.constant dense<0.000000e+00> : vector<8x256xf32>
    %5 = tpu.matmul %0, %4, %cst {dimension_numbers = #tpu.dot_dimension_numbers<[1], [0], [0], [1], [0, 0, 1, 1], [], []>, precision = #tpu.contract_precision<fp32>} : vector<8x128xf32>, vector<128x256xf32>, vector<8x256xf32> -> vector<8x256xf32>
    %6 = vector.extract_strided_slice %1 {offsets = [0, 0], sizes = [1, 128], strides = [1, 1]} : vector<3x128xf32> to vector<1x128xf32>
    %7 = vector.broadcast %6 : vector<1x128xf32> to vector<8x128xf32>
    %8 = arith.mulf %7, %0 : vector<8x128xf32>
    %9 = vector.extract_strided_slice %2 {offsets = [0, 0], sizes = [1, 128], strides = [1, 1]} : vector<3x128xf32> to vector<1x128xf32>
    %10 = vector.broadcast %9 : vector<1x128xf32> to vector<8x128xf32>
    %11 = arith.subf %8, %10 : vector<8x128xf32>
    %12 = math.tanh %11 : vector<8x128xf32>
    %13 = arith.mulf %12, %12 : vector<8x128xf32>
    %14 = vector.extract_strided_slice %3 {offsets = [0, 0, 0], sizes = [1, 128, 256], strides = [1, 1, 1]} : vector<3x128x256xf32> to vector<1x128x256xf32>
    %15 = vector.shape_cast %14 : vector<1x128x256xf32> to vector<128x256xf32>
    %cst_10 = arith.constant dense<0.000000e+00> : vector<8x256xf32>
    %16 = tpu.matmul %13, %15, %cst_10 {dimension_numbers = #tpu.dot_dimension_numbers<[1], [0], [0], [1], [0, 0, 1, 1], [], []>, precision = #tpu.contract_precision<fp32>} : vector<8x128xf32>, vector<128x256xf32>, vector<8x256xf32> -> vector<8x256xf32>
    %17 = arith.addf %5, %16 : vector<8x256xf32>
    %18 = vector.extract_strided_slice %1 {offsets = [1, 0], sizes = [1, 128], strides = [1, 1]} : vector<3x128xf32> to vector<1x128xf32>
    %19 = vector.broadcast %18 : vector<1x128xf32> to vector<8x128xf32>
    %20 = arith.mulf %19, %0 : vector<8x128xf32>
    %21 = vector.extract_strided_slice %2 {offsets = [1, 0], sizes = [1, 128], strides = [1, 1]} : vector<3x128xf32> to vector<1x128xf32>
    %22 = vector.broadcast %21 : vector<1x128xf32> to vector<8x128xf32>
    %23 = arith.subf %20, %22 : vector<8x128xf32>
    %24 = math.tanh %23 : vector<8x128xf32>
    %25 = arith.mulf %24, %24 : vector<8x128xf32>
    %26 = vector.extract_strided_slice %3 {offsets = [1, 0, 0], sizes = [1, 128, 256], strides = [1, 1, 1]} : vector<3x128x256xf32> to vector<1x128x256xf32>
    %27 = vector.shape_cast %26 : vector<1x128x256xf32> to vector<128x256xf32>
    %cst_11 = arith.constant dense<0.000000e+00> : vector<8x256xf32>
    %28 = tpu.matmul %25, %27, %cst_11 {dimension_numbers = #tpu.dot_dimension_numbers<[1], [0], [0], [1], [0, 0, 1, 1], [], []>, precision = #tpu.contract_precision<fp32>} : vector<8x128xf32>, vector<128x256xf32>, vector<8x256xf32> -> vector<8x256xf32>
    %29 = arith.addf %17, %28 : vector<8x256xf32>
    %30 = vector.extract_strided_slice %1 {offsets = [2, 0], sizes = [1, 128], strides = [1, 1]} : vector<3x128xf32> to vector<1x128xf32>
    %31 = vector.broadcast %30 : vector<1x128xf32> to vector<8x128xf32>
    %32 = arith.mulf %31, %0 : vector<8x128xf32>
    %33 = vector.extract_strided_slice %2 {offsets = [2, 0], sizes = [1, 128], strides = [1, 1]} : vector<3x128xf32> to vector<1x128xf32>
    %34 = vector.broadcast %33 : vector<1x128xf32> to vector<8x128xf32>
    %35 = arith.subf %32, %34 : vector<8x128xf32>
    %36 = math.tanh %35 : vector<8x128xf32>
    %37 = arith.mulf %36, %36 : vector<8x128xf32>
    %38 = vector.extract_strided_slice %3 {offsets = [2, 0, 0], sizes = [1, 128, 256], strides = [1, 1, 1]} : vector<3x128x256xf32> to vector<1x128x256xf32>
    %39 = vector.shape_cast %38 : vector<1x128x256xf32> to vector<128x256xf32>
    %cst_12 = arith.constant dense<0.000000e+00> : vector<8x256xf32>
    %40 = tpu.matmul %37, %39, %cst_12 {dimension_numbers = #tpu.dot_dimension_numbers<[1], [0], [0], [1], [0, 0, 1, 1], [], []>, precision = #tpu.contract_precision<fp32>} : vector<8x128xf32>, vector<128x256xf32>, vector<8x256xf32> -> vector<8x256xf32>
    %41 = arith.addf %29, %40 : vector<8x256xf32>
    %c0_13 = arith.constant 0 : index
    %c0_14 = arith.constant 0 : index
    %42 = vector.load %arg6[%c0_13, %c0_14] : memref<1x256xf32, #tpu.memory_space<vmem>>, vector<1x256xf32>
    %43 = vector.broadcast %42 : vector<1x256xf32> to vector<8x256xf32>
    %44 = arith.addf %41, %43 : vector<8x256xf32>
    %c0_15 = arith.constant 0 : index
    %c0_16 = arith.constant 0 : index
    %45 = vector.load %arg7[%c0_15, %c0_16] : memref<8x256xf32, #tpu.memory_space<vmem>>, vector<8x256xf32>
    tpu.vector_store %arg7[%c0_15, %c0_16], %44 {strides = array<i32>} : memref<8x256xf32, #tpu.memory_space<vmem>>, vector<8x256xf32>,
    return
  }
  func.func @transform_0(%arg0: i32) -> (i32, i32) {
    %c0_i32 = arith.constant 0 : i32
    %c0_i32_0 = arith.constant 0 : i32
    return %arg0, %c0_i32 : i32, i32
  }
  func.func @transform_1(%arg0: i32) -> (i32, i32) {
    %c0_i32 = arith.constant 0 : i32
    %c0_i32_0 = arith.constant 0 : i32
    %c0_i32_1 = arith.constant 0 : i32
    return %c0_i32, %c0_i32_0 : i32, i32
  }
  func.func @transform_2(%arg0: i32) -> (i32, i32) {
    %c0_i32 = arith.constant 0 : i32
    %c0_i32_0 = arith.constant 0 : i32
    %c0_i32_1 = arith.constant 0 : i32
    return %c0_i32, %c0_i32_0 : i32, i32
  }
  func.func @transform_3(%arg0: i32) -> (i32, i32) {
    %c0_i32 = arith.constant 0 : i32
    %c0_i32_0 = arith.constant 0 : i32
    %c0_i32_1 = arith.constant 0 : i32
    return %c0_i32, %c0_i32_0 : i32, i32
  }
  func.func @transform_4(%arg0: i32) -> (i32, i32, i32) {
    %c0_i32 = arith.constant 0 : i32
    %c0_i32_0 = arith.constant 0 : i32
    %c0_i32_1 = arith.constant 0 : i32
    %c0_i32_2 = arith.constant 0 : i32
    return %c0_i32, %c0_i32_0, %c0_i32_1 : i32, i32, i32
  }
  func.func @transform_5(%arg0: i32) -> (i32, i32) {
    %c0_i32 = arith.constant 0 : i32
    %c0_i32_0 = arith.constant 0 : i32
    %c0_i32_1 = arith.constant 0 : i32
    return %c0_i32, %c0_i32_0 : i32, i32
  }
  func.func @transform_6(%arg0: i32) -> (i32, i32) {
    %c0_i32 = arith.constant 0 : i32
    %c0_i32_0 = arith.constant 0 : i32
    return %arg0, %c0_i32 : i32, i32
  }
}

</mosaic_0001>

<llo_original>
// kernel: tpu_custom_call.1
$region0: #{tpu_custom_call.1}
  #allocation0 [shape = 'u32[]', space=smem, size = 0x4, offset = 0x4, fixed_abs, tag = 'smem constant byte address 0x4 - core index']
  #allocation1 [shape = 'u32[144,128]{1,0:T(1,128)}', space=vmem, size = 0x12000, scoped, tag = 'internal scratch']
  %s0 = inlined_call_operand.hbm [shape: f32[8,128], index: 0, kind: input, shape index: {}]
  %s1 = inlined_call_operand.hbm [shape: f32[3,128], index: 1, kind: input, shape index: {}]
  %s2 = inlined_call_operand.hbm [shape: f32[3,128], index: 2, kind: input, shape index: {}]
  %s3 = inlined_call_operand.hbm [shape: f32[128,256], index: 3, kind: input, shape index: {}]
  %s4 = inlined_call_operand.hbm [shape: f32[3,128,256], index: 4, kind: input, shape index: {}]
  %s5 = inlined_call_operand.vmem [shape: f32[1,256], index: 5, kind: input, shape index: {}]
  %s6 = inlined_call_operand.hbm [shape: f32[8,256], index: 6, kind: output, shape index: {}]
  %s7 = sld [smem:[#allocation0]]
  $region54: #{tpu_custom_call.1} parent=0
    _
  %s9 = ssub.s32 1, %s7
  %s10 = scalar_select 0, %s9, %s7
  $region1: #{tpu_custom_call.1} parent=0
    #allocation2 [shape = 'u8[4096]{0}', space=vmem, size = 0x1000, scoped, tag = 'input window, operand 0, single buffered']
    #allocation3 [shape = 's32[1]{0}', space=sflag, size = 0x4, scoped, tag = 'scoped memory for tpu_custom_call.1']
    #allocation4 [shape = 's32[1]{0}', space=sflag, size = 0x4, scoped, tag = 'scoped memory for tpu_custom_call.1']
    #allocation5 [shape = 'u8[2048]{0}', space=vmem, size = 0x800, scoped, tag = 'input window, operand 1, single buffered']
    #allocation6 [shape = 's32[1]{0}', space=sflag, size = 0x4, scoped, tag = 'scoped memory for tpu_custom_call.1']
    #allocation7 [shape = 'u8[2048]{0}', space=vmem, size = 0x800, scoped, tag = 'input window, operand 2, single buffered']
    #allocation8 [shape = 'u8[131072]{0}', space=vmem, size = 0x20000, scoped, tag = 'input window, operand 3, single buffered']
    #allocation9 [shape = 's32[1]{0}', space=sflag, size = 0x4, scoped, tag = 'scoped memory for tpu_custom_call.1']
    #allocation10 [shape = 'u8[393216]{0}', space=vmem, size = 0x60000, scoped, tag = 'input window, operand 4, single buffered']
    #allocation11 [shape = 'u8[8192]{0}', space=vmem, size = 0x2000, scoped, tag = 'output window, operand 0, single buffered']
    %11 = vsyncpa [#allocation3], 0
    %12 = vsyncpa [#allocation6], 0
    %13 = vsyncpa [#allocation9], 0
    %14 = vsyncpa [#allocation4], 0
    // Predicated region
    $region2: #{tpu_custom_call.1} parent=1 // pred_check
      _
    $region3: #{tpu_custom_call.1} parent=1 // pred_check_branch
      %16 = sbr.rel (0) target = $region5
    $region4: #{tpu_custom_call.1} parent=1 // pred_region
      %s18 = ssub.s32 128, 128
      %19 = vsyncadd [#allocation3], %s18
      %s21 = sshll.u32 [#allocation2], 4
      %s22 = int_to_ptr.vmem [resolvable:$true] %s21
      %24 = dma.hbm_to_vmem [thread:$0]  %s0, 128, %s22, [#allocation3]
    $region5: #{tpu_custom_call.1} parent=1 // pred_fallthru
      _
    // Predicated region
    $region6: #{tpu_custom_call.1} parent=1 // pred_check
      _
    $region7: #{tpu_custom_call.1} parent=1 // pred_check_branch
      %26 = sbr.rel (0) target = $region9
    $region8: #{tpu_custom_call.1} parent=1 // pred_region
      %s28 = ssub.s32 64, 64
      %29 = vsyncadd [#allocation6], %s28
      %s31 = sshll.u32 [#allocation5], 4
      %s32 = int_to_ptr.vmem [resolvable:$true] %s31
      %34 = dma.hbm_to_vmem [thread:$0]  %s1, 64, %s32, [#allocation6]
    $region9: #{tpu_custom_call.1} parent=1 // pred_fallthru
      _
    // Predicated region
    $region10: #{tpu_custom_call.1} parent=1 // pred_check
      _
    $region11: #{tpu_custom_call.1} parent=1 // pred_check_branch
      %36 = sbr.rel (0) target = $region13
    $region12: #{tpu_custom_call.1} parent=1 // pred_region
      %s38 = ssub.s32 64, 64
      %39 = vsyncadd [#allocation6], %s38
      %s41 = sshll.u32 [#allocation7], 4
      %s42 = int_to_ptr.vmem [resolvable:$true] %s41
      %44 = dma.hbm_to_vmem [thread:$0]  %s2, 64, %s42, [#allocation6]
    $region13: #{tpu_custom_call.1} parent=1 // pred_fallthru
      _
    // Predicated region
    $region14: #{tpu_custom_call.1} parent=1 // pred_check
      _
    $region15: #{tpu_custom_call.1} parent=1 // pred_check_branch
      %46 = sbr.rel (0) target = $region17
    $region16: #{tpu_custom_call.1} parent=1 // pred_region
      %s48 = ssub.s32 4096, 4096
      %49 = vsyncadd [#allocation9], %s48
      %s50 = sshll.u32 [#allocation8], 4
      %s51 = int_to_ptr.vmem [resolvable:$true] %s50
      %56 = dma.hbm_to_vmem [thread:$0]  %s3, 4096, %s51, [#allocation9], 256, 256, 16
    $region17: #{tpu_custom_call.1} parent=1 // pred_fallthru
      _
    // Predicated region
    $region18: #{tpu_custom_call.1} parent=1 // pred_check
      _
    $region19: #{tpu_custom_call.1} parent=1 // pred_check_branch
      %58 = sbr.rel (0) target = $region21
    $region20: #{tpu_custom_call.1} parent=1 // pred_region
      %s60 = ssub.s32 12288, 12288
      %61 = vsyncadd [#allocation9], %s60
      %s62 = sshll.u32 [#allocation10], 4
      %s63 = int_to_ptr.vmem [resolvable:$true] %s62
      %68 = dma.hbm_to_vmem [thread:$0]  %s4, 12288, %s63, [#allocation9], 256, 256, 16
    $region21: #{tpu_custom_call.1} parent=1 // pred_fallthru
      _
    // Predicated region
    $region22: #{tpu_custom_call.1} parent=1 // pred_check
      _
    $region23: #{tpu_custom_call.1} parent=1 // pred_check_branch
      %70 = sbr.rel (0) target = $region25
    $region24: #{tpu_custom_call.1} parent=1 // pred_region
      _
    $region25: #{tpu_custom_call.1} parent=1 // pred_fallthru
      _
    // Predicated region
    $region26: #{tpu_custom_call.1} parent=1 // pred_check
      _
    $region27: #{tpu_custom_call.1} parent=1 // pred_check_branch
      %72 = sbr.rel (0) target = $region29
    $region28: #{tpu_custom_call.1} parent=1 // pred_region
      %73 = dma.done [#allocation3], 128
    $region29: #{tpu_custom_call.1} parent=1 // pred_fallthru
      _
    // Predicated region
    $region30: #{tpu_custom_call.1} parent=1 // pred_check
      _
    $region31: #{tpu_custom_call.1} parent=1 // pred_check_branch
      %75 = sbr.rel (0) target = $region33
    $region32: #{tpu_custom_call.1} parent=1 // pred_region
      %76 = dma.done [#allocation6], 64
    $region33: #{tpu_custom_call.1} parent=1 // pred_fallthru
      _
    // Predicated region
    $region34: #{tpu_custom_call.1} parent=1 // pred_check
      _
    $region35: #{tpu_custom_call.1} parent=1 // pred_check_branch
      %78 = sbr.rel (0) target = $region37
    $region36: #{tpu_custom_call.1} parent=1 // pred_region
      %79 = dma.done [#allocation6], 64
    $region37: #{tpu_custom_call.1} parent=1 // pred_fallthru
      _
    // Predicated region
    $region38: #{tpu_custom_call.1} parent=1 // pred_check
      _
    $region39: #{tpu_custom_call.1} parent=1 // pred_check_branch
      %81 = sbr.rel (0) target = $region41
    $region40: #{tpu_custom_call.1} parent=1 // pred_region
      %82 = dma.done [#allocation9], 4096
    $region41: #{tpu_custom_call.1} parent=1 // pred_fallthru
      _
    // Predicated region
    $region42: #{tpu_custom_call.1} parent=1 // pred_check
      _
    $region43: #{tpu_custom_call.1} parent=1 // pred_check_branch
      %84 = sbr.rel (0) target = $region45
    $region44: #{tpu_custom_call.1} parent=1 // pred_region
      %85 = dma.done [#allocation9], 12288
    $region45: #{tpu_custom_call.1} parent=1 // pred_fallthru
      _
    %v86 = vld [vmem:[#allocation2] sm:$0xff]
    %v87 = vld [vmem:[#allocation5] sm:$0x7]
    %v88 = vld [vmem:[#allocation7] sm:$0x7]
    %v89 = vld [vmem:[#allocation10] sm:$0xff]
    %v90 = vld [vmem:[#allocation10 + $0x8] sm:$0xff]
    %v91 = vld [vmem:[#allocation10 + $0x10] sm:$0xff]
    %v92 = vld [vmem:[#allocation10 + $0x18] sm:$0xff]
    %v93 = vld [vmem:[#allocation10 + $0x20] sm:$0xff]
    %v94 = vld [vmem:[#allocation10 + $0x28] sm:$0xff]
    %v95 = vld [vmem:[#allocation10 + $0x30] sm:$0xff]
    %v96 = vld [vmem:[#allocation10 + $0x38] sm:$0xff]
    %v97 = vld [vmem:[#allocation10 + $0x40] sm:$0xff]
    %v98 = vld [vmem:[#allocation10 + $0x48] sm:$0xff]
    %v99 = vld [vmem:[#allocation10 + $0x50] sm:$0xff]
    %v100 = vld [vmem:[#allocation10 + $0x58] sm:$0xff]
    %v101 = vld [vmem:[#allocation10 + $0x60] sm:$0xff]
    %v102 = vld [vmem:[#allocation10 + $0x68] sm:$0xff]
    %v103 = vld [vmem:[#allocation10 + $0x70] sm:$0xff]
    %v104 = vld [vmem:[#allocation10 + $0x78] sm:$0xff]
    %v105 = vld [vmem:[#allocation10 + $0x80] sm:$0xff]
    %v106 = vld [vmem:[#allocation10 + $0x88] sm:$0xff]
    %v107 = vld [vmem:[#allocation10 + $0x90] sm:$0xff]
    %v108 = vld [vmem:[#allocation10 + $0x98] sm:$0xff]
    %v109 = vld [vmem:[#allocation10 + $0xa0] sm:$0xff]
    %v110 = vld [vmem:[#allocation10 + $0xa8] sm:$0xff]
    %v111 = vld [vmem:[#allocation10 + $0xb0] sm:$0xff]
    %v112 = vld [vmem:[#allocation10 + $0xb8] sm:$0xff]
    %v113 = vld [vmem:[#allocation10 + $0xc0] sm:$0xff]
    %v114 = vld [vmem:[#allocation10 + $0xc8] sm:$0xff]
    %v115 = vld [vmem:[#allocation10 + $0xd0] sm:$0xff]
    %v116 = vld [vmem:[#allocation10 + $0xd8] sm:$0xff]
    %v117 = vld [vmem:[#allocation10 + $0xe0] sm:$0xff]
    %v118 = vld [vmem:[#allocation10 + $0xe8] sm:$0xff]
    %v119 = vld [vmem:[#allocation10 + $0xf0] sm:$0xff]
    %v120 = vld [vmem:[#allocation10 + $0xf8] sm:$0xff]
    %v121 = vld [vmem:[#allocation10 + $0x100] sm:$0xff]
    %v122 = vld [vmem:[#allocation10 + $0x108] sm:$0xff]
    %v123 = vld [vmem:[#allocation10 + $0x110] sm:$0xff]
    %v124 = vld [vmem:[#allocation10 + $0x118] sm:$0xff]
    %v125 = vld [vmem:[#allocation10 + $0x120] sm:$0xff]
    %v126 = vld [vmem:[#allocation10 + $0x128] sm:$0xff]
    %v127 = vld [vmem:[#allocation10 + $0x130] sm:$0xff]
    %v128 = vld [vmem:[#allocation10 + $0x138] sm:$0xff]
    %v129 = vld [vmem:[#allocation10 + $0x140] sm:$0xff]
    %v130 = vld [vmem:[#allocation10 + $0x148] sm:$0xff]
    %v131 = vld [vmem:[#allocation10 + $0x150] sm:$0xff]
    %v132 = vld [vmem:[#allocation10 + $0x158] sm:$0xff]
    %v133 = vld [vmem:[#allocation10 + $0x160] sm:$0xff]
    %v134 = vld [vmem:[#allocation10 + $0x168] sm:$0xff]
    %v135 = vld [vmem:[#allocation10 + $0x170] sm:$0xff]
    %v136 = vld [vmem:[#allocation10 + $0x178] sm:$0xff]
    %v137 = vld [vmem:[#allocation10 + $0x180] sm:$0xff]
    %v138 = vld [vmem:[#allocation10 + $0x188] sm:$0xff]
    %v139 = vld [vmem:[#allocation10 + $0x190] sm:$0xff]
    %v140 = vld [vmem:[#allocation10 + $0x198] sm:$0xff]
    %v141 = vld [vmem:[#allocation10 + $0x1a0] sm:$0xff]
    %v142 = vld [vmem:[#allocation10 + $0x1a8] sm:$0xff]
    %v143 = vld [vmem:[#allocation10 + $0x1b0] sm:$0xff]
    %v144 = vld [vmem:[#allocation10 + $0x1b8] sm:$0xff]
    %v145 = vld [vmem:[#allocation10 + $0x1c0] sm:$0xff]
    %v146 = vld [vmem:[#allocation10 + $0x1c8] sm:$0xff]
    %v147 = vld [vmem:[#allocation10 + $0x1d0] sm:$0xff]
    %v148 = vld [vmem:[#allocation10 + $0x1d8] sm:$0xff]
    %v149 = vld [vmem:[#allocation10 + $0x1e0] sm:$0xff]
    %v150 = vld [vmem:[#allocation10 + $0x1e8] sm:$0xff]
    %v151 = vld [vmem:[#allocation10 + $0x1f0] sm:$0xff]
    %v152 = vld [vmem:[#allocation10 + $0x1f8] sm:$0xff]
    %v153 = vld [vmem:[#allocation10 + $0x200] sm:$0xff]
    %v154 = vld [vmem:[#allocation10 + $0x208] sm:$0xff]
    %v155 = vld [vmem:[#allocation10 + $0x210] sm:$0xff]
    %v156 = vld [vmem:[#allocation10 + $0x218] sm:$0xff]
    %v157 = vld [vmem:[#allocation10 + $0x220] sm:$0xff]
    %v158 = vld [vmem:[#allocation10 + $0x228] sm:$0xff]
    %v159 = vld [vmem:[#allocation10 + $0x230] sm:$0xff]
    %v160 = vld [vmem:[#allocation10 + $0x238] sm:$0xff]
    %v161 = vld [vmem:[#allocation10 + $0x240] sm:$0xff]
    %v162 = vld [vmem:[#allocation10 + $0x248] sm:$0xff]
    %v163 = vld [vmem:[#allocation10 + $0x250] sm:$0xff]
    %v164 = vld [vmem:[#allocation10 + $0x258] sm:$0xff]
    %v165 = vld [vmem:[#allocation10 + $0x260] sm:$0xff]
    %v166 = vld [vmem:[#allocation10 + $0x268] sm:$0xff]
    %v167 = vld [vmem:[#allocation10 + $0x270] sm:$0xff]
    %v168 = vld [vmem:[#allocation10 + $0x278] sm:$0xff]
    %v169 = vld [vmem:[#allocation10 + $0x280] sm:$0xff]
    %v170 = vld [vmem:[#allocation10 + $0x288] sm:$0xff]
    %v171 = vld [vmem:[#allocation10 + $0x290] sm:$0xff]
    %v172 = vld [vmem:[#allocation10 + $0x298] sm:$0xff]
    %v173 = vld [vmem:[#allocation10 + $0x2a0] sm:$0xff]
    %v174 = vld [vmem:[#allocation10 + $0x2a8] sm:$0xff]
    %v175 = vld [vmem:[#allocation10 + $0x2b0] sm:$0xff]
    %v176 = vld [vmem:[#allocation10 + $0x2b8] sm:$0xff]
    %v177 = vld [vmem:[#allocation10 + $0x2c0] sm:$0xff]
    %v178 = vld [vmem:[#allocation10 + $0x2c8] sm:$0xff]
    %v179 = vld [vmem:[#allocation10 + $0x2d0] sm:$0xff]
    %v180 = vld [vmem:[#allocation10 + $0x2d8] sm:$0xff]
    %v181 = vld [vmem:[#allocation10 + $0x2e0] sm:$0xff]
    %v182 = vld [vmem:[#allocation10 + $0x2e8] sm:$0xff]
    %v183 = vld [vmem:[#allocation10 + $0x2f0] sm:$0xff]
    %v184 = vld [vmem:[#allocation10 + $0x2f8] sm:$0xff]
    %v185 = vld [vmem:[#allocation8] sm:$0xff]
    %v186 = vld [vmem:[#allocation8 + $0x8] sm:$0xff]
    %v187 = vld [vmem:[#allocation8 + $0x10] sm:$0xff]
    %v188 = vld [vmem:[#allocation8 + $0x18] sm:$0xff]
    %v189 = vld [vmem:[#allocation8 + $0x20] sm:$0xff]
    %v190 = vld [vmem:[#allocation8 + $0x28] sm:$0xff]
    %v191 = vld [vmem:[#allocation8 + $0x30] sm:$0xff]
    %v192 = vld [vmem:[#allocation8 + $0x38] sm:$0xff]
    %v193 = vld [vmem:[#allocation8 + $0x40] sm:$0xff]
    %v194 = vld [vmem:[#allocation8 + $0x48] sm:$0xff]
    %v195 = vld [vmem:[#allocation8 + $0x50] sm:$0xff]
    %v196 = vld [vmem:[#allocation8 + $0x58] sm:$0xff]
    %v197 = vld [vmem:[#allocation8 + $0x60] sm:$0xff]
    %v198 = vld [vmem:[#allocation8 + $0x68] sm:$0xff]
    %v199 = vld [vmem:[#allocation8 + $0x70] sm:$0xff]
    %v200 = vld [vmem:[#allocation8 + $0x78] sm:$0xff]
    %v201 = vld [vmem:[#allocation8 + $0x80] sm:$0xff]
    %v202 = vld [vmem:[#allocation8 + $0x88] sm:$0xff]
    %v203 = vld [vmem:[#allocation8 + $0x90] sm:$0xff]
    %v204 = vld [vmem:[#allocation8 + $0x98] sm:$0xff]
    %v205 = vld [vmem:[#allocation8 + $0xa0] sm:$0xff]
    %v206 = vld [vmem:[#allocation8 + $0xa8] sm:$0xff]
    %v207 = vld [vmem:[#allocation8 + $0xb0] sm:$0xff]
    %v208 = vld [vmem:[#allocation8 + $0xb8] sm:$0xff]
    %v209 = vld [vmem:[#allocation8 + $0xc0] sm:$0xff]
    %v210 = vld [vmem:[#allocation8 + $0xc8] sm:$0xff]
    %v211 = vld [vmem:[#allocation8 + $0xd0] sm:$0xff]
    %v212 = vld [vmem:[#allocation8 + $0xd8] sm:$0xff]
    %v213 = vld [vmem:[#allocation8 + $0xe0] sm:$0xff]
    %v214 = vld [vmem:[#allocation8 + $0xe8] sm:$0xff]
    %v215 = vld [vmem:[#allocation8 + $0xf0] sm:$0xff]
    %v216 = vld [vmem:[#allocation8 + $0xf8] sm:$0xff]
    %v217 = vlaneseq
    %v218 = vshrl.u32 %v217, 7
    %v219 = vsub.s32 0, %v218
    %v220 = vrot.slane %v87, %v219
    %v221 = vmul.f32 %v220, %v86
    %v222 = vlaneseq
    %v223 = vshrl.u32 %v222, 7
    %v224 = vsub.s32 0, %v223
    %v225 = vrot.slane %v88, %v224
    %v226 = vsub.f32 %v221, %v225
    %v227 = vtanh.pop %v226
    %v228 = vmul.f32 %v227, %v227
    %v229 = vand.u32 %v120, 4294901760
    %230 = vmatprep.subr.mxu0 %v229
    %v231 = vand.u32 %v119, 4294901760
    %232 = vmatpush1.msra.mxu0 %v231
    %v233 = vand.u32 %v118, 4294901760
    %234 = vmatprep.subr.mxu0 %v233
    %v235 = vand.u32 %v117, 4294901760
    %236 = vmatpush1.msra.mxu0 %v235
    %v237 = vand.u32 %v116, 4294901760
    %238 = vmatprep.subr.mxu0 %v237
    %v239 = vand.u32 %v115, 4294901760
    %240 = vmatpush1.msra.mxu0 %v239
    %v241 = vand.u32 %v114, 4294901760
    %242 = vmatprep.subr.mxu0 %v241
    %v243 = vand.u32 %v113, 4294901760
    %244 = vmatpush1.msra.mxu0 %v243
    %v245 = vand.u32 %v112, 4294901760
    %246 = vmatprep.subr.mxu0 %v245
    %v247 = vand.u32 %v111, 4294901760
    %248 = vmatpush1.msra.mxu0 %v247
    %v249 = vand.u32 %v110, 4294901760
    %250 = vmatprep.subr.mxu0 %v249
    %v251 = vand.u32 %v109, 4294901760
    %252 = vmatpush1.msra.mxu0 %v251
    %v253 = vand.u32 %v108, 4294901760
    %254 = vmatprep.subr.mxu0 %v253
    %v255 = vand.u32 %v107, 4294901760
    %256 = vmatpush1.msra.mxu0 %v255
    %v257 = vand.u32 %v106, 4294901760
    %258 = vmatprep.subr.mxu0 %v257
    %v259 = vand.u32 %v105, 4294901760
    %260 = vmatpush1.msra.mxu0 %v259
    %v261 = vand.u32 %v104, 4294901760
    %262 = vmatprep.subr.mxu0 %v261
    %v263 = vand.u32 %v103, 4294901760
    %264 = vmatpush1.msra.mxu0 %v263
    %v265 = vand.u32 %v102, 4294901760
    %266 = vmatprep.subr.mxu0 %v265
    %v267 = vand.u32 %v101, 4294901760
    %268 = vmatpush1.msra.mxu0 %v267
    %v269 = vand.u32 %v100, 4294901760
    %270 = vmatprep.subr.mxu0 %v269
    %v271 = vand.u32 %v99, 4294901760
    %272 = vmatpush1.msra.mxu0 %v271
    %v273 = vand.u32 %v98, 4294901760
    %274 = vmatprep.subr.mxu0 %v273
    %v275 = vand.u32 %v97, 4294901760
    %276 = vmatpush1.msra.mxu0 %v275
    %v277 = vand.u32 %v96, 4294901760
    %278 = vmatprep.subr.mxu0 %v277
    %v279 = vand.u32 %v95, 4294901760
    %280 = vmatpush1.msra.mxu0 %v279
    %v281 = vand.u32 %v94, 4294901760
    %282 = vmatprep.subr.mxu0 %v281
    %v283 = vand.u32 %v93, 4294901760
    %284 = vmatpush1.msra.mxu0 %v283
    %v285 = vand.u32 %v92, 4294901760
    %286 = vmatprep.subr.mxu0 %v285
    %v287 = vand.u32 %v91, 4294901760
    %288 = vmatpush1.msra.mxu0 %v287
    %v289 = vand.u32 %v90, 4294901760
    %290 = vmatprep.subr.mxu0 %v289
    %v291 = vand.u32 %v89, 4294901760
    %292 = vmatpush1.msra.mxu0 %v291
    %293 = vmatprep.subr.mxu0 0.0
    %294 = vmatpush2.msra.mxu0 0.0
    %295 = vmatprep.subr.mxu0 0.0
    %296 = vmatpush2.msra.mxu0 0.0
    %297 = vmatprep.subr.mxu0 0.0
    %298 = vmatpush2.msra.mxu0 0.0
    %299 = vmatprep.subr.mxu0 0.0
    %300 = vmatpush2.msra.mxu0 0.0
    %301 = vmatprep.subr.mxu0 0.0
    %302 = vmatpush2.msra.mxu0 0.0
    %303 = vmatprep.subr.mxu0 0.0
    %304 = vmatpush2.msra.mxu0 0.0
    %305 = vmatprep.subr.mxu0 0.0
    %306 = vmatpush2.msra.mxu0 0.0
    %307 = vmatprep.subr.mxu0 0.0
    %308 = vmatpush2.msra.mxu0 0.0
    %309 = vmatprep.subr.mxu0 0.0
    %310 = vmatpush2.msra.mxu0 0.0
    %311 = vmatprep.subr.mxu0 0.0
    %312 = vmatpush2.msra.mxu0 0.0
    %313 = vmatprep.subr.mxu0 0.0
    %314 = vmatpush2.msra.mxu0 0.0
    %315 = vmatprep.subr.mxu0 0.0
    %316 = vmatpush2.msra.mxu0 0.0
    %317 = vmatprep.subr.mxu0 0.0
    %318 = vmatpush2.msra.mxu0 0.0
    %319 = vmatprep.subr.mxu0 0.0
    %320 = vmatpush2.msra.mxu0 0.0
    %321 = vmatprep.subr.mxu0 0.0
    %322 = vmatpush2.msra.mxu0 0.0
    %323 = vmatprep.subr.mxu0 0.0
    %324 = vmatpush2.msra.mxu0 0.0
    %325 = vmatprep.mubr.f32.mxu0 0.0
    %v326 = vand.u32 %v228, 4294901760
    %v327 = vsub.f32 %v228, %v326
    %v328 = vand.u32 %v327, 4294901760
    %v329 = vsub.f32 %v327, %v328
    %v330 = vand.u32 %v329, 4294901760
    %331 = vmatmul.mubr.f32.gmra.mxu0 %v330
    %v332 = vpop.f32.mrf.mxu0
    %v333 = vadd.f32 0.0, %v332
    %v334 = vpop.f32.mrf.mxu0
    %v335 = vadd.f32 0.0, %v334
    %336 = vdwg.mxu0
    %v337 = vand.u32 %v120, 4294901760
    %v338 = vsub.f32 %v120, %v337
    %v339 = vand.u32 %v338, 4294901760
    %v340 = vsub.f32 %v338, %v339
    %v341 = vand.u32 %v340, 4294901760
    %342 = vmatprep.subr.mxu0 %v341
    %v343 = vand.u32 %v119, 4294901760
    %v344 = vsub.f32 %v119, %v343
    %v345 = vand.u32 %v344, 4294901760
    %v346 = vsub.f32 %v344, %v345
    %v347 = vand.u32 %v346, 4294901760
    %348 = vmatpush1.msra.mxu0 %v347
    %v349 = vand.u32 %v118, 4294901760
    %v350 = vsub.f32 %v118, %v349
    %v351 = vand.u32 %v350, 4294901760
    %v352 = vsub.f32 %v350, %v351
    %v353 = vand.u32 %v352, 4294901760
    %354 = vmatprep.subr.mxu0 %v353
    %v355 = vand.u32 %v117, 4294901760
    %v356 = vsub.f32 %v117, %v355
    %v357 = vand.u32 %v356, 4294901760
    %v358 = vsub.f32 %v356, %v357
    %v359 = vand.u32 %v358, 4294901760
    %360 = vmatpush1.msra.mxu0 %v359
    %v361 = vand.u32 %v116, 4294901760
    %v362 = vsub.f32 %v116, %v361
    %v363 = vand.u32 %v362, 4294901760
    %v364 = vsub.f32 %v362, %v363
    %v365 = vand.u32 %v364, 4294901760
    %366 = vmatprep.subr.mxu0 %v365
    %v367 = vand.u32 %v115, 4294901760
    %v368 = vsub.f32 %v115, %v367
    %v369 = vand.u32 %v368, 4294901760
    %v370 = vsub.f32 %v368, %v369
    %v371 = vand.u32 %v370, 4294901760
    %372 = vmatpush1.msra.mxu0 %v371
    %v373 = vand.u32 %v114, 4294901760
    %v374 = vsub.f32 %v114, %v373
    %v375 = vand.u32 %v374, 4294901760
    %v376 = vsub.f32 %v374, %v375
    %v377 = vand.u32 %v376, 4294901760
    %378 = vmatprep.subr.mxu0 %v377
    %v379 = vand.u32 %v113, 4294901760
    %v380 = vsub.f32 %v113, %v379
    %v381 = vand.u32 %v380, 4294901760
    %v382 = vsub.f32 %v380, %v381
    %v383 = vand.u32 %v382, 4294901760
    %384 = vmatpush1.msra.mxu0 %v383
    %v385 = vand.u32 %v112, 4294901760
    %v386 = vsub.f32 %v112, %v385
    %v387 = vand.u32 %v386, 4294901760
    %v388 = vsub.f32 %v386, %v387
    %v389 = vand.u32 %v388, 4294901760
    %390 = vmatprep.subr.mxu0 %v389
    %v391 = vand.u32 %v111, 4294901760
    %v392 = vsub.f32 %v111, %v391
    %v393 = vand.u32 %v392, 4294901760
    %v394 = vsub.f32 %v392, %v393
    %v395 = vand.u32 %v394, 4294901760
    %396 = vmatpush1.msra.mxu0 %v395
    %v397 = vand.u32 %v110, 4294901760
    %v398 = vsub.f32 %v110, %v397
    %v399 = vand.u32 %v398, 4294901760
    %v400 = vsub.f32 %v398, %v399
    %v401 = vand.u32 %v400, 4294901760
    %402 = vmatprep.subr.mxu0 %v401
    %v403 = vand.u32 %v109, 4294901760
    %v404 = vsub.f32 %v109, %v403
    %v405 = vand.u32 %v404, 4294901760
    %v406 = vsub.f32 %v404, %v405
    %v407 = vand.u32 %v406, 4294901760
    %408 = vmatpush1.msra.mxu0 %v407
    %v409 = vand.u32 %v108, 4294901760
    %v410 = vsub.f32 %v108, %v409
    %v411 = vand.u32 %v410, 4294901760
    %v412 = vsub.f32 %v410, %v411
    %v413 = vand.u32 %v412, 4294901760
    %414 = vmatprep.subr.mxu0 %v413
    %v415 = vand.u32 %v107, 4294901760
    %v416 = vsub.f32 %v107, %v415
    %v417 = vand.u32 %v416, 4294901760
    %v418 = vsub.f32 %v416, %v417
    %v419 = vand.u32 %v418, 4294901760
    %420 = vmatpush1.msra.mxu0 %v419
    %v421 = vand.u32 %v106, 4294901760
    %v422 = vsub.f32 %v106, %v421
    %v423 = vand.u32 %v422, 4294901760
    %v424 = vsub.f32 %v422, %v423
    %v425 = vand.u32 %v424, 4294901760
    %426 = vmatprep.subr.mxu0 %v425
    %v427 = vand.u32 %v105, 4294901760
    %v428 = vsub.f32 %v105, %v427
    %v429 = vand.u32 %v428, 4294901760
    %v430 = vsub.f32 %v428, %v429
    %v431 = vand.u32 %v430, 4294901760
    %432 = vmatpush1.msra.mxu0 %v431
    %v433 = vand.u32 %v104, 4294901760
    %v434 = vsub.f32 %v104, %v433
    %v435 = vand.u32 %v434, 4294901760
    %v436 = vsub.f32 %v434, %v435
    %v437 = vand.u32 %v436, 4294901760
    %438 = vmatprep.subr.mxu0 %v437
    %v439 = vand.u32 %v103, 4294901760
    %v440 = vsub.f32 %v103, %v439
    %v441 = vand.u32 %v440, 4294901760
    %v442 = vsub.f32 %v440, %v441
    %v443 = vand.u32 %v442, 4294901760
    %444 = vmatpush1.msra.mxu0 %v443
    %v445 = vand.u32 %v102, 4294901760
    %v446 = vsub.f32 %v102, %v445
    %v447 = vand.u32 %v446, 4294901760
    %v448 = vsub.f32 %v446, %v447
    %v449 = vand.u32 %v448, 4294901760
    %450 = vmatprep.subr.mxu0 %v449
    %v451 = vand.u32 %v101, 4294901760
    %v452 = vsub.f32 %v101, %v451
    %v453 = vand.u32 %v452, 4294901760
    %v454 = vsub.f32 %v452, %v453
    %v455 = vand.u32 %v454, 4294901760
    %456 = vmatpush1.msra.mxu0 %v455
    %v457 = vand.u32 %v100, 4294901760
    %v458 = vsub.f32 %v100, %v457
    %v459 = vand.u32 %v458, 4294901760
    %v460 = vsub.f32 %v458, %v459
    %v461 = vand.u32 %v460, 4294901760
    %462 = vmatprep.subr.mxu0 %v461
    %v463 = vand.u32 %v99, 4294901760
    %v464 = vsub.f32 %v99, %v463
    %v465 = vand.u32 %v464, 4294901760
    %v466 = vsub.f32 %v464, %v465
    %v467 = vand.u32 %v466, 4294901760
    %468 = vmatpush1.msra.mxu0 %v467
    %v469 = vand.u32 %v98, 4294901760
    %v470 = vsub.f32 %v98, %v469
    %v471 = vand.u32 %v470, 4294901760
    %v472 = vsub.f32 %v470, %v471
    %v473 = vand.u32 %v472, 4294901760
    %474 = vmatprep.subr.mxu0 %v473
    %v475 = vand.u32 %v97, 4294901760
    %v476 = vsub.f32 %v97, %v475
    %v477 = vand.u32 %v476, 4294901760
    %v478 = vsub.f32 %v476, %v477
    %v479 = vand.u32 %v478, 4294901760
    %480 = vmatpush1.msra.mxu0 %v479
    %v481 = vand.u32 %v96, 4294901760
    %v482 = vsub.f32 %v96, %v481
    %v483 = vand.u32 %v482, 4294901760
    %v484 = vsub.f32 %v482, %v483
    %v485 = vand.u32 %v484, 4294901760
    %486 = vmatprep.subr.mxu0 %v485
    %v487 = vand.u32 %v95, 4294901760
    %v488 = vsub.f32 %v95, %v487
    %v489 = vand.u32 %v488, 4294901760
    %v490 = vsub.f32 %v488, %v489
    %v491 = vand.u32 %v490, 4294901760
    %492 = vmatpush1.msra.mxu0 %v491
    %v493 = vand.u32 %v94, 4294901760
    %v494 = vsub.f32 %v94, %v493
    %v495 = vand.u32 %v494, 4294901760
    %v496 = vsub.f32 %v494, %v495
    %v497 = vand.u32 %v496, 4294901760
    %498 = vmatprep.subr.mxu0 %v497
    %v499 = vand.u32 %v93, 4294901760
    %v500 = vsub.f32 %v93, %v499
    %v501 = vand.u32 %v500, 4294901760
    %v502 = vsub.f32 %v500, %v501
    %v503 = vand.u32 %v502, 4294901760
    %504 = vmatpush1.msra.mxu0 %v503
    %v505 = vand.u32 %v92, 4294901760
    %v506 = vsub.f32 %v92, %v505
    %v507 = vand.u32 %v506, 4294901760
    %v508 = vsub.f32 %v506, %v507
    %v509 = vand.u32 %v508, 4294901760
    %510 = vmatprep.subr.mxu0 %v509
    %v511 = vand.u32 %v91, 4294901760
    %v512 = vsub.f32 %v91, %v511
    %v513 = vand.u32 %v512, 4294901760
    %v514 = vsub.f32 %v512, %v513
    %v515 = vand.u32 %v514, 4294901760
    %516 = vmatpush1.msra.mxu0 %v515
    %v517 = vand.u32 %v90, 4294901760
    %v518 = vsub.f32 %v90, %v517
    %v519 = vand.u32 %v518, 4294901760
    %v520 = vsub.f32 %v518, %v519
    %v521 = vand.u32 %v520, 4294901760
    %522 = vmatprep.subr.mxu0 %v521
    %v523 = vand.u32 %v89, 4294901760
    %v524 = vsub.f32 %v89, %v523
    %v525 = vand.u32 %v524, 4294901760
    %v526 = vsub.f32 %v524, %v525
    %v527 = vand.u32 %v526, 4294901760
    %528 = vmatpush1.msra.mxu0 %v527
    %529 = vmatprep.subr.mxu0 0.0
    %530 = vmatpush2.msra.mxu0 0.0
    %531 = vmatprep.subr.mxu0 0.0
    %532 = vmatpush2.msra.mxu0 0.0
    %533 = vmatprep.subr.mxu0 0.0
    %534 = vmatpush2.msra.mxu0 0.0
    %535 = vmatprep.subr.mxu0 0.0
    %536 = vmatpush2.msra.mxu0 0.0
    %537 = vmatprep.subr.mxu0 0.0
    %538 = vmatpush2.msra.mxu0 0.0
    %539 = vmatprep.subr.mxu0 0.0
    %540 = vmatpush2.msra.mxu0 0.0
    %541 = vmatprep.subr.mxu0 0.0
    %542 = vmatpush2.msra.mxu0 0.0
    %543 = vmatprep.subr.mxu0 0.0
    %544 = vmatpush2.msra.mxu0 0.0
    %545 = vmatprep.subr.mxu0 0.0
    %546 = vmatpush2.msra.mxu0 0.0
    %547 = vmatprep.subr.mxu0 0.0
    %548 = vmatpush2.msra.mxu0 0.0
    %549 = vmatprep.subr.mxu0 0.0
    %550 = vmatpush2.msra.mxu0 0.0
    %551 = vmatprep.subr.mxu0 0.0
    %552 = vmatpush2.msra.mxu0 0.0
    %553 = vmatprep.subr.mxu0 0.0
    %554 = vmatpush2.msra.mxu0 0.0
    %555 = vmatprep.subr.mxu0 0.0
    %556 = vmatpush2.msra.mxu0 0.0
    %557 = vmatprep.subr.mxu0 0.0
    %558 = vmatpush2.msra.mxu0 0.0
    %559 = vmatprep.subr.mxu0 0.0
    %560 = vmatpush2.msra.mxu0 0.0
    %561 = vmatprep.mubr.f32.mxu0 0.0
    %v562 = vand.u32 %v228, 4294901760
    %563 = vmatmul.mubr.f32.gmra.mxu0 %v562
    %v564 = vpop.f32.mrf.mxu0
    %v565 = vadd.f32 %v333, %v564
    %v566 = vpop.f32.mrf.mxu0
    %v567 = vadd.f32 %v335, %v566
    %568 = vdwg.mxu0
    %v569 = vand.u32 %v120, 4294901760
    %v570 = vsub.f32 %v120, %v569
    %571 = vmatprep.subr.mxu0 %v570
    %v572 = vand.u32 %v119, 4294901760
    %v573 = vsub.f32 %v119, %v572
    %574 = vmatpush1.msra.mxu0 %v573
    %v575 = vand.u32 %v118, 4294901760
    %v576 = vsub.f32 %v118, %v575
    %577 = vmatprep.subr.mxu0 %v576
    %v578 = vand.u32 %v117, 4294901760
    %v579 = vsub.f32 %v117, %v578
    %580 = vmatpush1.msra.mxu0 %v579
    %v581 = vand.u32 %v116, 4294901760
    %v582 = vsub.f32 %v116, %v581
    %583 = vmatprep.subr.mxu0 %v582
    %v584 = vand.u32 %v115, 4294901760
    %v585 = vsub.f32 %v115, %v584
    %586 = vmatpush1.msra.mxu0 %v585
    %v587 = vand.u32 %v114, 4294901760
    %v588 = vsub.f32 %v114, %v587
    %589 = vmatprep.subr.mxu0 %v588
    %v590 = vand.u32 %v113, 4294901760
    %v591 = vsub.f32 %v113, %v590
    %592 = vmatpush1.msra.mxu0 %v591
    %v593 = vand.u32 %v112, 4294901760
    %v594 = vsub.f32 %v112, %v593
    %595 = vmatprep.subr.mxu0 %v594
    %v596 = vand.u32 %v111, 4294901760
    %v597 = vsub.f32 %v111, %v596
    %598 = vmatpush1.msra.mxu0 %v597
    %v599 = vand.u32 %v110, 4294901760
    %v600 = vsub.f32 %v110, %v599
    %601 = vmatprep.subr.mxu0 %v600
    %v602 = vand.u32 %v109, 4294901760
    %v603 = vsub.f32 %v109, %v602
    %604 = vmatpush1.msra.mxu0 %v603
    %v605 = vand.u32 %v108, 4294901760
    %v606 = vsub.f32 %v108, %v605
    %607 = vmatprep.subr.mxu0 %v606
    %v608 = vand.u32 %v107, 4294901760
    %v609 = vsub.f32 %v107, %v608
    %610 = vmatpush1.msra.mxu0 %v609
    %v611 = vand.u32 %v106, 4294901760
    %v612 = vsub.f32 %v106, %v611
    %613 = vmatprep.subr.mxu0 %v612
    %v614 = vand.u32 %v105, 4294901760
    %v615 = vsub.f32 %v105, %v614
    %616 = vmatpush1.msra.mxu0 %v615
    %v617 = vand.u32 %v104, 4294901760
    %v618 = vsub.f32 %v104, %v617
    %619 = vmatprep.subr.mxu0 %v618
    %v620 = vand.u32 %v103, 4294901760
    %v621 = vsub.f32 %v103, %v620
    %622 = vmatpush1.msra.mxu0 %v621
    %v623 = vand.u32 %v102, 4294901760
    %v624 = vsub.f32 %v102, %v623
    %625 = vmatprep.subr.mxu0 %v624
    %v626 = vand.u32 %v101, 4294901760
    %v627 = vsub.f32 %v101, %v626
    %628 = vmatpush1.msra.mxu0 %v627
    %v629 = vand.u32 %v100, 4294901760
    %v630 = vsub.f32 %v100, %v629
    %631 = vmatprep.subr.mxu0 %v630
    %v632 = vand.u32 %v99, 4294901760
    %v633 = vsub.f32 %v99, %v632
    %634 = vmatpush1.msra.mxu0 %v633
    %v635 = vand.u32 %v98, 4294901760
    %v636 = vsub.f32 %v98, %v635
    %637 = vmatprep.subr.mxu0 %v636
    %v638 = vand.u32 %v97, 4294901760
    %v639 = vsub.f32 %v97, %v638
    %640 = vmatpush1.msra.mxu0 %v639
    %v641 = vand.u32 %v96, 4294901760
    %v642 = vsub.f32 %v96, %v641
    %643 = vmatprep.subr.mxu0 %v642
    %v644 = vand.u32 %v95, 4294901760
    %v645 = vsub.f32 %v95, %v644
    %646 = vmatpush1.msra.mxu0 %v645
    %v647 = vand.u32 %v94, 4294901760
    %v648 = vsub.f32 %v94, %v647
    %649 = vmatprep.subr.mxu0 %v648
    %v650 = vand.u32 %v93, 4294901760
    %v651 = vsub.f32 %v93, %v650
    %652 = vmatpush1.msra.mxu0 %v651
    %v653 = vand.u32 %v92, 4294901760
    %v654 = vsub.f32 %v92, %v653
    %655 = vmatprep.subr.mxu0 %v654
    %v656 = vand.u32 %v91, 4294901760
    %v657 = vsub.f32 %v91, %v656
    %658 = vmatpush1.msra.mxu0 %v657
    %v659 = vand.u32 %v90, 4294901760
    %v660 = vsub.f32 %v90, %v659
    %661 = vmatprep.subr.mxu0 %v660
    %v662 = vand.u32 %v89, 4294901760
    %v663 = vsub.f32 %v89, %v662
    %664 = vmatpush1.msra.mxu0 %v663
    %665 = vmatprep.subr.mxu0 0.0
    %666 = vmatpush2.msra.mxu0 0.0
    %667 = vmatprep.subr.mxu0 0.0
    %668 = vmatpush2.msra.mxu0 0.0
    %669 = vmatprep.subr.mxu0 0.0
    %670 = vmatpush2.msra.mxu0 0.0
    %671 = vmatprep.subr.mxu0 0.0
    %672 = vmatpush2.msra.mxu0 0.0
    %673 = vmatprep.subr.mxu0 0.0
    %674 = vmatpush2.msra.mxu0 0.0
    %675 = vmatprep.subr.mxu0 0.0
    %676 = vmatpush2.msra.mxu0 0.0
    %677 = vmatprep.subr.mxu0 0.0
    %678 = vmatpush2.msra.mxu0 0.0
    %679 = vmatprep.subr.mxu0 0.0
    %680 = vmatpush2.msra.mxu0 0.0
    %681 = vmatprep.subr.mxu0 0.0
    %682 = vmatpush2.msra.mxu0 0.0
    %683 = vmatprep.subr.mxu0 0.0
    %684 = vmatpush2.msra.mxu0 0.0
    %685 = vmatprep.subr.mxu0 0.0
    %686 = vmatpush2.msra.mxu0 0.0
    %687 = vmatprep.subr.mxu0 0.0
    %688 = vmatpush2.msra.mxu0 0.0
    %689 = vmatprep.subr.mxu0 0.0
    %690 = vmatpush2.msra.mxu0 0.0
    %691 = vmatprep.subr.mxu0 0.0
    %692 = vmatpush2.msra.mxu0 0.0
    %693 = vmatprep.subr.mxu0 0.0
    %694 = vmatpush2.msra.mxu0 0.0
    %695 = vmatprep.subr.mxu0 0.0
    %696 = vmatpush2.msra.mxu0 0.0
    %697 = vmatprep.mubr.f32.mxu0 0.0
    %v698 = vand.u32 %v228, 4294901760
    %v699 = vsub.f32 %v228, %v698
    %700 = vmatmul.mubr.f32.gmra.mxu0 %v699
    %v701 = vpop.f32.mrf.mxu0
    %v702 = vadd.f32 %v565, %v701
    %v703 = vpop.f32.mrf.mxu0
    %v704 = vadd.f32 %v567, %v703
    %705 = vdwg.mxu0
    %v706 = vand.u32 %v120, 4294901760
    %707 = vmatprep.subr.mxu0 %v706
    %v708 = vand.u32 %v119, 4294901760
    %709 = vmatpush1.msra.mxu0 %v708
    %v710 = vand.u32 %v118, 4294901760
    %711 = vmatprep.subr.mxu0 %v710
    %v712 = vand.u32 %v117, 4294901760
    %713 = vmatpush1.msra.mxu0 %v712
    %v714 = vand.u32 %v116, 4294901760
    %715 = vmatprep.subr.mxu0 %v714
    %v716 = vand.u32 %v115, 4294901760
    %717 = vmatpush1.msra.mxu0 %v716
    %v718 = vand.u32 %v114, 4294901760
    %719 = vmatprep.subr.mxu0 %v718
    %v720 = vand.u32 %v113, 4294901760
    %721 = vmatpush1.msra.mxu0 %v720
    %v722 = vand.u32 %v112, 4294901760
    %723 = vmatprep.subr.mxu0 %v722
    %v724 = vand.u32 %v111, 4294901760
    %725 = vmatpush1.msra.mxu0 %v724
    %v726 = vand.u32 %v110, 4294901760
    %727 = vmatprep.subr.mxu0 %v726
    %v728 = vand.u32 %v109, 4294901760
    %729 = vmatpush1.msra.mxu0 %v728
    %v730 = vand.u32 %v108, 4294901760
    %731 = vmatprep.subr.mxu0 %v730
    %v732 = vand.u32 %v107, 4294901760
    %733 = vmatpush1.msra.mxu0 %v732
    %v734 = vand.u32 %v106, 4294901760
    %735 = vmatprep.subr.mxu0 %v734
    %v736 = vand.u32 %v105, 4294901760
    %737 = vmatpush1.msra.mxu0 %v736
    %v738 = vand.u32 %v104, 4294901760
    %739 = vmatprep.subr.mxu0 %v738
    %v740 = vand.u32 %v103, 4294901760
    %741 = vmatpush1.msra.mxu0 %v740
    %v742 = vand.u32 %v102, 4294901760
    %743 = vmatprep.subr.mxu0 %v742
    %v744 = vand.u32 %v101, 4294901760
    %745 = vmatpush1.msra.mxu0 %v744
    %v746 = vand.u32 %v100, 4294901760
    %747 = vmatprep.subr.mxu0 %v746
    %v748 = vand.u32 %v99, 4294901760
    %749 = vmatpush1.msra.mxu0 %v748
    %v750 = vand.u32 %v98, 4294901760
    %751 = vmatprep.subr.mxu0 %v750
    %v752 = vand.u32 %v97, 4294901760
    %753 = vmatpush1.msra.mxu0 %v752
    %v754 = vand.u32 %v96, 4294901760
    %755 = vmatprep.subr.mxu0 %v754
    %v756 = vand.u32 %v95, 4294901760
    %757 = vmatpush1.msra.mxu0 %v756
    %v758 = vand.u32 %v94, 4294901760
    %759 = vmatprep.subr.mxu0 %v758
    %v760 = vand.u32 %v93, 4294901760
    %761 = vmatpush1.msra.mxu0 %v760
    %v762 = vand.u32 %v92, 4294901760
    %763 = vmatprep.subr.mxu0 %v762
    %v764 = vand.u32 %v91, 4294901760
    %765 = vmatpush1.msra.mxu0 %v764
    %v766 = vand.u32 %v90, 4294901760
    %767 = vmatprep.subr.mxu0 %v766
    %v768 = vand.u32 %v89, 4294901760
    %769 = vmatpush1.msra.mxu0 %v768
    %770 = vmatprep.subr.mxu0 0.0
    %771 = vmatpush2.msra.mxu0 0.0
    %772 = vmatprep.subr.mxu0 0.0
    %773 = vmatpush2.msra.mxu0 0.0
    %774 = vmatprep.subr.mxu0 0.0
    %775 = vmatpush2.msra.mxu0 0.0
    %776 = vmatprep.subr.mxu0 0.0
    %777 = vmatpush2.msra.mxu0 0.0
    %778 = vmatprep.subr.mxu0 0.0
    %779 = vmatpush2.msra.mxu0 0.0
    %780 = vmatprep.subr.mxu0 0.0
    %781 = vmatpush2.msra.mxu0 0.0
    %782 = vmatprep.subr.mxu0 0.0
    %783 = vmatpush2.msra.mxu0 0.0
    %784 = vmatprep.subr.mxu0 0.0
    %785 = vmatpush2.msra.mxu0 0.0
    %786 = vmatprep.subr.mxu0 0.0
    %787 = vmatpush2.msra.mxu0 0.0
    %788 = vmatprep.subr.mxu0 0.0
    %789 = vmatpush2.msra.mxu0 0.0
    %790 = vmatprep.subr.mxu0 0.0
    %791 = vmatpush2.msra.mxu0 0.0
    %792 = vmatprep.subr.mxu0 0.0
    %793 = vmatpush2.msra.mxu0 0.0
    %794 = vmatprep.subr.mxu0 0.0
    %795 = vmatpush2.msra.mxu0 0.0
    %796 = vmatprep.subr.mxu0 0.0
    %797 = vmatpush2.msra.mxu0 0.0
    %798 = vmatprep.subr.mxu0 0.0
    %799 = vmatpush2.msra.mxu0 0.0
    %800 = vmatprep.subr.mxu0 0.0
    %801 = vmatpush2.msra.mxu0 0.0
    %802 = vmatprep.mubr.f32.mxu0 0.0
    %v803 = vand.u32 %v228, 4294901760
    %v804 = vsub.f32 %v228, %v803
    %v805 = vand.u32 %v804, 4294901760
    %806 = vmatmul.mubr.f32.gmra.mxu0 %v805
    %v807 = vpop.f32.mrf.mxu0
    %v808 = vadd.f32 %v702, %v807
    %v809 = vpop.f32.mrf.mxu0
    %v810 = vadd.f32 %v704, %v809
    %811 = vdwg.mxu0
    %v812 = vand.u32 %v120, 4294901760
    %v813 = vsub.f32 %v120, %v812
    %v814 = vand.u32 %v813, 4294901760
    %815 = vmatprep.subr.mxu0 %v814
    %v816 = vand.u32 %v119, 4294901760
    %v817 = vsub.f32 %v119, %v816
    %v818 = vand.u32 %v817, 4294901760
    %819 = vmatpush1.msra.mxu0 %v818
    %v820 = vand.u32 %v118, 4294901760
    %v821 = vsub.f32 %v118, %v820
    %v822 = vand.u32 %v821, 4294901760
    %823 = vmatprep.subr.mxu0 %v822
    %v824 = vand.u32 %v117, 4294901760
    %v825 = vsub.f32 %v117, %v824
    %v826 = vand.u32 %v825, 4294901760
    %827 = vmatpush1.msra.mxu0 %v826
    %v828 = vand.u32 %v116, 4294901760
    %v829 = vsub.f32 %v116, %v828
    %v830 = vand.u32 %v829, 4294901760
    %831 = vmatprep.subr.mxu0 %v830
    %v832 = vand.u32 %v115, 4294901760
    %v833 = vsub.f32 %v115, %v832
    %v834 = vand.u32 %v833, 4294901760
    %835 = vmatpush1.msra.mxu0 %v834
    %v836 = vand.u32 %v114, 4294901760
    %v837 = vsub.f32 %v114, %v836
    %v838 = vand.u32 %v837, 4294901760
    %839 = vmatprep.subr.mxu0 %v838
    %v840 = vand.u32 %v113, 4294901760
    %v841 = vsub.f32 %v113, %v840
    %v842 = vand.u32 %v841, 4294901760
    %843 = vmatpush1.msra.mxu0 %v842
    %v844 = vand.u32 %v112, 4294901760
    %v845 = vsub.f32 %v112, %v844
    %v846 = vand.u32 %v845, 4294901760
    %847 = vmatprep.subr.mxu0 %v846
    %v848 = vand.u32 %v111, 4294901760
    %v849 = vsub.f32 %v111, %v848
    %v850 = vand.u32 %v849, 4294901760
    %851 = vmatpush1.msra.mxu0 %v850
    %v852 = vand.u32 %v110, 4294901760
    %v853 = vsub.f32 %v110, %v852
    %v854 = vand.u32 %v853, 4294901760
    %855 = vmatprep.subr.mxu0 %v854
    %v856 = vand.u32 %v109, 4294901760
    %v857 = vsub.f32 %v109, %v856
    %v858 = vand.u32 %v857, 4294901760
    %859 = vmatpush1.msra.mxu0 %v858
    %v860 = vand.u32 %v108, 4294901760
    %v861 = vsub.f32 %v108, %v860
    %v862 = vand.u32 %v861, 4294901760
    %863 = vmatprep.subr.mxu0 %v862
    %v864 = vand.u32 %v107, 4294901760
    %v865 = vsub.f32 %v107, %v864
    %v866 = vand.u32 %v865, 4294901760
    %867 = vmatpush1.msra.mxu0 %v866
    %v868 = vand.u32 %v106, 4294901760
    %v869 = vsub.f32 %v106, %v868
    %v870 = vand.u32 %v869, 4294901760
    %871 = vmatprep.subr.mxu0 %v870
    %v872 = vand.u32 %v105, 4294901760
    %v873 = vsub.f32 %v105, %v872
    %v874 = vand.u32 %v873, 4294901760
    %875 = vmatpush1.msra.mxu0 %v874
    %v876 = vand.u32 %v104, 4294901760
    %v877 = vsub.f32 %v104, %v876
    %v878 = vand.u32 %v877, 4294901760
    %879 = vmatprep.subr.mxu0 %v878
    %v880 = vand.u32 %v103, 4294901760
    %v881 = vsub.f32 %v103, %v880
    %v882 = vand.u32 %v881, 4294901760
    %883 = vmatpush1.msra.mxu0 %v882
    %v884 = vand.u32 %v102, 4294901760
    %v885 = vsub.f32 %v102, %v884
    %v886 = vand.u32 %v885, 4294901760
    %887 = vmatprep.subr.mxu0 %v886
    %v888 = vand.u32 %v101, 4294901760
    %v889 = vsub.f32 %v101, %v888
    %v890 = vand.u32 %v889, 4294901760
    %891 = vmatpush1.msra.mxu0 %v890
    %v892 = vand.u32 %v100, 4294901760
    %v893 = vsub.f32 %v100, %v892
    %v894 = vand.u32 %v893, 4294901760
    %895 = vmatprep.subr.mxu0 %v894
    %v896 = vand.u32 %v99, 4294901760
    %v897 = vsub.f32 %v99, %v896
    %v898 = vand.u32 %v897, 4294901760
    %899 = vmatpush1.msra.mxu0 %v898
    %v900 = vand.u32 %v98, 4294901760
    %v901 = vsub.f32 %v98, %v900
    %v902 = vand.u32 %v901, 4294901760
    %903 = vmatprep.subr.mxu0 %v902
    %v904 = vand.u32 %v97, 4294901760
    %v905 = vsub.f32 %v97, %v904
    %v906 = vand.u32 %v905, 4294901760
    %907 = vmatpush1.msra.mxu0 %v906
    %v908 = vand.u32 %v96, 4294901760
    %v909 = vsub.f32 %v96, %v908
    %v910 = vand.u32 %v909, 4294901760
    %911 = vmatprep.subr.mxu0 %v910
    %v912 = vand.u32 %v95, 4294901760
    %v913 = vsub.f32 %v95, %v912
    %v914 = vand.u32 %v913, 4294901760
    %915 = vmatpush1.msra.mxu0 %v914
    %v916 = vand.u32 %v94, 4294901760
    %v917 = vsub.f32 %v94, %v916
    %v918 = vand.u32 %v917, 4294901760
    %919 = vmatprep.subr.mxu0 %v918
    %v920 = vand.u32 %v93, 4294901760
    %v921 = vsub.f32 %v93, %v920
    %v922 = vand.u32 %v921, 4294901760
    %923 = vmatpush1.msra.mxu0 %v922
    %v924 = vand.u32 %v92, 4294901760
    %v925 = vsub.f32 %v92, %v924
    %v926 = vand.u32 %v925, 4294901760
    %927 = vmatprep.subr.mxu0 %v926
    %v928 = vand.u32 %v91, 4294901760
    %v929 = vsub.f32 %v91, %v928
    %v930 = vand.u32 %v929, 4294901760
    %931 = vmatpush1.msra.mxu0 %v930
    %v932 = vand.u32 %v90, 4294901760
    %v933 = vsub.f32 %v90, %v932
    %v934 = vand.u32 %v933, 4294901760
    %935 = vmatprep.subr.mxu0 %v934
    %v936 = vand.u32 %v89, 4294901760
    %v937 = vsub.f32 %v89, %v936
    %v938 = vand.u32 %v937, 4294901760
    %939 = vmatpush1.msra.mxu0 %v938
    %940 = vmatprep.subr.mxu0 0.0
    %941 = vmatpush2.msra.mxu0 0.0
    %942 = vmatprep.subr.mxu0 0.0
    %943 = vmatpush2.msra.mxu0 0.0
    %944 = vmatprep.subr.mxu0 0.0
    %945 = vmatpush2.msra.mxu0 0.0
    %946 = vmatprep.subr.mxu0 0.0
    %947 = vmatpush2.msra.mxu0 0.0
    %948 = vmatprep.subr.mxu0 0.0
    %949 = vmatpush2.msra.mxu0 0.0
    %950 = vmatprep.subr.mxu0 0.0
    %951 = vmatpush2.msra.mxu0 0.0
    %952 = vmatprep.subr.mxu0 0.0
    %953 = vmatpush2.msra.mxu0 0.0
    %954 = vmatprep.subr.mxu0 0.0
    %955 = vmatpush2.msra.mxu0 0.0
    %956 = vmatprep.subr.mxu0 0.0
    %957 = vmatpush2.msra.mxu0 0.0
    %958 = vmatprep.subr.mxu0 0.0
    %959 = vmatpush2.msra.mxu0 0.0
    %960 = vmatprep.subr.mxu0 0.0
    %961 = vmatpush2.msra.mxu0 0.0
    %962 = vmatprep.subr.mxu0 0.0
    %963 = vmatpush2.msra.mxu0 0.0
    %964 = vmatprep.subr.mxu0 0.0
    %965 = vmatpush2.msra.mxu0 0.0
    %966 = vmatprep.subr.mxu0 0.0
    %967 = vmatpush2.msra.mxu0 0.0
    %968 = vmatprep.subr.mxu0 0.0
    %969 = vmatpush2.msra.mxu0 0.0
    %970 = vmatprep.subr.mxu0 0.0
    %971 = vmatpush2.msra.mxu0 0.0
    %972 = vmatprep.mubr.f32.mxu0 0.0
    %v973 = vand.u32 %v228, 4294901760
    %974 = vmatmul.mubr.f32.gmra.mxu0 %v973
    %v975 = vpop.f32.mrf.mxu0
    %v976 = vadd.f32 %v808, %v975
    %v977 = vpop.f32.mrf.mxu0
    %v978 = vadd.f32 %v810, %v977
    %979 = vdwg.mxu0
    %v980 = vand.u32 %v120, 4294901760
    %981 = vmatprep.subr.mxu0 %v980
    %v982 = vand.u32 %v119, 4294901760
    %983 = vmatpush1.msra.mxu0 %v982
    %v984 = vand.u32 %v118, 4294901760
    %985 = vmatprep.subr.mxu0 %v984
    %v986 = vand.u32 %v117, 4294901760
    %987 = vmatpush1.msra.mxu0 %v986
    %v988 = vand.u32 %v116, 4294901760
    %989 = vmatprep.subr.mxu0 %v988
    %v990 = vand.u32 %v115, 4294901760
    %991 = vmatpush1.msra.mxu0 %v990
    %v992 = vand.u32 %v114, 4294901760
    %993 = vmatprep.subr.mxu0 %v992
    %v994 = vand.u32 %v113, 4294901760
    %995 = vmatpush1.msra.mxu0 %v994
    %v996 = vand.u32 %v112, 4294901760
    %997 = vmatprep.subr.mxu0 %v996
    %v998 = vand.u32 %v111, 4294901760
    %999 = vmatpush1.msra.mxu0 %v998
    %v1000 = vand.u32 %v110, 4294901760
    %1001 = vmatprep.subr.mxu0 %v1000
    %v1002 = vand.u32 %v109, 4294901760
    %1003 = vmatpush1.msra.mxu0 %v1002
    %v1004 = vand.u32 %v108, 4294901760
    %1005 = vmatprep.subr.mxu0 %v1004
    %v1006 = vand.u32 %v107, 4294901760
    %1007 = vmatpush1.msra.mxu0 %v1006
    %v1008 = vand.u32 %v106, 4294901760
    %1009 = vmatprep.subr.mxu0 %v1008
    %v1010 = vand.u32 %v105, 4294901760
    %1011 = vmatpush1.msra.mxu0 %v1010
    %v1012 = vand.u32 %v104, 4294901760
    %1013 = vmatprep.subr.mxu0 %v1012
    %v1014 = vand.u32 %v103, 4294901760
    %1015 = vmatpush1.msra.mxu0 %v1014
    %v1016 = vand.u32 %v102, 4294901760
    %1017 = vmatprep.subr.mxu0 %v1016
    %v1018 = vand.u32 %v101, 4294901760
    %1019 = vmatpush1.msra.mxu0 %v1018
    %v1020 = vand.u32 %v100, 4294901760
    %1021 = vmatprep.subr.mxu0 %v1020
    %v1022 = vand.u32 %v99, 4294901760
    %1023 = vmatpush1.msra.mxu0 %v1022
    %v1024 = vand.u32 %v98, 4294901760
    %1025 = vmatprep.subr.mxu0 %v1024
    %v1026 = vand.u32 %v97, 4294901760
    %1027 = vmatpush1.msra.mxu0 %v1026
    %v1028 = vand.u32 %v96, 4294901760
    %1029 = vmatprep.subr.mxu0 %v1028
    %v1030 = vand.u32 %v95, 4294901760
    %1031 = vmatpush1.msra.mxu0 %v1030
    %v1032 = vand.u32 %v94, 4294901760
    %1033 = vmatprep.subr.mxu0 %v1032
    %v1034 = vand.u32 %v93, 4294901760
    %1035 = vmatpush1.msra.mxu0 %v1034
    %v1036 = vand.u32 %v92, 4294901760
    %1037 = vmatprep.subr.mxu0 %v1036
    %v1038 = vand.u32 %v91, 4294901760
    %1039 = vmatpush1.msra.mxu0 %v1038
    %v1040 = vand.u32 %v90, 4294901760
    %1041 = vmatprep.subr.mxu0 %v1040
    %v1042 = vand.u32 %v89, 4294901760
    %1043 = vmatpush1.msra.mxu0 %v1042
    %1044 = vmatprep.subr.mxu0 0.0
    %1045 = vmatpush2.msra.mxu0 0.0
    %1046 = vmatprep.subr.mxu0 0.0
    %1047 = vmatpush2.msra.mxu0 0.0
    %1048 = vmatprep.subr.mxu0 0.0
    %1049 = vmatpush2.msra.mxu0 0.0
    %1050 = vmatprep.subr.mxu0 0.0
    %1051 = vmatpush2.msra.mxu0 0.0
    %1052 = vmatprep.subr.mxu0 0.0
    %1053 = vmatpush2.msra.mxu0 0.0
    %1054 = vmatprep.subr.mxu0 0.0
    %1055 = vmatpush2.msra.mxu0 0.0
    %1056 = vmatprep.subr.mxu0 0.0
    %1057 = vmatpush2.msra.mxu0 0.0
    %1058 = vmatprep.subr.mxu0 0.0
    %1059 = vmatpush2.msra.mxu0 0.0
    %1060 = vmatprep.subr.mxu0 0.0
    %1061 = vmatpush2.msra.mxu0 0.0
    %1062 = vmatprep.subr.mxu0 0.0
    %1063 = vmatpush2.msra.mxu0 0.0
    %1064 = vmatprep.subr.mxu0 0.0
    %1065 = vmatpush2.msra.mxu0 0.0
    %1066 = vmatprep.subr.mxu0 0.0
    %1067 = vmatpush2.msra.mxu0 0.0
    %1068 = vmatprep.subr.mxu0 0.0
    %1069 = vmatpush2.msra.mxu0 0.0
    %1070 = vmatprep.subr.mxu0 0.0
    %1071 = vmatpush2.msra.mxu0 0.0
    %1072 = vmatprep.subr.mxu0 0.0
    %1073 = vmatpush2.msra.mxu0 0.0
    %1074 = vmatprep.subr.mxu0 0.0
    %1075 = vmatpush2.msra.mxu0 0.0
    %1076 = vmatprep.mubr.f32.mxu0 0.0
    %v1077 = vand.u32 %v228, 4294901760
    %1078 = vmatmul.mubr.f32.gmra.mxu0 %v1077
    %v1079 = vpop.f32.mrf.mxu0
    %v1080 = vadd.f32 %v976, %v1079
    %v1081 = vpop.f32.mrf.mxu0
    %v1082 = vadd.f32 %v978, %v1081
    %1083 = vdwg.mxu0
    %v1084 = vand.u32 %v216, 4294901760
    %1085 = vmatprep.subr.mxu0 %v1084
    %v1086 = vand.u32 %v215, 4294901760
    %1087 = vmatpush1.msra.mxu0 %v1086
    %v1088 = vand.u32 %v214, 4294901760
    %1089 = vmatprep.subr.mxu0 %v1088
    %v1090 = vand.u32 %v213, 4294901760
    %1091 = vmatpush1.msra.mxu0 %v1090
    %v1092 = vand.u32 %v212, 4294901760
    %1093 = vmatprep.subr.mxu0 %v1092
    %v1094 = vand.u32 %v211, 4294901760
    %1095 = vmatpush1.msra.mxu0 %v1094
    %v1096 = vand.u32 %v210, 4294901760
    %1097 = vmatprep.subr.mxu0 %v1096
    %v1098 = vand.u32 %v209, 4294901760
    %1099 = vmatpush1.msra.mxu0 %v1098
    %v1100 = vand.u32 %v208, 4294901760
    %1101 = vmatprep.subr.mxu0 %v1100
    %v1102 = vand.u32 %v207, 4294901760
    %1103 = vmatpush1.msra.mxu0 %v1102
    %v1104 = vand.u32 %v206, 4294901760
    %1105 = vmatprep.subr.mxu0 %v1104
    %v1106 = vand.u32 %v205, 4294901760
    %1107 = vmatpush1.msra.mxu0 %v1106
    %v1108 = vand.u32 %v204, 4294901760
    %1109 = vmatprep.subr.mxu0 %v1108
    %v1110 = vand.u32 %v203, 4294901760
    %1111 = vmatpush1.msra.mxu0 %v1110
    %v1112 = vand.u32 %v202, 4294901760
    %1113 = vmatprep.subr.mxu0 %v1112
    %v1114 = vand.u32 %v201, 4294901760
    %1115 = vmatpush1.msra.mxu0 %v1114
    %v1116 = vand.u32 %v200, 4294901760
    %1117 = vmatprep.subr.mxu0 %v1116
    %v1118 = vand.u32 %v199, 4294901760
    %1119 = vmatpush1.msra.mxu0 %v1118
    %v1120 = vand.u32 %v198, 4294901760
    %1121 = vmatprep.subr.mxu0 %v1120
    %v1122 = vand.u32 %v197, 4294901760
    %1123 = vmatpush1.msra.mxu0 %v1122
    %v1124 = vand.u32 %v196, 4294901760
    %1125 = vmatprep.subr.mxu0 %v1124
    %v1126 = vand.u32 %v195, 4294901760
    %1127 = vmatpush1.msra.mxu0 %v1126
    %v1128 = vand.u32 %v194, 4294901760
    %1129 = vmatprep.subr.mxu0 %v1128
    %v1130 = vand.u32 %v193, 4294901760
    %1131 = vmatpush1.msra.mxu0 %v1130
    %v1132 = vand.u32 %v192, 4294901760
    %1133 = vmatprep.subr.mxu0 %v1132
    %v1134 = vand.u32 %v191, 4294901760
    %1135 = vmatpush1.msra.mxu0 %v1134
    %v1136 = vand.u32 %v190, 4294901760
    %1137 = vmatprep.subr.mxu0 %v1136
    %v1138 = vand.u32 %v189, 4294901760
    %1139 = vmatpush1.msra.mxu0 %v1138
    %v1140 = vand.u32 %v188, 4294901760
    %1141 = vmatprep.subr.mxu0 %v1140
    %v1142 = vand.u32 %v187, 4294901760
    %1143 = vmatpush1.msra.mxu0 %v1142
    %v1144 = vand.u32 %v186, 4294901760
    %1145 = vmatprep.subr.mxu0 %v1144
    %v1146 = vand.u32 %v185, 4294901760
    %1147 = vmatpush1.msra.mxu0 %v1146
    %1148 = vmatprep.subr.mxu0 0.0
    %1149 = vmatpush2.msra.mxu0 0.0
    %1150 = vmatprep.subr.mxu0 0.0
    %1151 = vmatpush2.msra.mxu0 0.0
    %1152 = vmatprep.subr.mxu0 0.0
    %1153 = vmatpush2.msra.mxu0 0.0
    %1154 = vmatprep.subr.mxu0 0.0
    %1155 = vmatpush2.msra.mxu0 0.0
    %1156 = vmatprep.subr.mxu0 0.0
    %1157 = vmatpush2.msra.mxu0 0.0
    %1158 = vmatprep.subr.mxu0 0.0
    %1159 = vmatpush2.msra.mxu0 0.0
    %1160 = vmatprep.subr.mxu0 0.0
    %1161 = vmatpush2.msra.mxu0 0.0
    %1162 = vmatprep.subr.mxu0 0.0
    %1163 = vmatpush2.msra.mxu0 0.0
    %1164 = vmatprep.subr.mxu0 0.0
    %1165 = vmatpush2.msra.mxu0 0.0
    %1166 = vmatprep.subr.mxu0 0.0
    %1167 = vmatpush2.msra.mxu0 0.0
    %1168 = vmatprep.subr.mxu0 0.0
    %1169 = vmatpush2.msra.mxu0 0.0
    %1170 = vmatprep.subr.mxu0 0.0
    %1171 = vmatpush2.msra.mxu0 0.0
    %1172 = vmatprep.subr.mxu0 0.0
    %1173 = vmatpush2.msra.mxu0 0.0
    %1174 = vmatprep.subr.mxu0 0.0
    %1175 = vmatpush2.msra.mxu0 0.0
    %1176 = vmatprep.subr.mxu0 0.0
    %1177 = vmatpush2.msra.mxu0 0.0
    %1178 = vmatprep.subr.mxu0 0.0
    %1179 = vmatpush2.msra.mxu0 0.0
    %1180 = vmatprep.mubr.f32.mxu0 0.0
    %v1181 = vand.u32 %v86, 4294901760
    %v1182 = vsub.f32 %v86, %v1181
    %v1183 = vand.u32 %v1182, 4294901760
    %v1184 = vsub.f32 %v1182, %v1183
    %v1185 = vand.u32 %v1184, 4294901760
    %1186 = vmatmul.mubr.f32.gmra.mxu0 %v1185
    %v1187 = vpop.f32.mrf.mxu0
    %v1188 = vadd.f32 %v1080, %v1187
    %v1189 = vpop.f32.mrf.mxu0
    %v1190 = vadd.f32 %v1082, %v1189
    %1191 = vdwg.mxu0
    %v1192 = vand.u32 %v216, 4294901760
    %v1193 = vsub.f32 %v216, %v1192
    %v1194 = vand.u32 %v1193, 4294901760
    %v1195 = vsub.f32 %v1193, %v1194
    %v1196 = vand.u32 %v1195, 4294901760
    %1197 = vmatprep.subr.mxu0 %v1196
    %v1198 = vand.u32 %v215, 4294901760
    %v1199 = vsub.f32 %v215, %v1198
    %v1200 = vand.u32 %v1199, 4294901760
    %v1201 = vsub.f32 %v1199, %v1200
    %v1202 = vand.u32 %v1201, 4294901760
    %1203 = vmatpush1.msra.mxu0 %v1202
    %v1204 = vand.u32 %v214, 4294901760
    %v1205 = vsub.f32 %v214, %v1204
    %v1206 = vand.u32 %v1205, 4294901760
    %v1207 = vsub.f32 %v1205, %v1206
    %v1208 = vand.u32 %v1207, 4294901760
    %1209 = vmatprep.subr.mxu0 %v1208
    %v1210 = vand.u32 %v213, 4294901760
    %v1211 = vsub.f32 %v213, %v1210
    %v1212 = vand.u32 %v1211, 4294901760
    %v1213 = vsub.f32 %v1211, %v1212
    %v1214 = vand.u32 %v1213, 4294901760
    %1215 = vmatpush1.msra.mxu0 %v1214
    %v1216 = vand.u32 %v212, 4294901760
    %v1217 = vsub.f32 %v212, %v1216
    %v1218 = vand.u32 %v1217, 4294901760
    %v1219 = vsub.f32 %v1217, %v1218
    %v1220 = vand.u32 %v1219, 4294901760
    %1221 = vmatprep.subr.mxu0 %v1220
    %v1222 = vand.u32 %v211, 4294901760
    %v1223 = vsub.f32 %v211, %v1222
    %v1224 = vand.u32 %v1223, 4294901760
    %v1225 = vsub.f32 %v1223, %v1224
    %v1226 = vand.u32 %v1225, 4294901760
    %1227 = vmatpush1.msra.mxu0 %v1226
    %v1228 = vand.u32 %v210, 4294901760
    %v1229 = vsub.f32 %v210, %v1228
    %v1230 = vand.u32 %v1229, 4294901760
    %v1231 = vsub.f32 %v1229, %v1230
    %v1232 = vand.u32 %v1231, 4294901760
    %1233 = vmatprep.subr.mxu0 %v1232
    %v1234 = vand.u32 %v209, 4294901760
    %v1235 = vsub.f32 %v209, %v1234
    %v1236 = vand.u32 %v1235, 4294901760
    %v1237 = vsub.f32 %v1235, %v1236
    %v1238 = vand.u32 %v1237, 4294901760
    %1239 = vmatpush1.msra.mxu0 %v1238
    %v1240 = vand.u32 %v208, 4294901760
    %v1241 = vsub.f32 %v208, %v1240
    %v1242 = vand.u32 %v1241, 4294901760
    %v1243 = vsub.f32 %v1241, %v1242
    %v1244 = vand.u32 %v1243, 4294901760
    %1245 = vmatprep.subr.mxu0 %v1244
    %v1246 = vand.u32 %v207, 4294901760
    %v1247 = vsub.f32 %v207, %v1246
    %v1248 = vand.u32 %v1247, 4294901760
    %v1249 = vsub.f32 %v1247, %v1248
    %v1250 = vand.u32 %v1249, 4294901760
    %1251 = vmatpush1.msra.mxu0 %v1250
    %v1252 = vand.u32 %v206, 4294901760
    %v1253 = vsub.f32 %v206, %v1252
    %v1254 = vand.u32 %v1253, 4294901760
    %v1255 = vsub.f32 %v1253, %v1254
    %v1256 = vand.u32 %v1255, 4294901760
    %1257 = vmatprep.subr.mxu0 %v1256
    %v1258 = vand.u32 %v205, 4294901760
    %v1259 = vsub.f32 %v205, %v1258
    %v1260 = vand.u32 %v1259, 4294901760
    %v1261 = vsub.f32 %v1259, %v1260
    %v1262 = vand.u32 %v1261, 4294901760
    %1263 = vmatpush1.msra.mxu0 %v1262
    %v1264 = vand.u32 %v204, 4294901760
    %v1265 = vsub.f32 %v204, %v1264
    %v1266 = vand.u32 %v1265, 4294901760
    %v1267 = vsub.f32 %v1265, %v1266
    %v1268 = vand.u32 %v1267, 4294901760
    %1269 = vmatprep.subr.mxu0 %v1268
    %v1270 = vand.u32 %v203, 4294901760
    %v1271 = vsub.f32 %v203, %v1270
    %v1272 = vand.u32 %v1271, 4294901760
    %v1273 = vsub.f32 %v1271, %v1272
    %v1274 = vand.u32 %v1273, 4294901760
    %1275 = vmatpush1.msra.mxu0 %v1274
    %v1276 = vand.u32 %v202, 4294901760
    %v1277 = vsub.f32 %v202, %v1276
    %v1278 = vand.u32 %v1277, 4294901760
    %v1279 = vsub.f32 %v1277, %v1278
    %v1280 = vand.u32 %v1279, 4294901760
    %1281 = vmatprep.subr.mxu0 %v1280
    %v1282 = vand.u32 %v201, 4294901760
    %v1283 = vsub.f32 %v201, %v1282
    %v1284 = vand.u32 %v1283, 4294901760
    %v1285 = vsub.f32 %v1283, %v1284
    %v1286 = vand.u32 %v1285, 4294901760
    %1287 = vmatpush1.msra.mxu0 %v1286
    %v1288 = vand.u32 %v200, 4294901760
    %v1289 = vsub.f32 %v200, %v1288
    %v1290 = vand.u32 %v1289, 4294901760
    %v1291 = vsub.f32 %v1289, %v1290
    %v1292 = vand.u32 %v1291, 4294901760
    %1293 = vmatprep.subr.mxu0 %v1292
    %v1294 = vand.u32 %v199, 4294901760
    %v1295 = vsub.f32 %v199, %v1294
    %v1296 = vand.u32 %v1295, 4294901760
    %v1297 = vsub.f32 %v1295, %v1296
    %v1298 = vand.u32 %v1297, 4294901760
    %1299 = vmatpush1.msra.mxu0 %v1298
    %v1300 = vand.u32 %v198, 4294901760
    %v1301 = vsub.f32 %v198, %v1300
    %v1302 = vand.u32 %v1301, 4294901760
    %v1303 = vsub.f32 %v1301, %v1302
    %v1304 = vand.u32 %v1303, 4294901760
    %1305 = vmatprep.subr.mxu0 %v1304
    %v1306 = vand.u32 %v197, 4294901760
    %v1307 = vsub.f32 %v197, %v1306
    %v1308 = vand.u32 %v1307, 4294901760
    %v1309 = vsub.f32 %v1307, %v1308
    %v1310 = vand.u32 %v1309, 4294901760
    %1311 = vmatpush1.msra.mxu0 %v1310
    %v1312 = vand.u32 %v196, 4294901760
    %v1313 = vsub.f32 %v196, %v1312
    %v1314 = vand.u32 %v1313, 4294901760
    %v1315 = vsub.f32 %v1313, %v1314
    %v1316 = vand.u32 %v1315, 4294901760
    %1317 = vmatprep.subr.mxu0 %v1316
    %v1318 = vand.u32 %v195, 4294901760
    %v1319 = vsub.f32 %v195, %v1318
    %v1320 = vand.u32 %v1319, 4294901760
    %v1321 = vsub.f32 %v1319, %v1320
    %v1322 = vand.u32 %v1321, 4294901760
    %1323 = vmatpush1.msra.mxu0 %v1322
    %v1324 = vand.u32 %v194, 4294901760
    %v1325 = vsub.f32 %v194, %v1324
    %v1326 = vand.u32 %v1325, 4294901760
    %v1327 = vsub.f32 %v1325, %v1326
    %v1328 = vand.u32 %v1327, 4294901760
    %1329 = vmatprep.subr.mxu0 %v1328
    %v1330 = vand.u32 %v193, 4294901760
    %v1331 = vsub.f32 %v193, %v1330
    %v1332 = vand.u32 %v1331, 4294901760
    %v1333 = vsub.f32 %v1331, %v1332
    %v1334 = vand.u32 %v1333, 4294901760
    %1335 = vmatpush1.msra.mxu0 %v1334
    %v1336 = vand.u32 %v192, 4294901760
    %v1337 = vsub.f32 %v192, %v1336
    %v1338 = vand.u32 %v1337, 4294901760
    %v1339 = vsub.f32 %v1337, %v1338
    %v1340 = vand.u32 %v1339, 4294901760
    %1341 = vmatprep.subr.mxu0 %v1340
    %v1342 = vand.u32 %v191, 4294901760
    %v1343 = vsub.f32 %v191, %v1342
    %v1344 = vand.u32 %v1343, 4294901760
    %v1345 = vsub.f32 %v1343, %v1344
    %v1346 = vand.u32 %v1345, 4294901760
    %1347 = vmatpush1.msra.mxu0 %v1346
    %v1348 = vand.u32 %v190, 4294901760
    %v1349 = vsub.f32 %v190, %v1348
    %v1350 = vand.u32 %v1349, 4294901760
    %v1351 = vsub.f32 %v1349, %v1350
    %v1352 = vand.u32 %v1351, 4294901760
    %1353 = vmatprep.subr.mxu0 %v1352
    %v1354 = vand.u32 %v189, 4294901760
    %v1355 = vsub.f32 %v189, %v1354
    %v1356 = vand.u32 %v1355, 4294901760
    %v1357 = vsub.f32 %v1355, %v1356
    %v1358 = vand.u32 %v1357, 4294901760
    %1359 = vmatpush1.msra.mxu0 %v1358
    %v1360 = vand.u32 %v188, 4294901760
    %v1361 = vsub.f32 %v188, %v1360
    %v1362 = vand.u32 %v1361, 4294901760
    %v1363 = vsub.f32 %v1361, %v1362
    %v1364 = vand.u32 %v1363, 4294901760
    %1365 = vmatprep.subr.mxu0 %v1364
    %v1366 = vand.u32 %v187, 4294901760
    %v1367 = vsub.f32 %v187, %v1366
    %v1368 = vand.u32 %v1367, 4294901760
    %v1369 = vsub.f32 %v1367, %v1368
    %v1370 = vand.u32 %v1369, 4294901760
    %1371 = vmatpush1.msra.mxu0 %v1370
    %v1372 = vand.u32 %v186, 4294901760
    %v1373 = vsub.f32 %v186, %v1372
    %v1374 = vand.u32 %v1373, 4294901760
    %v1375 = vsub.f32 %v1373, %v1374
    %v1376 = vand.u32 %v1375, 4294901760
    %1377 = vmatprep.subr.mxu0 %v1376
    %v1378 = vand.u32 %v185, 4294901760
    %v1379 = vsub.f32 %v185, %v1378
    %v1380 = vand.u32 %v1379, 4294901760
    %v1381 = vsub.f32 %v1379, %v1380
    %v1382 = vand.u32 %v1381, 4294901760
    %1383 = vmatpush1.msra.mxu0 %v1382
    %1384 = vmatprep.subr.mxu0 0.0
    %1385 = vmatpush2.msra.mxu0 0.0
    %1386 = vmatprep.subr.mxu0 0.0
    %1387 = vmatpush2.msra.mxu0 0.0
    %1388 = vmatprep.subr.mxu0 0.0
    %1389 = vmatpush2.msra.mxu0 0.0
    %1390 = vmatprep.subr.mxu0 0.0
    %1391 = vmatpush2.msra.mxu0 0.0
    %1392 = vmatprep.subr.mxu0 0.0
    %1393 = vmatpush2.msra.mxu0 0.0
    %1394 = vmatprep.subr.mxu0 0.0
    %1395 = vmatpush2.msra.mxu0 0.0
    %1396 = vmatprep.subr.mxu0 0.0
    %1397 = vmatpush2.msra.mxu0 0.0
    %1398 = vmatprep.subr.mxu0 0.0
    %1399 = vmatpush2.msra.mxu0 0.0
    %1400 = vmatprep.subr.mxu0 0.0
    %1401 = vmatpush2.msra.mxu0 0.0
    %1402 = vmatprep.subr.mxu0 0.0
    %1403 = vmatpush2.msra.mxu0 0.0
    %1404 = vmatprep.subr.mxu0 0.0
    %1405 = vmatpush2.msra.mxu0 0.0
    %1406 = vmatprep.subr.mxu0 0.0
    %1407 = vmatpush2.msra.mxu0 0.0
    %1408 = vmatprep.subr.mxu0 0.0
    %1409 = vmatpush2.msra.mxu0 0.0
    %1410 = vmatprep.subr.mxu0 0.0
    %1411 = vmatpush2.msra.mxu0 0.0
    %1412 = vmatprep.subr.mxu0 0.0
    %1413 = vmatpush2.msra.mxu0 0.0
    %1414 = vmatprep.subr.mxu0 0.0
    %1415 = vmatpush2.msra.mxu0 0.0
    %1416 = vmatprep.mubr.f32.mxu0 0.0
    %v1417 = vand.u32 %v86, 4294901760
    %1418 = vmatmul.mubr.f32.gmra.mxu0 %v1417
    %v1419 = vpop.f32.mrf.mxu0
    %v1420 = vadd.f32 %v1188, %v1419
    %v1421 = vpop.f32.mrf.mxu0
    %v1422 = vadd.f32 %v1190, %v1421
    %1423 = vdwg.mxu0
    %v1424 = vand.u32 %v216, 4294901760
    %v1425 = vsub.f32 %v216, %v1424
    %1426 = vmatprep.subr.mxu0 %v1425
    %v1427 = vand.u32 %v215, 4294901760
    %v1428 = vsub.f32 %v215, %v1427
    %1429 = vmatpush1.msra.mxu0 %v1428
    %v1430 = vand.u32 %v214, 4294901760
    %v1431 = vsub.f32 %v214, %v1430
    %1432 = vmatprep.subr.mxu0 %v1431
    %v1433 = vand.u32 %v213, 4294901760
    %v1434 = vsub.f32 %v213, %v1433
    %1435 = vmatpush1.msra.mxu0 %v1434
    %v1436 = vand.u32 %v212, 4294901760
    %v1437 = vsub.f32 %v212, %v1436
    %1438 = vmatprep.subr.mxu0 %v1437
    %v1439 = vand.u32 %v211, 4294901760
    %v1440 = vsub.f32 %v211, %v1439
    %1441 = vmatpush1.msra.mxu0 %v1440
    %v1442 = vand.u32 %v210, 4294901760
    %v1443 = vsub.f32 %v210, %v1442
    %1444 = vmatprep.subr.mxu0 %v1443
    %v1445 = vand.u32 %v209, 4294901760
    %v1446 = vsub.f32 %v209, %v1445
    %1447 = vmatpush1.msra.mxu0 %v1446
    %v1448 = vand.u32 %v208, 4294901760
    %v1449 = vsub.f32 %v208, %v1448
    %1450 = vmatprep.subr.mxu0 %v1449
    %v1451 = vand.u32 %v207, 4294901760
    %v1452 = vsub.f32 %v207, %v1451
    %1453 = vmatpush1.msra.mxu0 %v1452
    %v1454 = vand.u32 %v206, 4294901760
    %v1455 = vsub.f32 %v206, %v1454
    %1456 = vmatprep.subr.mxu0 %v1455
    %v1457 = vand.u32 %v205, 4294901760
    %v1458 = vsub.f32 %v205, %v1457
    %1459 = vmatpush1.msra.mxu0 %v1458
    %v1460 = vand.u32 %v204, 4294901760
    %v1461 = vsub.f32 %v204, %v1460
    %1462 = vmatprep.subr.mxu0 %v1461
    %v1463 = vand.u32 %v203, 4294901760
    %v1464 = vsub.f32 %v203, %v1463
    %1465 = vmatpush1.msra.mxu0 %v1464
    %v1466 = vand.u32 %v202, 4294901760
    %v1467 = vsub.f32 %v202, %v1466
    %1468 = vmatprep.subr.mxu0 %v1467
    %v1469 = vand.u32 %v201, 4294901760
    %v1470 = vsub.f32 %v201, %v1469
    %1471 = vmatpush1.msra.mxu0 %v1470
    %v1472 = vand.u32 %v200, 4294901760
    %v1473 = vsub.f32 %v200, %v1472
    %1474 = vmatprep.subr.mxu0 %v1473
    %v1475 = vand.u32 %v199, 4294901760
    %v1476 = vsub.f32 %v199, %v1475
    %1477 = vmatpush1.msra.mxu0 %v1476
    %v1478 = vand.u32 %v198, 4294901760
    %v1479 = vsub.f32 %v198, %v1478
    %1480 = vmatprep.subr.mxu0 %v1479
    %v1481 = vand.u32 %v197, 4294901760
    %v1482 = vsub.f32 %v197, %v1481
    %1483 = vmatpush1.msra.mxu0 %v1482
    %v1484 = vand.u32 %v196, 4294901760
    %v1485 = vsub.f32 %v196, %v1484
    %1486 = vmatprep.subr.mxu0 %v1485
    %v1487 = vand.u32 %v195, 4294901760
    %v1488 = vsub.f32 %v195, %v1487
    %1489 = vmatpush1.msra.mxu0 %v1488
    %v1490 = vand.u32 %v194, 4294901760
    %v1491 = vsub.f32 %v194, %v1490
    %1492 = vmatprep.subr.mxu0 %v1491
    %v1493 = vand.u32 %v193, 4294901760
    %v1494 = vsub.f32 %v193, %v1493
    %1495 = vmatpush1.msra.mxu0 %v1494
    %v1496 = vand.u32 %v192, 4294901760
    %v1497 = vsub.f32 %v192, %v1496
    %1498 = vmatprep.subr.mxu0 %v1497
    %v1499 = vand.u32 %v191, 4294901760
    %v1500 = vsub.f32 %v191, %v1499
    %1501 = vmatpush1.msra.mxu0 %v1500
    %v1502 = vand.u32 %v190, 4294901760
    %v1503 = vsub.f32 %v190, %v1502
    %1504 = vmatprep.subr.mxu0 %v1503
    %v1505 = vand.u32 %v189, 4294901760
    %v1506 = vsub.f32 %v189, %v1505
    %1507 = vmatpush1.msra.mxu0 %v1506
    %v1508 = vand.u32 %v188, 4294901760
    %v1509 = vsub.f32 %v188, %v1508
    %1510 = vmatprep.subr.mxu0 %v1509
    %v1511 = vand.u32 %v187, 4294901760
    %v1512 = vsub.f32 %v187, %v1511
    %1513 = vmatpush1.msra.mxu0 %v1512
    %v1514 = vand.u32 %v186, 4294901760
    %v1515 = vsub.f32 %v186, %v1514
    %1516 = vmatprep.subr.mxu0 %v1515
    %v1517 = vand.u32 %v185, 4294901760
    %v1518 = vsub.f32 %v185, %v1517
    %1519 = vmatpush1.msra.mxu0 %v1518
    %1520 = vmatprep.subr.mxu0 0.0
    %1521 = vmatpush2.msra.mxu0 0.0
    %1522 = vmatprep.subr.mxu0 0.0
    %1523 = vmatpush2.msra.mxu0 0.0
    %1524 = vmatprep.subr.mxu0 0.0
    %1525 = vmatpush2.msra.mxu0 0.0
    %1526 = vmatprep.subr.mxu0 0.0
    %1527 = vmatpush2.msra.mxu0 0.0
    %1528 = vmatprep.subr.mxu0 0.0
    %1529 = vmatpush2.msra.mxu0 0.0
    %1530 = vmatprep.subr.mxu0 0.0
    %1531 = vmatpush2.msra.mxu0 0.0
    %1532 = vmatprep.subr.mxu0 0.0
    %1533 = vmatpush2.msra.mxu0 0.0
    %1534 = vmatprep.subr.mxu0 0.0
    %1535 = vmatpush2.msra.mxu0 0.0
    %1536 = vmatprep.subr.mxu0 0.0
    %1537 = vmatpush2.msra.mxu0 0.0
    %1538 = vmatprep.subr.mxu0 0.0
    %1539 = vmatpush2.msra.mxu0 0.0
    %1540 = vmatprep.subr.mxu0 0.0
    %1541 = vmatpush2.msra.mxu0 0.0
    %1542 = vmatprep.subr.mxu0 0.0
    %1543 = vmatpush2.msra.mxu0 0.0
    %1544 = vmatprep.subr.mxu0 0.0
    %1545 = vmatpush2.msra.mxu0 0.0
    %1546 = vmatprep.subr.mxu0 0.0
    %1547 = vmatpush2.msra.mxu0 0.0
    %1548 = vmatprep.subr.mxu0 0.0
    %1549 = vmatpush2.msra.mxu0 0.0
    %1550 = vmatprep.subr.mxu0 0.0
    %1551 = vmatpush2.msra.mxu0 0.0
    %1552 = vmatprep.mubr.f32.mxu0 0.0
    %v1553 = vand.u32 %v86, 4294901760
    %v1554 = vsub.f32 %v86, %v1553
    %1555 = vmatmul.mubr.f32.gmra.mxu0 %v1554
    %v1556 = vpop.f32.mrf.mxu0
    %v1557 = vadd.f32 %v1420, %v1556
    %v1558 = vpop.f32.mrf.mxu0
    %v1559 = vadd.f32 %v1422, %v1558
    %1560 = vdwg.mxu0
    %v1561 = vand.u32 %v216, 4294901760
    %1562 = vmatprep.subr.mxu0 %v1561
    %v1563 = vand.u32 %v215, 4294901760
    %1564 = vmatpush1.msra.mxu0 %v1563
    %v1565 = vand.u32 %v214, 4294901760
    %1566 = vmatprep.subr.mxu0 %v1565
    %v1567 = vand.u32 %v213, 4294901760
    %1568 = vmatpush1.msra.mxu0 %v1567
    %v1569 = vand.u32 %v212, 4294901760
    %1570 = vmatprep.subr.mxu0 %v1569
    %v1571 = vand.u32 %v211, 4294901760
    %1572 = vmatpush1.msra.mxu0 %v1571
    %v1573 = vand.u32 %v210, 4294901760
    %1574 = vmatprep.subr.mxu0 %v1573
    %v1575 = vand.u32 %v209, 4294901760
    %1576 = vmatpush1.msra.mxu0 %v1575
    %v1577 = vand.u32 %v208, 4294901760
    %1578 = vmatprep.subr.mxu0 %v1577
    %v1579 = vand.u32 %v207, 4294901760
    %1580 = vmatpush1.msra.mxu0 %v1579
    %v1581 = vand.u32 %v206, 4294901760
    %1582 = vmatprep.subr.mxu0 %v1581
    %v1583 = vand.u32 %v205, 4294901760
    %1584 = vmatpush1.msra.mxu0 %v1583
    %v1585 = vand.u32 %v204, 4294901760
    %1586 = vmatprep.subr.mxu0 %v1585
    %v1587 = vand.u32 %v203, 4294901760
    %1588 = vmatpush1.msra.mxu0 %v1587
    %v1589 = vand.u32 %v202, 4294901760
    %1590 = vmatprep.subr.mxu0 %v1589
    %v1591 = vand.u32 %v201, 4294901760
    %1592 = vmatpush1.msra.mxu0 %v1591
    %v1593 = vand.u32 %v200, 4294901760
    %1594 = vmatprep.subr.mxu0 %v1593
    %v1595 = vand.u32 %v199, 4294901760
    %1596 = vmatpush1.msra.mxu0 %v1595
    %v1597 = vand.u32 %v198, 4294901760
    %1598 = vmatprep.subr.mxu0 %v1597
    %v1599 = vand.u32 %v197, 4294901760
    %1600 = vmatpush1.msra.mxu0 %v1599
    %v1601 = vand.u32 %v196, 4294901760
    %1602 = vmatprep.subr.mxu0 %v1601
    %v1603 = vand.u32 %v195, 4294901760
    %1604 = vmatpush1.msra.mxu0 %v1603
    %v1605 = vand.u32 %v194, 4294901760
    %1606 = vmatprep.subr.mxu0 %v1605
    %v1607 = vand.u32 %v193, 4294901760
    %1608 = vmatpush1.msra.mxu0 %v1607
    %v1609 = vand.u32 %v192, 4294901760
    %1610 = vmatprep.subr.mxu0 %v1609
    %v1611 = vand.u32 %v191, 4294901760
    %1612 = vmatpush1.msra.mxu0 %v1611
    %v1613 = vand.u32 %v190, 4294901760
    %1614 = vmatprep.subr.mxu0 %v1613
    %v1615 = vand.u32 %v189, 4294901760
    %1616 = vmatpush1.msra.mxu0 %v1615
    %v1617 = vand.u32 %v188, 4294901760
    %1618 = vmatprep.subr.mxu0 %v1617
    %v1619 = vand.u32 %v187, 4294901760
    %1620 = vmatpush1.msra.mxu0 %v1619
    %v1621 = vand.u32 %v186, 4294901760
    %1622 = vmatprep.subr.mxu0 %v1621
    %v1623 = vand.u32 %v185, 4294901760
    %1624 = vmatpush1.msra.mxu0 %v1623
    %1625 = vmatprep.subr.mxu0 0.0
    %1626 = vmatpush2.msra.mxu0 0.0
    %1627 = vmatprep.subr.mxu0 0.0
    %1628 = vmatpush2.msra.mxu0 0.0
    %1629 = vmatprep.subr.mxu0 0.0
    %1630 = vmatpush2.msra.mxu0 0.0
    %1631 = vmatprep.subr.mxu0 0.0
    %1632 = vmatpush2.msra.mxu0 0.0
    %1633 = vmatprep.subr.mxu0 0.0
    %1634 = vmatpush2.msra.mxu0 0.0
    %1635 = vmatprep.subr.mxu0 0.0
    %1636 = vmatpush2.msra.mxu0 0.0
    %1637 = vmatprep.subr.mxu0 0.0
    %1638 = vmatpush2.msra.mxu0 0.0
    %1639 = vmatprep.subr.mxu0 0.0
    %1640 = vmatpush2.msra.mxu0 0.0
    %1641 = vmatprep.subr.mxu0 0.0
    %1642 = vmatpush2.msra.mxu0 0.0
    %1643 = vmatprep.subr.mxu0 0.0
    %1644 = vmatpush2.msra.mxu0 0.0
    %1645 = vmatprep.subr.mxu0 0.0
    %1646 = vmatpush2.msra.mxu0 0.0
    %1647 = vmatprep.subr.mxu0 0.0
    %1648 = vmatpush2.msra.mxu0 0.0
    %1649 = vmatprep.subr.mxu0 0.0
    %1650 = vmatpush2.msra.mxu0 0.0
    %1651 = vmatprep.subr.mxu0 0.0
    %1652 = vmatpush2.msra.mxu0 0.0
    %1653 = vmatprep.subr.mxu0 0.0
    %1654 = vmatpush2.msra.mxu0 0.0
    %1655 = vmatprep.subr.mxu0 0.0
    %1656 = vmatpush2.msra.mxu0 0.0
    %1657 = vmatprep.mubr.f32.mxu0 0.0
    %v1658 = vand.u32 %v86, 4294901760
    %v1659 = vsub.f32 %v86, %v1658
    %v1660 = vand.u32 %v1659, 4294901760
    %1661 = vmatmul.mubr.f32.gmra.mxu0 %v1660
    %v1662 = vpop.f32.mrf.mxu0
    %v1663 = vadd.f32 %v1557, %v1662
    %v1664 = vpop.f32.mrf.mxu0
    %v1665 = vadd.f32 %v1559, %v1664
    %1666 = vdwg.mxu0
    %v1667 = vand.u32 %v216, 4294901760
    %v1668 = vsub.f32 %v216, %v1667
    %v1669 = vand.u32 %v1668, 4294901760
    %1670 = vmatprep.subr.mxu0 %v1669
    %v1671 = vand.u32 %v215, 4294901760
    %v1672 = vsub.f32 %v215, %v1671
    %v1673 = vand.u32 %v1672, 4294901760
    %1674 = vmatpush1.msra.mxu0 %v1673
    %v1675 = vand.u32 %v214, 4294901760
    %v1676 = vsub.f32 %v214, %v1675
    %v1677 = vand.u32 %v1676, 4294901760
    %1678 = vmatprep.subr.mxu0 %v1677
    %v1679 = vand.u32 %v213, 4294901760
    %v1680 = vsub.f32 %v213, %v1679
    %v1681 = vand.u32 %v1680, 4294901760
    %1682 = vmatpush1.msra.mxu0 %v1681
    %v1683 = vand.u32 %v212, 4294901760
    %v1684 = vsub.f32 %v212, %v1683
    %v1685 = vand.u32 %v1684, 4294901760
    %1686 = vmatprep.subr.mxu0 %v1685
    %v1687 = vand.u32 %v211, 4294901760
    %v1688 = vsub.f32 %v211, %v1687
    %v1689 = vand.u32 %v1688, 4294901760
    %1690 = vmatpush1.msra.mxu0 %v1689
    %v1691 = vand.u32 %v210, 4294901760
    %v1692 = vsub.f32 %v210, %v1691
    %v1693 = vand.u32 %v1692, 4294901760
    %1694 = vmatprep.subr.mxu0 %v1693
    %v1695 = vand.u32 %v209, 4294901760
    %v1696 = vsub.f32 %v209, %v1695
    %v1697 = vand.u32 %v1696, 4294901760
    %1698 = vmatpush1.msra.mxu0 %v1697
    %v1699 = vand.u32 %v208, 4294901760
    %v1700 = vsub.f32 %v208, %v1699
    %v1701 = vand.u32 %v1700, 4294901760
    %1702 = vmatprep.subr.mxu0 %v1701
    %v1703 = vand.u32 %v207, 4294901760
    %v1704 = vsub.f32 %v207, %v1703
    %v1705 = vand.u32 %v1704, 4294901760
    %1706 = vmatpush1.msra.mxu0 %v1705
    %v1707 = vand.u32 %v206, 4294901760
    %v1708 = vsub.f32 %v206, %v1707
    %v1709 = vand.u32 %v1708, 4294901760
    %1710 = vmatprep.subr.mxu0 %v1709
    %v1711 = vand.u32 %v205, 4294901760
    %v1712 = vsub.f32 %v205, %v1711
    %v1713 = vand.u32 %v1712, 4294901760
    %1714 = vmatpush1.msra.mxu0 %v1713
    %v1715 = vand.u32 %v204, 4294901760
    %v1716 = vsub.f32 %v204, %v1715
    %v1717 = vand.u32 %v1716, 4294901760
    %1718 = vmatprep.subr.mxu0 %v1717
    %v1719 = vand.u32 %v203, 4294901760
    %v1720 = vsub.f32 %v203, %v1719
    %v1721 = vand.u32 %v1720, 4294901760
    %1722 = vmatpush1.msra.mxu0 %v1721
    %v1723 = vand.u32 %v202, 4294901760
    %v1724 = vsub.f32 %v202, %v1723
    %v1725 = vand.u32 %v1724, 4294901760
    %1726 = vmatprep.subr.mxu0 %v1725
    %v1727 = vand.u32 %v201, 4294901760
    %v1728 = vsub.f32 %v201, %v1727
    %v1729 = vand.u32 %v1728, 4294901760
    %1730 = vmatpush1.msra.mxu0 %v1729
    %v1731 = vand.u32 %v200, 4294901760
    %v1732 = vsub.f32 %v200, %v1731
    %v1733 = vand.u32 %v1732, 4294901760
    %1734 = vmatprep.subr.mxu0 %v1733
    %v1735 = vand.u32 %v199, 4294901760
    %v1736 = vsub.f32 %v199, %v1735
    %v1737 = vand.u32 %v1736, 4294901760
    %1738 = vmatpush1.msra.mxu0 %v1737
    %v1739 = vand.u32 %v198, 4294901760
    %v1740 = vsub.f32 %v198, %v1739
    %v1741 = vand.u32 %v1740, 4294901760
    %1742 = vmatprep.subr.mxu0 %v1741
    %v1743 = vand.u32 %v197, 4294901760
    %v1744 = vsub.f32 %v197, %v1743
    %v1745 = vand.u32 %v1744, 4294901760
    %1746 = vmatpush1.msra.mxu0 %v1745
    %v1747 = vand.u32 %v196, 4294901760
    %v1748 = vsub.f32 %v196, %v1747
    %v1749 = vand.u32 %v1748, 4294901760
    %1750 = vmatprep.subr.mxu0 %v1749
    %v1751 = vand.u32 %v195, 4294901760
    %v1752 = vsub.f32 %v195, %v1751
    %v1753 = vand.u32 %v1752, 4294901760
    %1754 = vmatpush1.msra.mxu0 %v1753
    %v1755 = vand.u32 %v194, 4294901760
    %v1756 = vsub.f32 %v194, %v1755
    %v1757 = vand.u32 %v1756, 4294901760
    %1758 = vmatprep.subr.mxu0 %v1757
    %v1759 = vand.u32 %v193, 4294901760
    %v1760 = vsub.f32 %v193, %v1759
    %v1761 = vand.u32 %v1760, 4294901760
    %1762 = vmatpush1.msra.mxu0 %v1761
    %v1763 = vand.u32 %v192, 4294901760
    %v1764 = vsub.f32 %v192, %v1763
    %v1765 = vand.u32 %v1764, 4294901760
    %1766 = vmatprep.subr.mxu0 %v1765
    %v1767 = vand.u32 %v191, 4294901760
    %v1768 = vsub.f32 %v191, %v1767
    %v1769 = vand.u32 %v1768, 4294901760
    %1770 = vmatpush1.msra.mxu0 %v1769
    %v1771 = vand.u32 %v190, 4294901760
    %v1772 = vsub.f32 %v190, %v1771
    %v1773 = vand.u32 %v1772, 4294901760
    %1774 = vmatprep.subr.mxu0 %v1773
    %v1775 = vand.u32 %v189, 4294901760
    %v1776 = vsub.f32 %v189, %v1775
    %v1777 = vand.u32 %v1776, 4294901760
    %1778 = vmatpush1.msra.mxu0 %v1777
    %v1779 = vand.u32 %v188, 4294901760
    %v1780 = vsub.f32 %v188, %v1779
    %v1781 = vand.u32 %v1780, 4294901760
    %1782 = vmatprep.subr.mxu0 %v1781
    %v1783 = vand.u32 %v187, 4294901760
    %v1784 = vsub.f32 %v187, %v1783
    %v1785 = vand.u32 %v1784, 4294901760
    %1786 = vmatpush1.msra.mxu0 %v1785
    %v1787 = vand.u32 %v186, 4294901760
    %v1788 = vsub.f32 %v186, %v1787
    %v1789 = vand.u32 %v1788, 4294901760
    %1790 = vmatprep.subr.mxu0 %v1789
    %v1791 = vand.u32 %v185, 4294901760
    %v1792 = vsub.f32 %v185, %v1791
    %v1793 = vand.u32 %v1792, 4294901760
    %1794 = vmatpush1.msra.mxu0 %v1793
    %1795 = vmatprep.subr.mxu0 0.0
    %1796 = vmatpush2.msra.mxu0 0.0
    %1797 = vmatprep.subr.mxu0 0.0
    %1798 = vmatpush2.msra.mxu0 0.0
    %1799 = vmatprep.subr.mxu0 0.0
    %1800 = vmatpush2.msra.mxu0 0.0
    %1801 = vmatprep.subr.mxu0 0.0
    %1802 = vmatpush2.msra.mxu0 0.0
    %1803 = vmatprep.subr.mxu0 0.0
    %1804 = vmatpush2.msra.mxu0 0.0
    %1805 = vmatprep.subr.mxu0 0.0
    %1806 = vmatpush2.msra.mxu0 0.0
    %1807 = vmatprep.subr.mxu0 0.0
    %1808 = vmatpush2.msra.mxu0 0.0
    %1809 = vmatprep.subr.mxu0 0.0
    %1810 = vmatpush2.msra.mxu0 0.0
    %1811 = vmatprep.subr.mxu0 0.0
    %1812 = vmatpush2.msra.mxu0 0.0
    %1813 = vmatprep.subr.mxu0 0.0
    %1814 = vmatpush2.msra.mxu0 0.0
    %1815 = vmatprep.subr.mxu0 0.0
    %1816 = vmatpush2.msra.mxu0 0.0
    %1817 = vmatprep.subr.mxu0 0.0
    %1818 = vmatpush2.msra.mxu0 0.0
    %1819 = vmatprep.subr.mxu0 0.0
    %1820 = vmatpush2.msra.mxu0 0.0
    %1821 = vmatprep.subr.mxu0 0.0
    %1822 = vmatpush2.msra.mxu0 0.0
    %1823 = vmatprep.subr.mxu0 0.0
    %1824 = vmatpush2.msra.mxu0 0.0
    %1825 = vmatprep.subr.mxu0 0.0
    %1826 = vmatpush2.msra.mxu0 0.0
    %1827 = vmatprep.mubr.f32.mxu0 0.0
    %v1828 = vand.u32 %v86, 4294901760
    %1829 = vmatmul.mubr.f32.gmra.mxu0 %v1828
    %v1830 = vpop.f32.mrf.mxu0
    %v1831 = vadd.f32 %v1663, %v1830
    %v1832 = vpop.f32.mrf.mxu0
    %v1833 = vadd.f32 %v1665, %v1832
    %1834 = vdwg.mxu0
    %v1835 = vand.u32 %v216, 4294901760
    %1836 = vmatprep.subr.mxu0 %v1835
    %v1837 = vand.u32 %v215, 4294901760
    %1838 = vmatpush1.msra.mxu0 %v1837
    %v1839 = vand.u32 %v214, 4294901760
    %1840 = vmatprep.subr.mxu0 %v1839
    %v1841 = vand.u32 %v213, 4294901760
    %1842 = vmatpush1.msra.mxu0 %v1841
    %v1843 = vand.u32 %v212, 4294901760
    %1844 = vmatprep.subr.mxu0 %v1843
    %v1845 = vand.u32 %v211, 4294901760
    %1846 = vmatpush1.msra.mxu0 %v1845
    %v1847 = vand.u32 %v210, 4294901760
    %1848 = vmatprep.subr.mxu0 %v1847
    %v1849 = vand.u32 %v209, 4294901760
    %1850 = vmatpush1.msra.mxu0 %v1849
    %v1851 = vand.u32 %v208, 4294901760
    %1852 = vmatprep.subr.mxu0 %v1851
    %v1853 = vand.u32 %v207, 4294901760
    %1854 = vmatpush1.msra.mxu0 %v1853
    %v1855 = vand.u32 %v206, 4294901760
    %1856 = vmatprep.subr.mxu0 %v1855
    %v1857 = vand.u32 %v205, 4294901760
    %1858 = vmatpush1.msra.mxu0 %v1857
    %v1859 = vand.u32 %v204, 4294901760
    %1860 = vmatprep.subr.mxu0 %v1859
    %v1861 = vand.u32 %v203, 4294901760
    %1862 = vmatpush1.msra.mxu0 %v1861
    %v1863 = vand.u32 %v202, 4294901760
    %1864 = vmatprep.subr.mxu0 %v1863
    %v1865 = vand.u32 %v201, 4294901760
    %1866 = vmatpush1.msra.mxu0 %v1865
    %v1867 = vand.u32 %v200, 4294901760
    %1868 = vmatprep.subr.mxu0 %v1867
    %v1869 = vand.u32 %v199, 4294901760
    %1870 = vmatpush1.msra.mxu0 %v1869
    %v1871 = vand.u32 %v198, 4294901760
    %1872 = vmatprep.subr.mxu0 %v1871
    %v1873 = vand.u32 %v197, 4294901760
    %1874 = vmatpush1.msra.mxu0 %v1873
    %v1875 = vand.u32 %v196, 4294901760
    %1876 = vmatprep.subr.mxu0 %v1875
    %v1877 = vand.u32 %v195, 4294901760
    %1878 = vmatpush1.msra.mxu0 %v1877
    %v1879 = vand.u32 %v194, 4294901760
    %1880 = vmatprep.subr.mxu0 %v1879
    %v1881 = vand.u32 %v193, 4294901760
    %1882 = vmatpush1.msra.mxu0 %v1881
    %v1883 = vand.u32 %v192, 4294901760
    %1884 = vmatprep.subr.mxu0 %v1883
    %v1885 = vand.u32 %v191, 4294901760
    %1886 = vmatpush1.msra.mxu0 %v1885
    %v1887 = vand.u32 %v190, 4294901760
    %1888 = vmatprep.subr.mxu0 %v1887
    %v1889 = vand.u32 %v189, 4294901760
    %1890 = vmatpush1.msra.mxu0 %v1889
    %v1891 = vand.u32 %v188, 4294901760
    %1892 = vmatprep.subr.mxu0 %v1891
    %v1893 = vand.u32 %v187, 4294901760
    %1894 = vmatpush1.msra.mxu0 %v1893
    %v1895 = vand.u32 %v186, 4294901760
    %1896 = vmatprep.subr.mxu0 %v1895
    %v1897 = vand.u32 %v185, 4294901760
    %1898 = vmatpush1.msra.mxu0 %v1897
    %1899 = vmatprep.subr.mxu0 0.0
    %1900 = vmatpush2.msra.mxu0 0.0
    %1901 = vmatprep.subr.mxu0 0.0
    %1902 = vmatpush2.msra.mxu0 0.0
    %1903 = vmatprep.subr.mxu0 0.0
    %1904 = vmatpush2.msra.mxu0 0.0
    %1905 = vmatprep.subr.mxu0 0.0
    %1906 = vmatpush2.msra.mxu0 0.0
    %1907 = vmatprep.subr.mxu0 0.0
    %1908 = vmatpush2.msra.mxu0 0.0
    %1909 = vmatprep.subr.mxu0 0.0
    %1910 = vmatpush2.msra.mxu0 0.0
    %1911 = vmatprep.subr.mxu0 0.0
    %1912 = vmatpush2.msra.mxu0 0.0
    %1913 = vmatprep.subr.mxu0 0.0
    %1914 = vmatpush2.msra.mxu0 0.0
    %1915 = vmatprep.subr.mxu0 0.0
    %1916 = vmatpush2.msra.mxu0 0.0
    %1917 = vmatprep.subr.mxu0 0.0
    %1918 = vmatpush2.msra.mxu0 0.0
    %1919 = vmatprep.subr.mxu0 0.0
    %1920 = vmatpush2.msra.mxu0 0.0
    %1921 = vmatprep.subr.mxu0 0.0
    %1922 = vmatpush2.msra.mxu0 0.0
    %1923 = vmatprep.subr.mxu0 0.0
    %1924 = vmatpush2.msra.mxu0 0.0
    %1925 = vmatprep.subr.mxu0 0.0
    %1926 = vmatpush2.msra.mxu0 0.0
    %1927 = vmatprep.subr.mxu0 0.0
    %1928 = vmatpush2.msra.mxu0 0.0
    %1929 = vmatprep.subr.mxu0 0.0
    %1930 = vmatpush2.msra.mxu0 0.0
    %1931 = vmatprep.mubr.f32.mxu0 0.0
    %v1932 = vand.u32 %v86, 4294901760
    %1933 = vmatmul.mubr.f32.gmra.mxu0 %v1932
    %v1934 = vpop.f32.mrf.mxu0
    %v1935 = vadd.f32 %v1831, %v1934
    %v1936 = vpop.f32.mrf.mxu0
    %v1937 = vadd.f32 %v1833, %v1936
    %1938 = vdwg.mxu0
    %v1939 = vlaneseq
    %v1940 = vshrl.u32 %v1939, 7
    %v1941 = vsub.s32 1, %v1940
    %v1942 = vrot.slane %v87, %v1941
    %v1943 = vmul.f32 %v1942, %v86
    %v1944 = vlaneseq
    %v1945 = vshrl.u32 %v1944, 7
    %v1946 = vsub.s32 1, %v1945
    %v1947 = vrot.slane %v88, %v1946
    %v1948 = vsub.f32 %v1943, %v1947
    %v1949 = vtanh.pop %v1948
    %v1950 = vmul.f32 %v1949, %v1949
    %v1951 = vand.u32 %v152, 4294901760
    %1952 = vmatprep.subr.mxu0 %v1951
    %v1953 = vand.u32 %v151, 4294901760
    %1954 = vmatpush1.msra.mxu0 %v1953
    %v1955 = vand.u32 %v150, 4294901760
    %1956 = vmatprep.subr.mxu0 %v1955
    %v1957 = vand.u32 %v149, 4294901760
    %1958 = vmatpush1.msra.mxu0 %v1957
    %v1959 = vand.u32 %v148, 4294901760
    %1960 = vmatprep.subr.mxu0 %v1959
    %v1961 = vand.u32 %v147, 4294901760
    %1962 = vmatpush1.msra.mxu0 %v1961
    %v1963 = vand.u32 %v146, 4294901760
    %1964 = vmatprep.subr.mxu0 %v1963
    %v1965 = vand.u32 %v145, 4294901760
    %1966 = vmatpush1.msra.mxu0 %v1965
    %v1967 = vand.u32 %v144, 4294901760
    %1968 = vmatprep.subr.mxu0 %v1967
    %v1969 = vand.u32 %v143, 4294901760
    %1970 = vmatpush1.msra.mxu0 %v1969
    %v1971 = vand.u32 %v142, 4294901760
    %1972 = vmatprep.subr.mxu0 %v1971
    %v1973 = vand.u32 %v141, 4294901760
    %1974 = vmatpush1.msra.mxu0 %v1973
    %v1975 = vand.u32 %v140, 4294901760
    %1976 = vmatprep.subr.mxu0 %v1975
    %v1977 = vand.u32 %v139, 4294901760
    %1978 = vmatpush1.msra.mxu0 %v1977
    %v1979 = vand.u32 %v138, 4294901760
    %1980 = vmatprep.subr.mxu0 %v1979
    %v1981 = vand.u32 %v137, 4294901760
    %1982 = vmatpush1.msra.mxu0 %v1981
    %v1983 = vand.u32 %v136, 4294901760
    %1984 = vmatprep.subr.mxu0 %v1983
    %v1985 = vand.u32 %v135, 4294901760
    %1986 = vmatpush1.msra.mxu0 %v1985
    %v1987 = vand.u32 %v134, 4294901760
    %1988 = vmatprep.subr.mxu0 %v1987
    %v1989 = vand.u32 %v133, 4294901760
    %1990 = vmatpush1.msra.mxu0 %v1989
    %v1991 = vand.u32 %v132, 4294901760
    %1992 = vmatprep.subr.mxu0 %v1991
    %v1993 = vand.u32 %v131, 4294901760
    %1994 = vmatpush1.msra.mxu0 %v1993
    %v1995 = vand.u32 %v130, 4294901760
    %1996 = vmatprep.subr.mxu0 %v1995
    %v1997 = vand.u32 %v129, 4294901760
    %1998 = vmatpush1.msra.mxu0 %v1997
    %v1999 = vand.u32 %v128, 4294901760
    %2000 = vmatprep.subr.mxu0 %v1999
    %v2001 = vand.u32 %v127, 4294901760
    %2002 = vmatpush1.msra.mxu0 %v2001
    %v2003 = vand.u32 %v126, 4294901760
    %2004 = vmatprep.subr.mxu0 %v2003
    %v2005 = vand.u32 %v125, 4294901760
    %2006 = vmatpush1.msra.mxu0 %v2005
    %v2007 = vand.u32 %v124, 4294901760
    %2008 = vmatprep.subr.mxu0 %v2007
    %v2009 = vand.u32 %v123, 4294901760
    %2010 = vmatpush1.msra.mxu0 %v2009
    %v2011 = vand.u32 %v122, 4294901760
    %2012 = vmatprep.subr.mxu0 %v2011
    %v2013 = vand.u32 %v121, 4294901760
    %2014 = vmatpush1.msra.mxu0 %v2013
    %2015 = vmatprep.subr.mxu0 0.0
    %2016 = vmatpush2.msra.mxu0 0.0
    %2017 = vmatprep.subr.mxu0 0.0
    %2018 = vmatpush2.msra.mxu0 0.0
    %2019 = vmatprep.subr.mxu0 0.0
    %2020 = vmatpush2.msra.mxu0 0.0
    %2021 = vmatprep.subr.mxu0 0.0
    %2022 = vmatpush2.msra.mxu0 0.0
    %2023 = vmatprep.subr.mxu0 0.0
    %2024 = vmatpush2.msra.mxu0 0.0
    %2025 = vmatprep.subr.mxu0 0.0
    %2026 = vmatpush2.msra.mxu0 0.0
    %2027 = vmatprep.subr.mxu0 0.0
    %2028 = vmatpush2.msra.mxu0 0.0
    %2029 = vmatprep.subr.mxu0 0.0
    %2030 = vmatpush2.msra.mxu0 0.0
    %2031 = vmatprep.subr.mxu0 0.0
    %2032 = vmatpush2.msra.mxu0 0.0
    %2033 = vmatprep.subr.mxu0 0.0
    %2034 = vmatpush2.msra.mxu0 0.0
    %2035 = vmatprep.subr.mxu0 0.0
    %2036 = vmatpush2.msra.mxu0 0.0
    %2037 = vmatprep.subr.mxu0 0.0
    %2038 = vmatpush2.msra.mxu0 0.0
    %2039 = vmatprep.subr.mxu0 0.0
    %2040 = vmatpush2.msra.mxu0 0.0
    %2041 = vmatprep.subr.mxu0 0.0
    %2042 = vmatpush2.msra.mxu0 0.0
    %2043 = vmatprep.subr.mxu0 0.0
    %2044 = vmatpush2.msra.mxu0 0.0
    %2045 = vmatprep.subr.mxu0 0.0
    %2046 = vmatpush2.msra.mxu0 0.0
    %2047 = vmatprep.mubr.f32.mxu0 0.0
    %v2048 = vand.u32 %v1950, 4294901760
    %v2049 = vsub.f32 %v1950, %v2048
    %v2050 = vand.u32 %v2049, 4294901760
    %v2051 = vsub.f32 %v2049, %v2050
    %v2052 = vand.u32 %v2051, 4294901760
    %2053 = vmatmul.mubr.f32.gmra.mxu0 %v2052
    %v2054 = vpop.f32.mrf.mxu0
    %v2055 = vadd.f32 0.0, %v2054
    %v2056 = vpop.f32.mrf.mxu0
    %v2057 = vadd.f32 0.0, %v2056
    %2058 = vdwg.mxu0
    %v2059 = vand.u32 %v152, 4294901760
    %v2060 = vsub.f32 %v152, %v2059
    %v2061 = vand.u32 %v2060, 4294901760
    %v2062 = vsub.f32 %v2060, %v2061
    %v2063 = vand.u32 %v2062, 4294901760
    %2064 = vmatprep.subr.mxu0 %v2063
    %v2065 = vand.u32 %v151, 4294901760
    %v2066 = vsub.f32 %v151, %v2065
    %v2067 = vand.u32 %v2066, 4294901760
    %v2068 = vsub.f32 %v2066, %v2067
    %v2069 = vand.u32 %v2068, 4294901760
    %2070 = vmatpush1.msra.mxu0 %v2069
    %v2071 = vand.u32 %v150, 4294901760
    %v2072 = vsub.f32 %v150, %v2071
    %v2073 = vand.u32 %v2072, 4294901760
    %v2074 = vsub.f32 %v2072, %v2073
    %v2075 = vand.u32 %v2074, 4294901760
    %2076 = vmatprep.subr.mxu0 %v2075
    %v2077 = vand.u32 %v149, 4294901760
    %v2078 = vsub.f32 %v149, %v2077
    %v2079 = vand.u32 %v2078, 4294901760
    %v2080 = vsub.f32 %v2078, %v2079
    %v2081 = vand.u32 %v2080, 4294901760
    %2082 = vmatpush1.msra.mxu0 %v2081
    %v2083 = vand.u32 %v148, 4294901760
    %v2084 = vsub.f32 %v148, %v2083
    %v2085 = vand.u32 %v2084, 4294901760
    %v2086 = vsub.f32 %v2084, %v2085
    %v2087 = vand.u32 %v2086, 4294901760
    %2088 = vmatprep.subr.mxu0 %v2087
    %v2089 = vand.u32 %v147, 4294901760
    %v2090 = vsub.f32 %v147, %v2089
    %v2091 = vand.u32 %v2090, 4294901760
    %v2092 = vsub.f32 %v2090, %v2091
    %v2093 = vand.u32 %v2092, 4294901760
    %2094 = vmatpush1.msra.mxu0 %v2093
    %v2095 = vand.u32 %v146, 4294901760
    %v2096 = vsub.f32 %v146, %v2095
    %v2097 = vand.u32 %v2096, 4294901760
    %v2098 = vsub.f32 %v2096, %v2097
    %v2099 = vand.u32 %v2098, 4294901760
    %2100 = vmatprep.subr.mxu0 %v2099
    %v2101 = vand.u32 %v145, 4294901760
    %v2102 = vsub.f32 %v145, %v2101
    %v2103 = vand.u32 %v2102, 4294901760
    %v2104 = vsub.f32 %v2102, %v2103
    %v2105 = vand.u32 %v2104, 4294901760
    %2106 = vmatpush1.msra.mxu0 %v2105
    %v2107 = vand.u32 %v144, 4294901760
    %v2108 = vsub.f32 %v144, %v2107
    %v2109 = vand.u32 %v2108, 4294901760
    %v2110 = vsub.f32 %v2108, %v2109
    %v2111 = vand.u32 %v2110, 4294901760
    %2112 = vmatprep.subr.mxu0 %v2111
    %v2113 = vand.u32 %v143, 4294901760
    %v2114 = vsub.f32 %v143, %v2113
    %v2115 = vand.u32 %v2114, 4294901760
    %v2116 = vsub.f32 %v2114, %v2115
    %v2117 = vand.u32 %v2116, 4294901760
    %2118 = vmatpush1.msra.mxu0 %v2117
    %v2119 = vand.u32 %v142, 4294901760
    %v2120 = vsub.f32 %v142, %v2119
    %v2121 = vand.u32 %v2120, 4294901760
    %v2122 = vsub.f32 %v2120, %v2121
    %v2123 = vand.u32 %v2122, 4294901760
    %2124 = vmatprep.subr.mxu0 %v2123
    %v2125 = vand.u32 %v141, 4294901760
    %v2126 = vsub.f32 %v141, %v2125
    %v2127 = vand.u32 %v2126, 4294901760
    %v2128 = vsub.f32 %v2126, %v2127
    %v2129 = vand.u32 %v2128, 4294901760
    %2130 = vmatpush1.msra.mxu0 %v2129
    %v2131 = vand.u32 %v140, 4294901760
    %v2132 = vsub.f32 %v140, %v2131
    %v2133 = vand.u32 %v2132, 4294901760
    %v2134 = vsub.f32 %v2132, %v2133
    %v2135 = vand.u32 %v2134, 4294901760
    %2136 = vmatprep.subr.mxu0 %v2135
    %v2137 = vand.u32 %v139, 4294901760
    %v2138 = vsub.f32 %v139, %v2137
    %v2139 = vand.u32 %v2138, 4294901760
    %v2140 = vsub.f32 %v2138, %v2139
    %v2141 = vand.u32 %v2140, 4294901760
    %2142 = vmatpush1.msra.mxu0 %v2141
    %v2143 = vand.u32 %v138, 4294901760
    %v2144 = vsub.f32 %v138, %v2143
    %v2145 = vand.u32 %v2144, 4294901760
    %v2146 = vsub.f32 %v2144, %v2145
    %v2147 = vand.u32 %v2146, 4294901760
    %2148 = vmatprep.subr.mxu0 %v2147
    %v2149 = vand.u32 %v137, 4294901760
    %v2150 = vsub.f32 %v137, %v2149
    %v2151 = vand.u32 %v2150, 4294901760
    %v2152 = vsub.f32 %v2150, %v2151
    %v2153 = vand.u32 %v2152, 4294901760
    %2154 = vmatpush1.msra.mxu0 %v2153
    %v2155 = vand.u32 %v136, 4294901760
    %v2156 = vsub.f32 %v136, %v2155
    %v2157 = vand.u32 %v2156, 4294901760
    %v2158 = vsub.f32 %v2156, %v2157
    %v2159 = vand.u32 %v2158, 4294901760
    %2160 = vmatprep.subr.mxu0 %v2159
    %v2161 = vand.u32 %v135, 4294901760
    %v2162 = vsub.f32 %v135, %v2161
    %v2163 = vand.u32 %v2162, 4294901760
    %v2164 = vsub.f32 %v2162, %v2163
    %v2165 = vand.u32 %v2164, 4294901760
    %2166 = vmatpush1.msra.mxu0 %v2165
    %v2167 = vand.u32 %v134, 4294901760
    %v2168 = vsub.f32 %v134, %v2167
    %v2169 = vand.u32 %v2168, 4294901760
    %v2170 = vsub.f32 %v2168, %v2169
    %v2171 = vand.u32 %v2170, 4294901760
    %2172 = vmatprep.subr.mxu0 %v2171
    %v2173 = vand.u32 %v133, 4294901760
    %v2174 = vsub.f32 %v133, %v2173
    %v2175 = vand.u32 %v2174, 4294901760
    %v2176 = vsub.f32 %v2174, %v2175
    %v2177 = vand.u32 %v2176, 4294901760
    %2178 = vmatpush1.msra.mxu0 %v2177
    %v2179 = vand.u32 %v132, 4294901760
    %v2180 = vsub.f32 %v132, %v2179
    %v2181 = vand.u32 %v2180, 4294901760
    %v2182 = vsub.f32 %v2180, %v2181
    %v2183 = vand.u32 %v2182, 4294901760
    %2184 = vmatprep.subr.mxu0 %v2183
    %v2185 = vand.u32 %v131, 4294901760
    %v2186 = vsub.f32 %v131, %v2185
    %v2187 = vand.u32 %v2186, 4294901760
    %v2188 = vsub.f32 %v2186, %v2187
    %v2189 = vand.u32 %v2188, 4294901760
    %2190 = vmatpush1.msra.mxu0 %v2189
    %v2191 = vand.u32 %v130, 4294901760
    %v2192 = vsub.f32 %v130, %v2191
    %v2193 = vand.u32 %v2192, 4294901760
    %v2194 = vsub.f32 %v2192, %v2193
    %v2195 = vand.u32 %v2194, 4294901760
    %2196 = vmatprep.subr.mxu0 %v2195
    %v2197 = vand.u32 %v129, 4294901760
    %v2198 = vsub.f32 %v129, %v2197
    %v2199 = vand.u32 %v2198, 4294901760
    %v2200 = vsub.f32 %v2198, %v2199
    %v2201 = vand.u32 %v2200, 4294901760
    %2202 = vmatpush1.msra.mxu0 %v2201
    %v2203 = vand.u32 %v128, 4294901760
    %v2204 = vsub.f32 %v128, %v2203
    %v2205 = vand.u32 %v2204, 4294901760
    %v2206 = vsub.f32 %v2204, %v2205
    %v2207 = vand.u32 %v2206, 4294901760
    %2208 = vmatprep.subr.mxu0 %v2207
    %v2209 = vand.u32 %v127, 4294901760
    %v2210 = vsub.f32 %v127, %v2209
    %v2211 = vand.u32 %v2210, 4294901760
    %v2212 = vsub.f32 %v2210, %v2211
    %v2213 = vand.u32 %v2212, 4294901760
    %2214 = vmatpush1.msra.mxu0 %v2213
    %v2215 = vand.u32 %v126, 4294901760
    %v2216 = vsub.f32 %v126, %v2215
    %v2217 = vand.u32 %v2216, 4294901760
    %v2218 = vsub.f32 %v2216, %v2217
    %v2219 = vand.u32 %v2218, 4294901760
    %2220 = vmatprep.subr.mxu0 %v2219
    %v2221 = vand.u32 %v125, 4294901760
    %v2222 = vsub.f32 %v125, %v2221
    %v2223 = vand.u32 %v2222, 4294901760
    %v2224 = vsub.f32 %v2222, %v2223
    %v2225 = vand.u32 %v2224, 4294901760
    %2226 = vmatpush1.msra.mxu0 %v2225
    %v2227 = vand.u32 %v124, 4294901760
    %v2228 = vsub.f32 %v124, %v2227
    %v2229 = vand.u32 %v2228, 4294901760
    %v2230 = vsub.f32 %v2228, %v2229
    %v2231 = vand.u32 %v2230, 4294901760
    %2232 = vmatprep.subr.mxu0 %v2231
    %v2233 = vand.u32 %v123, 4294901760
    %v2234 = vsub.f32 %v123, %v2233
    %v2235 = vand.u32 %v2234, 4294901760
    %v2236 = vsub.f32 %v2234, %v2235
    %v2237 = vand.u32 %v2236, 4294901760
    %2238 = vmatpush1.msra.mxu0 %v2237
    %v2239 = vand.u32 %v122, 4294901760
    %v2240 = vsub.f32 %v122, %v2239
    %v2241 = vand.u32 %v2240, 4294901760
    %v2242 = vsub.f32 %v2240, %v2241
    %v2243 = vand.u32 %v2242, 4294901760
    %2244 = vmatprep.subr.mxu0 %v2243
    %v2245 = vand.u32 %v121, 4294901760
    %v2246 = vsub.f32 %v121, %v2245
    %v2247 = vand.u32 %v2246, 4294901760
    %v2248 = vsub.f32 %v2246, %v2247
    %v2249 = vand.u32 %v2248, 4294901760
    %2250 = vmatpush1.msra.mxu0 %v2249
    %2251 = vmatprep.subr.mxu0 0.0
    %2252 = vmatpush2.msra.mxu0 0.0
    %2253 = vmatprep.subr.mxu0 0.0
    %2254 = vmatpush2.msra.mxu0 0.0
    %2255 = vmatprep.subr.mxu0 0.0
    %2256 = vmatpush2.msra.mxu0 0.0
    %2257 = vmatprep.subr.mxu0 0.0
    %2258 = vmatpush2.msra.mxu0 0.0
    %2259 = vmatprep.subr.mxu0 0.0
    %2260 = vmatpush2.msra.mxu0 0.0
    %2261 = vmatprep.subr.mxu0 0.0
    %2262 = vmatpush2.msra.mxu0 0.0
    %2263 = vmatprep.subr.mxu0 0.0
    %2264 = vmatpush2.msra.mxu0 0.0
    %2265 = vmatprep.subr.mxu0 0.0
    %2266 = vmatpush2.msra.mxu0 0.0
    %2267 = vmatprep.subr.mxu0 0.0
    %2268 = vmatpush2.msra.mxu0 0.0
    %2269 = vmatprep.subr.mxu0 0.0
    %2270 = vmatpush2.msra.mxu0 0.0
    %2271 = vmatprep.subr.mxu0 0.0
    %2272 = vmatpush2.msra.mxu0 0.0
    %2273 = vmatprep.subr.mxu0 0.0
    %2274 = vmatpush2.msra.mxu0 0.0
    %2275 = vmatprep.subr.mxu0 0.0
    %2276 = vmatpush2.msra.mxu0 0.0
    %2277 = vmatprep.subr.mxu0 0.0
    %2278 = vmatpush2.msra.mxu0 0.0
    %2279 = vmatprep.subr.mxu0 0.0
    %2280 = vmatpush2.msra.mxu0 0.0
    %2281 = vmatprep.subr.mxu0 0.0
    %2282 = vmatpush2.msra.mxu0 0.0
    %2283 = vmatprep.mubr.f32.mxu0 0.0
    %v2284 = vand.u32 %v1950, 4294901760
    %2285 = vmatmul.mubr.f32.gmra.mxu0 %v2284
    %v2286 = vpop.f32.mrf.mxu0
    %v2287 = vadd.f32 %v2055, %v2286
    %v2288 = vpop.f32.mrf.mxu0
    %v2289 = vadd.f32 %v2057, %v2288
    %2290 = vdwg.mxu0
    %v2291 = vand.u32 %v152, 4294901760
    %v2292 = vsub.f32 %v152, %v2291
    %2293 = vmatprep.subr.mxu0 %v2292
    %v2294 = vand.u32 %v151, 4294901760
    %v2295 = vsub.f32 %v151, %v2294
    %2296 = vmatpush1.msra.mxu0 %v2295
    %v2297 = vand.u32 %v150, 4294901760
    %v2298 = vsub.f32 %v150, %v2297
    %2299 = vmatprep.subr.mxu0 %v2298
    %v2300 = vand.u32 %v149, 4294901760
    %v2301 = vsub.f32 %v149, %v2300
    %2302 = vmatpush1.msra.mxu0 %v2301
    %v2303 = vand.u32 %v148, 4294901760
    %v2304 = vsub.f32 %v148, %v2303
    %2305 = vmatprep.subr.mxu0 %v2304
    %v2306 = vand.u32 %v147, 4294901760
    %v2307 = vsub.f32 %v147, %v2306
    %2308 = vmatpush1.msra.mxu0 %v2307
    %v2309 = vand.u32 %v146, 4294901760
    %v2310 = vsub.f32 %v146, %v2309
    %2311 = vmatprep.subr.mxu0 %v2310
    %v2312 = vand.u32 %v145, 4294901760
    %v2313 = vsub.f32 %v145, %v2312
    %2314 = vmatpush1.msra.mxu0 %v2313
    %v2315 = vand.u32 %v144, 4294901760
    %v2316 = vsub.f32 %v144, %v2315
    %2317 = vmatprep.subr.mxu0 %v2316
    %v2318 = vand.u32 %v143, 4294901760
    %v2319 = vsub.f32 %v143, %v2318
    %2320 = vmatpush1.msra.mxu0 %v2319
    %v2321 = vand.u32 %v142, 4294901760
    %v2322 = vsub.f32 %v142, %v2321
    %2323 = vmatprep.subr.mxu0 %v2322
    %v2324 = vand.u32 %v141, 4294901760
    %v2325 = vsub.f32 %v141, %v2324
    %2326 = vmatpush1.msra.mxu0 %v2325
    %v2327 = vand.u32 %v140, 4294901760
    %v2328 = vsub.f32 %v140, %v2327
    %2329 = vmatprep.subr.mxu0 %v2328
    %v2330 = vand.u32 %v139, 4294901760
    %v2331 = vsub.f32 %v139, %v2330
    %2332 = vmatpush1.msra.mxu0 %v2331
    %v2333 = vand.u32 %v138, 4294901760
    %v2334 = vsub.f32 %v138, %v2333
    %2335 = vmatprep.subr.mxu0 %v2334
    %v2336 = vand.u32 %v137, 4294901760
    %v2337 = vsub.f32 %v137, %v2336
    %2338 = vmatpush1.msra.mxu0 %v2337
    %v2339 = vand.u32 %v136, 4294901760
    %v2340 = vsub.f32 %v136, %v2339
    %2341 = vmatprep.subr.mxu0 %v2340
    %v2342 = vand.u32 %v135, 4294901760
    %v2343 = vsub.f32 %v135, %v2342
    %2344 = vmatpush1.msra.mxu0 %v2343
    %v2345 = vand.u32 %v134, 4294901760
    %v2346 = vsub.f32 %v134, %v2345
    %2347 = vmatprep.subr.mxu0 %v2346
    %v2348 = vand.u32 %v133, 4294901760
    %v2349 = vsub.f32 %v133, %v2348
    %2350 = vmatpush1.msra.mxu0 %v2349
    %v2351 = vand.u32 %v132, 4294901760
    %v2352 = vsub.f32 %v132, %v2351
    %2353 = vmatprep.subr.mxu0 %v2352
    %v2354 = vand.u32 %v131, 4294901760
    %v2355 = vsub.f32 %v131, %v2354
    %2356 = vmatpush1.msra.mxu0 %v2355
    %v2357 = vand.u32 %v130, 4294901760
    %v2358 = vsub.f32 %v130, %v2357
    %2359 = vmatprep.subr.mxu0 %v2358
    %v2360 = vand.u32 %v129, 4294901760
    %v2361 = vsub.f32 %v129, %v2360
    %2362 = vmatpush1.msra.mxu0 %v2361
    %v2363 = vand.u32 %v128, 4294901760
    %v2364 = vsub.f32 %v128, %v2363
    %2365 = vmatprep.subr.mxu0 %v2364
    %v2366 = vand.u32 %v127, 4294901760
    %v2367 = vsub.f32 %v127, %v2366
    %2368 = vmatpush1.msra.mxu0 %v2367
    %v2369 = vand.u32 %v126, 4294901760
    %v2370 = vsub.f32 %v126, %v2369
    %2371 = vmatprep.subr.mxu0 %v2370
    %v2372 = vand.u32 %v125, 4294901760
    %v2373 = vsub.f32 %v125, %v2372
    %2374 = vmatpush1.msra.mxu0 %v2373
    %v2375 = vand.u32 %v124, 4294901760
    %v2376 = vsub.f32 %v124, %v2375
    %2377 = vmatprep.subr.mxu0 %v2376
    %v2378 = vand.u32 %v123, 4294901760
    %v2379 = vsub.f32 %v123, %v2378
    %2380 = vmatpush1.msra.mxu0 %v2379
    %v2381 = vand.u32 %v122, 4294901760
    %v2382 = vsub.f32 %v122, %v2381
    %2383 = vmatprep.subr.mxu0 %v2382
    %v2384 = vand.u32 %v121, 4294901760
    %v2385 = vsub.f32 %v121, %v2384
    %2386 = vmatpush1.msra.mxu0 %v2385
    %2387 = vmatprep.subr.mxu0 0.0
    %2388 = vmatpush2.msra.mxu0 0.0
    %2389 = vmatprep.subr.mxu0 0.0
    %2390 = vmatpush2.msra.mxu0 0.0
    %2391 = vmatprep.subr.mxu0 0.0
    %2392 = vmatpush2.msra.mxu0 0.0
    %2393 = vmatprep.subr.mxu0 0.0
    %2394 = vmatpush2.msra.mxu0 0.0
    %2395 = vmatprep.subr.mxu0 0.0
    %2396 = vmatpush2.msra.mxu0 0.0
    %2397 = vmatprep.subr.mxu0 0.0
    %2398 = vmatpush2.msra.mxu0 0.0
    %2399 = vmatprep.subr.mxu0 0.0
    %2400 = vmatpush2.msra.mxu0 0.0
    %2401 = vmatprep.subr.mxu0 0.0
    %2402 = vmatpush2.msra.mxu0 0.0
    %2403 = vmatprep.subr.mxu0 0.0
    %2404 = vmatpush2.msra.mxu0 0.0
    %2405 = vmatprep.subr.mxu0 0.0
    %2406 = vmatpush2.msra.mxu0 0.0
    %2407 = vmatprep.subr.mxu0 0.0
    %2408 = vmatpush2.msra.mxu0 0.0
    %2409 = vmatprep.subr.mxu0 0.0
    %2410 = vmatpush2.msra.mxu0 0.0
    %2411 = vmatprep.subr.mxu0 0.0
    %2412 = vmatpush2.msra.mxu0 0.0
    %2413 = vmatprep.subr.mxu0 0.0
    %2414 = vmatpush2.msra.mxu0 0.0
    %2415 = vmatprep.subr.mxu0 0.0
    %2416 = vmatpush2.msra.mxu0 0.0
    %2417 = vmatprep.subr.mxu0 0.0
    %2418 = vmatpush2.msra.mxu0 0.0
    %2419 = vmatprep.mubr.f32.mxu0 0.0
    %v2420 = vand.u32 %v1950, 4294901760
    %v2421 = vsub.f32 %v1950, %v2420
    %2422 = vmatmul.mubr.f32.gmra.mxu0 %v2421
    %v2423 = vpop.f32.mrf.mxu0
    %v2424 = vadd.f32 %v2287, %v2423
    %v2425 = vpop.f32.mrf.mxu0
    %v2426 = vadd.f32 %v2289, %v2425
    %2427 = vdwg.mxu0
    %v2428 = vand.u32 %v152, 4294901760
    %2429 = vmatprep.subr.mxu0 %v2428
    %v2430 = vand.u32 %v151, 4294901760
    %2431 = vmatpush1.msra.mxu0 %v2430
    %v2432 = vand.u32 %v150, 4294901760
    %2433 = vmatprep.subr.mxu0 %v2432
    %v2434 = vand.u32 %v149, 4294901760
    %2435 = vmatpush1.msra.mxu0 %v2434
    %v2436 = vand.u32 %v148, 4294901760
    %2437 = vmatprep.subr.mxu0 %v2436
    %v2438 = vand.u32 %v147, 4294901760
    %2439 = vmatpush1.msra.mxu0 %v2438
    %v2440 = vand.u32 %v146, 4294901760
    %2441 = vmatprep.subr.mxu0 %v2440
    %v2442 = vand.u32 %v145, 4294901760
    %2443 = vmatpush1.msra.mxu0 %v2442
    %v2444 = vand.u32 %v144, 4294901760
    %2445 = vmatprep.subr.mxu0 %v2444
    %v2446 = vand.u32 %v143, 4294901760
    %2447 = vmatpush1.msra.mxu0 %v2446
    %v2448 = vand.u32 %v142, 4294901760
    %2449 = vmatprep.subr.mxu0 %v2448
    %v2450 = vand.u32 %v141, 4294901760
    %2451 = vmatpush1.msra.mxu0 %v2450
    %v2452 = vand.u32 %v140, 4294901760
    %2453 = vmatprep.subr.mxu0 %v2452
    %v2454 = vand.u32 %v139, 4294901760
    %2455 = vmatpush1.msra.mxu0 %v2454
    %v2456 = vand.u32 %v138, 4294901760
    %2457 = vmatprep.subr.mxu0 %v2456
    %v2458 = vand.u32 %v137, 4294901760
    %2459 = vmatpush1.msra.mxu0 %v2458
    %v2460 = vand.u32 %v136, 4294901760
    %2461 = vmatprep.subr.mxu0 %v2460
    %v2462 = vand.u32 %v135, 4294901760
    %2463 = vmatpush1.msra.mxu0 %v2462
    %v2464 = vand.u32 %v134, 4294901760
    %2465 = vmatprep.subr.mxu0 %v2464
    %v2466 = vand.u32 %v133, 4294901760
    %2467 = vmatpush1.msra.mxu0 %v2466
    %v2468 = vand.u32 %v132, 4294901760
    %2469 = vmatprep.subr.mxu0 %v2468
    %v2470 = vand.u32 %v131, 4294901760
    %2471 = vmatpush1.msra.mxu0 %v2470
    %v2472 = vand.u32 %v130, 4294901760
    %2473 = vmatprep.subr.mxu0 %v2472
    %v2474 = vand.u32 %v129, 4294901760
    %2475 = vmatpush1.msra.mxu0 %v2474
    %v2476 = vand.u32 %v128, 4294901760
    %2477 = vmatprep.subr.mxu0 %v2476
    %v2478 = vand.u32 %v127, 4294901760
    %2479 = vmatpush1.msra.mxu0 %v2478
    %v2480 = vand.u32 %v126, 4294901760
    %2481 = vmatprep.subr.mxu0 %v2480
    %v2482 = vand.u32 %v125, 4294901760
    %2483 = vmatpush1.msra.mxu0 %v2482
    %v2484 = vand.u32 %v124, 4294901760
    %2485 = vmatprep.subr.mxu0 %v2484
    %v2486 = vand.u32 %v123, 4294901760
    %2487 = vmatpush1.msra.mxu0 %v2486
    %v2488 = vand.u32 %v122, 4294901760
    %2489 = vmatprep.subr.mxu0 %v2488
    %v2490 = vand.u32 %v121, 4294901760
    %2491 = vmatpush1.msra.mxu0 %v2490
    %2492 = vmatprep.subr.mxu0 0.0
    %2493 = vmatpush2.msra.mxu0 0.0
    %2494 = vmatprep.subr.mxu0 0.0
    %2495 = vmatpush2.msra.mxu0 0.0
    %2496 = vmatprep.subr.mxu0 0.0
    %2497 = vmatpush2.msra.mxu0 0.0
    %2498 = vmatprep.subr.mxu0 0.0
    %2499 = vmatpush2.msra.mxu0 0.0
    %2500 = vmatprep.subr.mxu0 0.0
    %2501 = vmatpush2.msra.mxu0 0.0
    %2502 = vmatprep.subr.mxu0 0.0
    %2503 = vmatpush2.msra.mxu0 0.0
    %2504 = vmatprep.subr.mxu0 0.0
    %2505 = vmatpush2.msra.mxu0 0.0
    %2506 = vmatprep.subr.mxu0 0.0
    %2507 = vmatpush2.msra.mxu0 0.0
    %2508 = vmatprep.subr.mxu0 0.0
    %2509 = vmatpush2.msra.mxu0 0.0
    %2510 = vmatprep.subr.mxu0 0.0
    %2511 = vmatpush2.msra.mxu0 0.0
    %2512 = vmatprep.subr.mxu0 0.0
    %2513 = vmatpush2.msra.mxu0 0.0
    %2514 = vmatprep.subr.mxu0 0.0
    %2515 = vmatpush2.msra.mxu0 0.0
    %2516 = vmatprep.subr.mxu0 0.0
    %2517 = vmatpush2.msra.mxu0 0.0
    %2518 = vmatprep.subr.mxu0 0.0
    %2519 = vmatpush2.msra.mxu0 0.0
    %2520 = vmatprep.subr.mxu0 0.0
    %2521 = vmatpush2.msra.mxu0 0.0
    %2522 = vmatprep.subr.mxu0 0.0
    %2523 = vmatpush2.msra.mxu0 0.0
    %2524 = vmatprep.mubr.f32.mxu0 0.0
    %v2525 = vand.u32 %v1950, 4294901760
    %v2526 = vsub.f32 %v1950, %v2525
    %v2527 = vand.u32 %v2526, 4294901760
    %2528 = vmatmul.mubr.f32.gmra.mxu0 %v2527
    %v2529 = vpop.f32.mrf.mxu0
    %v2530 = vadd.f32 %v2424, %v2529
    %v2531 = vpop.f32.mrf.mxu0
    %v2532 = vadd.f32 %v2426, %v2531
    %2533 = vdwg.mxu0
    %v2534 = vand.u32 %v152, 4294901760
    %v2535 = vsub.f32 %v152, %v2534
    %v2536 = vand.u32 %v2535, 4294901760
    %2537 = vmatprep.subr.mxu0 %v2536
    %v2538 = vand.u32 %v151, 4294901760
    %v2539 = vsub.f32 %v151, %v2538
    %v2540 = vand.u32 %v2539, 4294901760
    %2541 = vmatpush1.msra.mxu0 %v2540
    %v2542 = vand.u32 %v150, 4294901760
    %v2543 = vsub.f32 %v150, %v2542
    %v2544 = vand.u32 %v2543, 4294901760
    %2545 = vmatprep.subr.mxu0 %v2544
    %v2546 = vand.u32 %v149, 4294901760
    %v2547 = vsub.f32 %v149, %v2546
    %v2548 = vand.u32 %v2547, 4294901760
    %2549 = vmatpush1.msra.mxu0 %v2548
    %v2550 = vand.u32 %v148, 4294901760
    %v2551 = vsub.f32 %v148, %v2550
    %v2552 = vand.u32 %v2551, 4294901760
    %2553 = vmatprep.subr.mxu0 %v2552
    %v2554 = vand.u32 %v147, 4294901760
    %v2555 = vsub.f32 %v147, %v2554
    %v2556 = vand.u32 %v2555, 4294901760
    %2557 = vmatpush1.msra.mxu0 %v2556
    %v2558 = vand.u32 %v146, 4294901760
    %v2559 = vsub.f32 %v146, %v2558
    %v2560 = vand.u32 %v2559, 4294901760
    %2561 = vmatprep.subr.mxu0 %v2560
    %v2562 = vand.u32 %v145, 4294901760
    %v2563 = vsub.f32 %v145, %v2562
    %v2564 = vand.u32 %v2563, 4294901760
    %2565 = vmatpush1.msra.mxu0 %v2564
    %v2566 = vand.u32 %v144, 4294901760
    %v2567 = vsub.f32 %v144, %v2566
    %v2568 = vand.u32 %v2567, 4294901760
    %2569 = vmatprep.subr.mxu0 %v2568
    %v2570 = vand.u32 %v143, 4294901760
    %v2571 = vsub.f32 %v143, %v2570
    %v2572 = vand.u32 %v2571, 4294901760
    %2573 = vmatpush1.msra.mxu0 %v2572
    %v2574 = vand.u32 %v142, 4294901760
    %v2575 = vsub.f32 %v142, %v2574
    %v2576 = vand.u32 %v2575, 4294901760
    %2577 = vmatprep.subr.mxu0 %v2576
    %v2578 = vand.u32 %v141, 4294901760
    %v2579 = vsub.f32 %v141, %v2578
    %v2580 = vand.u32 %v2579, 4294901760
    %2581 = vmatpush1.msra.mxu0 %v2580
    %v2582 = vand.u32 %v140, 4294901760
    %v2583 = vsub.f32 %v140, %v2582
    %v2584 = vand.u32 %v2583, 4294901760
    %2585 = vmatprep.subr.mxu0 %v2584
    %v2586 = vand.u32 %v139, 4294901760
    %v2587 = vsub.f32 %v139, %v2586
    %v2588 = vand.u32 %v2587, 4294901760
    %2589 = vmatpush1.msra.mxu0 %v2588
    %v2590 = vand.u32 %v138, 4294901760
    %v2591 = vsub.f32 %v138, %v2590
    %v2592 = vand.u32 %v2591, 4294901760
    %2593 = vmatprep.subr.mxu0 %v2592
    %v2594 = vand.u32 %v137, 4294901760
    %v2595 = vsub.f32 %v137, %v2594
    %v2596 = vand.u32 %v2595, 4294901760
    %2597 = vmatpush1.msra.mxu0 %v2596
    %v2598 = vand.u32 %v136, 4294901760
    %v2599 = vsub.f32 %v136, %v2598
    %v2600 = vand.u32 %v2599, 4294901760
    %2601 = vmatprep.subr.mxu0 %v2600
    %v2602 = vand.u32 %v135, 4294901760
    %v2603 = vsub.f32 %v135, %v2602
    %v2604 = vand.u32 %v2603, 4294901760
    %2605 = vmatpush1.msra.mxu0 %v2604
    %v2606 = vand.u32 %v134, 4294901760
    %v2607 = vsub.f32 %v134, %v2606
    %v2608 = vand.u32 %v2607, 4294901760
    %2609 = vmatprep.subr.mxu0 %v2608
    %v2610 = vand.u32 %v133, 4294901760
    %v2611 = vsub.f32 %v133, %v2610
    %v2612 = vand.u32 %v2611, 4294901760
    %2613 = vmatpush1.msra.mxu0 %v2612
    %v2614 = vand.u32 %v132, 4294901760
    %v2615 = vsub.f32 %v132, %v2614
    %v2616 = vand.u32 %v2615, 4294901760
    %2617 = vmatprep.subr.mxu0 %v2616
    %v2618 = vand.u32 %v131, 4294901760
    %v2619 = vsub.f32 %v131, %v2618
    %v2620 = vand.u32 %v2619, 4294901760
    %2621 = vmatpush1.msra.mxu0 %v2620
    %v2622 = vand.u32 %v130, 4294901760
    %v2623 = vsub.f32 %v130, %v2622
    %v2624 = vand.u32 %v2623, 4294901760
    %2625 = vmatprep.subr.mxu0 %v2624
    %v2626 = vand.u32 %v129, 4294901760
    %v2627 = vsub.f32 %v129, %v2626
    %v2628 = vand.u32 %v2627, 4294901760
    %2629 = vmatpush1.msra.mxu0 %v2628
    %v2630 = vand.u32 %v128, 4294901760
    %v2631 = vsub.f32 %v128, %v2630
    %v2632 = vand.u32 %v2631, 4294901760
    %2633 = vmatprep.subr.mxu0 %v2632
    %v2634 = vand.u32 %v127, 4294901760
    %v2635 = vsub.f32 %v127, %v2634
    %v2636 = vand.u32 %v2635, 4294901760
    %2637 = vmatpush1.msra.mxu0 %v2636
    %v2638 = vand.u32 %v126, 4294901760
    %v2639 = vsub.f32 %v126, %v2638
    %v2640 = vand.u32 %v2639, 4294901760
    %2641 = vmatprep.subr.mxu0 %v2640
    %v2642 = vand.u32 %v125, 4294901760
    %v2643 = vsub.f32 %v125, %v2642
    %v2644 = vand.u32 %v2643, 4294901760
    %2645 = vmatpush1.msra.mxu0 %v2644
    %v2646 = vand.u32 %v124, 4294901760
    %v2647 = vsub.f32 %v124, %v2646
    %v2648 = vand.u32 %v2647, 4294901760
    %2649 = vmatprep.subr.mxu0 %v2648
    %v2650 = vand.u32 %v123, 4294901760
    %v2651 = vsub.f32 %v123, %v2650
    %v2652 = vand.u32 %v2651, 4294901760
    %2653 = vmatpush1.msra.mxu0 %v2652
    %v2654 = vand.u32 %v122, 4294901760
    %v2655 = vsub.f32 %v122, %v2654
    %v2656 = vand.u32 %v2655, 4294901760
    %2657 = vmatprep.subr.mxu0 %v2656
    %v2658 = vand.u32 %v121, 4294901760
    %v2659 = vsub.f32 %v121, %v2658
    %v2660 = vand.u32 %v2659, 4294901760
    %2661 = vmatpush1.msra.mxu0 %v2660
    %2662 = vmatprep.subr.mxu0 0.0
    %2663 = vmatpush2.msra.mxu0 0.0
    %2664 = vmatprep.subr.mxu0 0.0
    %2665 = vmatpush2.msra.mxu0 0.0
    %2666 = vmatprep.subr.mxu0 0.0
    %2667 = vmatpush2.msra.mxu0 0.0
    %2668 = vmatprep.subr.mxu0 0.0
    %2669 = vmatpush2.msra.mxu0 0.0
    %2670 = vmatprep.subr.mxu0 0.0
    %2671 = vmatpush2.msra.mxu0 0.0
    %2672 = vmatprep.subr.mxu0 0.0
    %2673 = vmatpush2.msra.mxu0 0.0
    %2674 = vmatprep.subr.mxu0 0.0
    %2675 = vmatpush2.msra.mxu0 0.0
    %2676 = vmatprep.subr.mxu0 0.0
    %2677 = vmatpush2.msra.mxu0 0.0
    %2678 = vmatprep.subr.mxu0 0.0
    %2679 = vmatpush2.msra.mxu0 0.0
    %2680 = vmatprep.subr.mxu0 0.0
    %2681 = vmatpush2.msra.mxu0 0.0
    %2682 = vmatprep.subr.mxu0 0.0
    %2683 = vmatpush2.msra.mxu0 0.0
    %2684 = vmatprep.subr.mxu0 0.0
    %2685 = vmatpush2.msra.mxu0 0.0
    %2686 = vmatprep.subr.mxu0 0.0
    %2687 = vmatpush2.msra.mxu0 0.0
    %2688 = vmatprep.subr.mxu0 0.0
    %2689 = vmatpush2.msra.mxu0 0.0
    %2690 = vmatprep.subr.mxu0 0.0
    %2691 = vmatpush2.msra.mxu0 0.0
    %2692 = vmatprep.subr.mxu0 0.0
    %2693 = vmatpush2.msra.mxu0 0.0
    %2694 = vmatprep.mubr.f32.mxu0 0.0
    %v2695 = vand.u32 %v1950, 4294901760
    %2696 = vmatmul.mubr.f32.gmra.mxu0 %v2695
    %v2697 = vpop.f32.mrf.mxu0
    %v2698 = vadd.f32 %v2530, %v2697
    %v2699 = vpop.f32.mrf.mxu0
    %v2700 = vadd.f32 %v2532, %v2699
    %2701 = vdwg.mxu0
    %v2702 = vand.u32 %v152, 4294901760
    %2703 = vmatprep.subr.mxu0 %v2702
    %v2704 = vand.u32 %v151, 4294901760
    %2705 = vmatpush1.msra.mxu0 %v2704
    %v2706 = vand.u32 %v150, 4294901760
    %2707 = vmatprep.subr.mxu0 %v2706
    %v2708 = vand.u32 %v149, 4294901760
    %2709 = vmatpush1.msra.mxu0 %v2708
    %v2710 = vand.u32 %v148, 4294901760
    %2711 = vmatprep.subr.mxu0 %v2710
    %v2712 = vand.u32 %v147, 4294901760
    %2713 = vmatpush1.msra.mxu0 %v2712
    %v2714 = vand.u32 %v146, 4294901760
    %2715 = vmatprep.subr.mxu0 %v2714
    %v2716 = vand.u32 %v145, 4294901760
    %2717 = vmatpush1.msra.mxu0 %v2716
    %v2718 = vand.u32 %v144, 4294901760
    %2719 = vmatprep.subr.mxu0 %v2718
    %v2720 = vand.u32 %v143, 4294901760
    %2721 = vmatpush1.msra.mxu0 %v2720
    %v2722 = vand.u32 %v142, 4294901760
    %2723 = vmatprep.subr.mxu0 %v2722
    %v2724 = vand.u32 %v141, 4294901760
    %2725 = vmatpush1.msra.mxu0 %v2724
    %v2726 = vand.u32 %v140, 4294901760
    %2727 = vmatprep.subr.mxu0 %v2726
    %v2728 = vand.u32 %v139, 4294901760
    %2729 = vmatpush1.msra.mxu0 %v2728
    %v2730 = vand.u32 %v138, 4294901760
    %2731 = vmatprep.subr.mxu0 %v2730
    %v2732 = vand.u32 %v137, 4294901760
    %2733 = vmatpush1.msra.mxu0 %v2732
    %v2734 = vand.u32 %v136, 4294901760
    %2735 = vmatprep.subr.mxu0 %v2734
    %v2736 = vand.u32 %v135, 4294901760
    %2737 = vmatpush1.msra.mxu0 %v2736
    %v2738 = vand.u32 %v134, 4294901760
    %2739 = vmatprep.subr.mxu0 %v2738
    %v2740 = vand.u32 %v133, 4294901760
    %2741 = vmatpush1.msra.mxu0 %v2740
    %v2742 = vand.u32 %v132, 4294901760
    %2743 = vmatprep.subr.mxu0 %v2742
    %v2744 = vand.u32 %v131, 4294901760
    %2745 = vmatpush1.msra.mxu0 %v2744
    %v2746 = vand.u32 %v130, 4294901760
    %2747 = vmatprep.subr.mxu0 %v2746
    %v2748 = vand.u32 %v129, 4294901760
    %2749 = vmatpush1.msra.mxu0 %v2748
    %v2750 = vand.u32 %v128, 4294901760
    %2751 = vmatprep.subr.mxu0 %v2750
    %v2752 = vand.u32 %v127, 4294901760
    %2753 = vmatpush1.msra.mxu0 %v2752
    %v2754 = vand.u32 %v126, 4294901760
    %2755 = vmatprep.subr.mxu0 %v2754
    %v2756 = vand.u32 %v125, 4294901760
    %2757 = vmatpush1.msra.mxu0 %v2756
    %v2758 = vand.u32 %v124, 4294901760
    %2759 = vmatprep.subr.mxu0 %v2758
    %v2760 = vand.u32 %v123, 4294901760
    %2761 = vmatpush1.msra.mxu0 %v2760
    %v2762 = vand.u32 %v122, 4294901760
    %2763 = vmatprep.subr.mxu0 %v2762
    %v2764 = vand.u32 %v121, 4294901760
    %2765 = vmatpush1.msra.mxu0 %v2764
    %2766 = vmatprep.subr.mxu0 0.0
    %2767 = vmatpush2.msra.mxu0 0.0
    %2768 = vmatprep.subr.mxu0 0.0
    %2769 = vmatpush2.msra.mxu0 0.0
    %2770 = vmatprep.subr.mxu0 0.0
    %2771 = vmatpush2.msra.mxu0 0.0
    %2772 = vmatprep.subr.mxu0 0.0
    %2773 = vmatpush2.msra.mxu0 0.0
    %2774 = vmatprep.subr.mxu0 0.0
    %2775 = vmatpush2.msra.mxu0 0.0
    %2776 = vmatprep.subr.mxu0 0.0
    %2777 = vmatpush2.msra.mxu0 0.0
    %2778 = vmatprep.subr.mxu0 0.0
    %2779 = vmatpush2.msra.mxu0 0.0
    %2780 = vmatprep.subr.mxu0 0.0
    %2781 = vmatpush2.msra.mxu0 0.0
    %2782 = vmatprep.subr.mxu0 0.0
    %2783 = vmatpush2.msra.mxu0 0.0
    %2784 = vmatprep.subr.mxu0 0.0
    %2785 = vmatpush2.msra.mxu0 0.0
    %2786 = vmatprep.subr.mxu0 0.0
    %2787 = vmatpush2.msra.mxu0 0.0
    %2788 = vmatprep.subr.mxu0 0.0
    %2789 = vmatpush2.msra.mxu0 0.0
    %2790 = vmatprep.subr.mxu0 0.0
    %2791 = vmatpush2.msra.mxu0 0.0
    %2792 = vmatprep.subr.mxu0 0.0
    %2793 = vmatpush2.msra.mxu0 0.0
    %2794 = vmatprep.subr.mxu0 0.0
    %2795 = vmatpush2.msra.mxu0 0.0
    %2796 = vmatprep.subr.mxu0 0.0
    %2797 = vmatpush2.msra.mxu0 0.0
    %2798 = vmatprep.mubr.f32.mxu0 0.0
    %v2799 = vand.u32 %v1950, 4294901760
    %2800 = vmatmul.mubr.f32.gmra.mxu0 %v2799
    %v2801 = vpop.f32.mrf.mxu0
    %v2802 = vadd.f32 %v2698, %v2801
    %v2803 = vpop.f32.mrf.mxu0
    %v2804 = vadd.f32 %v2700, %v2803
    %2805 = vdwg.mxu0
    %v2806 = vadd.f32 %v1935, %v2802
    %v2807 = vadd.f32 %v1937, %v2804
    %v2808 = vlaneseq
    %v2809 = vshrl.u32 %v2808, 7
    %v2810 = vsub.s32 2, %v2809
    %v2811 = vrot.slane %v87, %v2810
    %v2812 = vmul.f32 %v2811, %v86
    %v2813 = vlaneseq
    %v2814 = vshrl.u32 %v2813, 7
    %v2815 = vsub.s32 2, %v2814
    %v2816 = vrot.slane %v88, %v2815
    %v2817 = vsub.f32 %v2812, %v2816
    %v2818 = vtanh.pop %v2817
    %v2819 = vmul.f32 %v2818, %v2818
    %v2820 = vand.u32 %v184, 4294901760
    %2821 = vmatprep.subr.mxu0 %v2820
    %v2822 = vand.u32 %v183, 4294901760
    %2823 = vmatpush1.msra.mxu0 %v2822
    %v2824 = vand.u32 %v182, 4294901760
    %2825 = vmatprep.subr.mxu0 %v2824
    %v2826 = vand.u32 %v181, 4294901760
    %2827 = vmatpush1.msra.mxu0 %v2826
    %v2828 = vand.u32 %v180, 4294901760
    %2829 = vmatprep.subr.mxu0 %v2828
    %v2830 = vand.u32 %v179, 4294901760
    %2831 = vmatpush1.msra.mxu0 %v2830
    %v2832 = vand.u32 %v178, 4294901760
    %2833 = vmatprep.subr.mxu0 %v2832
    %v2834 = vand.u32 %v177, 4294901760
    %2835 = vmatpush1.msra.mxu0 %v2834
    %v2836 = vand.u32 %v176, 4294901760
    %2837 = vmatprep.subr.mxu0 %v2836
    %v2838 = vand.u32 %v175, 4294901760
    %2839 = vmatpush1.msra.mxu0 %v2838
    %v2840 = vand.u32 %v174, 4294901760
    %2841 = vmatprep.subr.mxu0 %v2840
    %v2842 = vand.u32 %v173, 4294901760
    %2843 = vmatpush1.msra.mxu0 %v2842
    %v2844 = vand.u32 %v172, 4294901760
    %2845 = vmatprep.subr.mxu0 %v2844
    %v2846 = vand.u32 %v171, 4294901760
    %2847 = vmatpush1.msra.mxu0 %v2846
    %v2848 = vand.u32 %v170, 4294901760
    %2849 = vmatprep.subr.mxu0 %v2848
    %v2850 = vand.u32 %v169, 4294901760
    %2851 = vmatpush1.msra.mxu0 %v2850
    %v2852 = vand.u32 %v168, 4294901760
    %2853 = vmatprep.subr.mxu0 %v2852
    %v2854 = vand.u32 %v167, 4294901760
    %2855 = vmatpush1.msra.mxu0 %v2854
    %v2856 = vand.u32 %v166, 4294901760
    %2857 = vmatprep.subr.mxu0 %v2856
    %v2858 = vand.u32 %v165, 4294901760
    %2859 = vmatpush1.msra.mxu0 %v2858
    %v2860 = vand.u32 %v164, 4294901760
    %2861 = vmatprep.subr.mxu0 %v2860
    %v2862 = vand.u32 %v163, 4294901760
    %2863 = vmatpush1.msra.mxu0 %v2862
    %v2864 = vand.u32 %v162, 4294901760
    %2865 = vmatprep.subr.mxu0 %v2864
    %v2866 = vand.u32 %v161, 4294901760
    %2867 = vmatpush1.msra.mxu0 %v2866
    %v2868 = vand.u32 %v160, 4294901760
    %2869 = vmatprep.subr.mxu0 %v2868
    %v2870 = vand.u32 %v159, 4294901760
    %2871 = vmatpush1.msra.mxu0 %v2870
    %v2872 = vand.u32 %v158, 4294901760
    %2873 = vmatprep.subr.mxu0 %v2872
    %v2874 = vand.u32 %v157, 4294901760
    %2875 = vmatpush1.msra.mxu0 %v2874
    %v2876 = vand.u32 %v156, 4294901760
    %2877 = vmatprep.subr.mxu0 %v2876
    %v2878 = vand.u32 %v155, 4294901760
    %2879 = vmatpush1.msra.mxu0 %v2878
    %v2880 = vand.u32 %v154, 4294901760
    %2881 = vmatprep.subr.mxu0 %v2880
    %v2882 = vand.u32 %v153, 4294901760
    %2883 = vmatpush1.msra.mxu0 %v2882
    %2884 = vmatprep.subr.mxu0 0.0
    %2885 = vmatpush2.msra.mxu0 0.0
    %2886 = vmatprep.subr.mxu0 0.0
    %2887 = vmatpush2.msra.mxu0 0.0
    %2888 = vmatprep.subr.mxu0 0.0
    %2889 = vmatpush2.msra.mxu0 0.0
    %2890 = vmatprep.subr.mxu0 0.0
    %2891 = vmatpush2.msra.mxu0 0.0
    %2892 = vmatprep.subr.mxu0 0.0
    %2893 = vmatpush2.msra.mxu0 0.0
    %2894 = vmatprep.subr.mxu0 0.0
    %2895 = vmatpush2.msra.mxu0 0.0
    %2896 = vmatprep.subr.mxu0 0.0
    %2897 = vmatpush2.msra.mxu0 0.0
    %2898 = vmatprep.subr.mxu0 0.0
    %2899 = vmatpush2.msra.mxu0 0.0
    %2900 = vmatprep.subr.mxu0 0.0
    %2901 = vmatpush2.msra.mxu0 0.0
    %2902 = vmatprep.subr.mxu0 0.0
    %2903 = vmatpush2.msra.mxu0 0.0
    %2904 = vmatprep.subr.mxu0 0.0
    %2905 = vmatpush2.msra.mxu0 0.0
    %2906 = vmatprep.subr.mxu0 0.0
    %2907 = vmatpush2.msra.mxu0 0.0
    %2908 = vmatprep.subr.mxu0 0.0
    %2909 = vmatpush2.msra.mxu0 0.0
    %2910 = vmatprep.subr.mxu0 0.0
    %2911 = vmatpush2.msra.mxu0 0.0
    %2912 = vmatprep.subr.mxu0 0.0
    %2913 = vmatpush2.msra.mxu0 0.0
    %2914 = vmatprep.subr.mxu0 0.0
    %2915 = vmatpush2.msra.mxu0 0.0
    %2916 = vmatprep.mubr.f32.mxu0 0.0
    %v2917 = vand.u32 %v2819, 4294901760
    %v2918 = vsub.f32 %v2819, %v2917
    %v2919 = vand.u32 %v2918, 4294901760
    %v2920 = vsub.f32 %v2918, %v2919
    %v2921 = vand.u32 %v2920, 4294901760
    %2922 = vmatmul.mubr.f32.gmra.mxu0 %v2921
    %v2923 = vpop.f32.mrf.mxu0
    %v2924 = vadd.f32 0.0, %v2923
    %v2925 = vpop.f32.mrf.mxu0
    %v2926 = vadd.f32 0.0, %v2925
    %2927 = vdwg.mxu0
    %v2928 = vand.u32 %v184, 4294901760
    %v2929 = vsub.f32 %v184, %v2928
    %v2930 = vand.u32 %v2929, 4294901760
    %v2931 = vsub.f32 %v2929, %v2930
    %v2932 = vand.u32 %v2931, 4294901760
    %2933 = vmatprep.subr.mxu0 %v2932
    %v2934 = vand.u32 %v183, 4294901760
    %v2935 = vsub.f32 %v183, %v2934
    %v2936 = vand.u32 %v2935, 4294901760
    %v2937 = vsub.f32 %v2935, %v2936
    %v2938 = vand.u32 %v2937, 4294901760
    %2939 = vmatpush1.msra.mxu0 %v2938
    %v2940 = vand.u32 %v182, 4294901760
    %v2941 = vsub.f32 %v182, %v2940
    %v2942 = vand.u32 %v2941, 4294901760
    %v2943 = vsub.f32 %v2941, %v2942
    %v2944 = vand.u32 %v2943, 4294901760
    %2945 = vmatprep.subr.mxu0 %v2944
    %v2946 = vand.u32 %v181, 4294901760
    %v2947 = vsub.f32 %v181, %v2946
    %v2948 = vand.u32 %v2947, 4294901760
    %v2949 = vsub.f32 %v2947, %v2948
    %v2950 = vand.u32 %v2949, 4294901760
    %2951 = vmatpush1.msra.mxu0 %v2950
    %v2952 = vand.u32 %v180, 4294901760
    %v2953 = vsub.f32 %v180, %v2952
    %v2954 = vand.u32 %v2953, 4294901760
    %v2955 = vsub.f32 %v2953, %v2954
    %v2956 = vand.u32 %v2955, 4294901760
    %2957 = vmatprep.subr.mxu0 %v2956
    %v2958 = vand.u32 %v179, 4294901760
    %v2959 = vsub.f32 %v179, %v2958
    %v2960 = vand.u32 %v2959, 4294901760
    %v2961 = vsub.f32 %v2959, %v2960
    %v2962 = vand.u32 %v2961, 4294901760
    %2963 = vmatpush1.msra.mxu0 %v2962
    %v2964 = vand.u32 %v178, 4294901760
    %v2965 = vsub.f32 %v178, %v2964
    %v2966 = vand.u32 %v2965, 4294901760
    %v2967 = vsub.f32 %v2965, %v2966
    %v2968 = vand.u32 %v2967, 4294901760
    %2969 = vmatprep.subr.mxu0 %v2968
    %v2970 = vand.u32 %v177, 4294901760
    %v2971 = vsub.f32 %v177, %v2970
    %v2972 = vand.u32 %v2971, 4294901760
    %v2973 = vsub.f32 %v2971, %v2972
    %v2974 = vand.u32 %v2973, 4294901760
    %2975 = vmatpush1.msra.mxu0 %v2974
    %v2976 = vand.u32 %v176, 4294901760
    %v2977 = vsub.f32 %v176, %v2976
    %v2978 = vand.u32 %v2977, 4294901760
    %v2979 = vsub.f32 %v2977, %v2978
    %v2980 = vand.u32 %v2979, 4294901760
    %2981 = vmatprep.subr.mxu0 %v2980
    %v2982 = vand.u32 %v175, 4294901760
    %v2983 = vsub.f32 %v175, %v2982
    %v2984 = vand.u32 %v2983, 4294901760
    %v2985 = vsub.f32 %v2983, %v2984
    %v2986 = vand.u32 %v2985, 4294901760
    %2987 = vmatpush1.msra.mxu0 %v2986
    %v2988 = vand.u32 %v174, 4294901760
    %v2989 = vsub.f32 %v174, %v2988
    %v2990 = vand.u32 %v2989, 4294901760
    %v2991 = vsub.f32 %v2989, %v2990
    %v2992 = vand.u32 %v2991, 4294901760
    %2993 = vmatprep.subr.mxu0 %v2992
    %v2994 = vand.u32 %v173, 4294901760
    %v2995 = vsub.f32 %v173, %v2994
    %v2996 = vand.u32 %v2995, 4294901760
    %v2997 = vsub.f32 %v2995, %v2996
    %v2998 = vand.u32 %v2997, 4294901760
    %2999 = vmatpush1.msra.mxu0 %v2998
    %v3000 = vand.u32 %v172, 4294901760
    %v3001 = vsub.f32 %v172, %v3000
    %v3002 = vand.u32 %v3001, 4294901760
    %v3003 = vsub.f32 %v3001, %v3002
    %v3004 = vand.u32 %v3003, 4294901760
    %3005 = vmatprep.subr.mxu0 %v3004
    %v3006 = vand.u32 %v171, 4294901760
    %v3007 = vsub.f32 %v171, %v3006
    %v3008 = vand.u32 %v3007, 4294901760
    %v3009 = vsub.f32 %v3007, %v3008
    %v3010 = vand.u32 %v3009, 4294901760
    %3011 = vmatpush1.msra.mxu0 %v3010
    %v3012 = vand.u32 %v170, 4294901760
    %v3013 = vsub.f32 %v170, %v3012
    %v3014 = vand.u32 %v3013, 4294901760
    %v3015 = vsub.f32 %v3013, %v3014
    %v3016 = vand.u32 %v3015, 4294901760
    %3017 = vmatprep.subr.mxu0 %v3016
    %v3018 = vand.u32 %v169, 4294901760
    %v3019 = vsub.f32 %v169, %v3018
    %v3020 = vand.u32 %v3019, 4294901760
    %v3021 = vsub.f32 %v3019, %v3020
    %v3022 = vand.u32 %v3021, 4294901760
    %3023 = vmatpush1.msra.mxu0 %v3022
    %v3024 = vand.u32 %v168, 4294901760
    %v3025 = vsub.f32 %v168, %v3024
    %v3026 = vand.u32 %v3025, 4294901760
    %v3027 = vsub.f32 %v3025, %v3026
    %v3028 = vand.u32 %v3027, 4294901760
    %3029 = vmatprep.subr.mxu0 %v3028
    %v3030 = vand.u32 %v167, 4294901760
    %v3031 = vsub.f32 %v167, %v3030
    %v3032 = vand.u32 %v3031, 4294901760
    %v3033 = vsub.f32 %v3031, %v3032
    %v3034 = vand.u32 %v3033, 4294901760
    %3035 = vmatpush1.msra.mxu0 %v3034
    %v3036 = vand.u32 %v166, 4294901760
    %v3037 = vsub.f32 %v166, %v3036
    %v3038 = vand.u32 %v3037, 4294901760
    %v3039 = vsub.f32 %v3037, %v3038
    %v3040 = vand.u32 %v3039, 4294901760
    %3041 = vmatprep.subr.mxu0 %v3040
    %v3042 = vand.u32 %v165, 4294901760
    %v3043 = vsub.f32 %v165, %v3042
    %v3044 = vand.u32 %v3043, 4294901760
    %v3045 = vsub.f32 %v3043, %v3044
    %v3046 = vand.u32 %v3045, 4294901760
    %3047 = vmatpush1.msra.mxu0 %v3046
    %v3048 = vand.u32 %v164, 4294901760
    %v3049 = vsub.f32 %v164, %v3048
    %v3050 = vand.u32 %v3049, 4294901760
    %v3051 = vsub.f32 %v3049, %v3050
    %v3052 = vand.u32 %v3051, 4294901760
    %3053 = vmatprep.subr.mxu0 %v3052
    %v3054 = vand.u32 %v163, 4294901760
    %v3055 = vsub.f32 %v163, %v3054
    %v3056 = vand.u32 %v3055, 4294901760
    %v3057 = vsub.f32 %v3055, %v3056
    %v3058 = vand.u32 %v3057, 4294901760
    %3059 = vmatpush1.msra.mxu0 %v3058
    %v3060 = vand.u32 %v162, 4294901760
    %v3061 = vsub.f32 %v162, %v3060
    %v3062 = vand.u32 %v3061, 4294901760
    %v3063 = vsub.f32 %v3061, %v3062
    %v3064 = vand.u32 %v3063, 4294901760
    %3065 = vmatprep.subr.mxu0 %v3064
    %v3066 = vand.u32 %v161, 4294901760
    %v3067 = vsub.f32 %v161, %v3066
    %v3068 = vand.u32 %v3067, 4294901760
    %v3069 = vsub.f32 %v3067, %v3068
    %v3070 = vand.u32 %v3069, 4294901760
    %3071 = vmatpush1.msra.mxu0 %v3070
    %v3072 = vand.u32 %v160, 4294901760
    %v3073 = vsub.f32 %v160, %v3072
    %v3074 = vand.u32 %v3073, 4294901760
    %v3075 = vsub.f32 %v3073, %v3074
    %v3076 = vand.u32 %v3075, 4294901760
    %3077 = vmatprep.subr.mxu0 %v3076
    %v3078 = vand.u32 %v159, 4294901760
    %v3079 = vsub.f32 %v159, %v3078
    %v3080 = vand.u32 %v3079, 4294901760
    %v3081 = vsub.f32 %v3079, %v3080
    %v3082 = vand.u32 %v3081, 4294901760
    %3083 = vmatpush1.msra.mxu0 %v3082
    %v3084 = vand.u32 %v158, 4294901760
    %v3085 = vsub.f32 %v158, %v3084
    %v3086 = vand.u32 %v3085, 4294901760
    %v3087 = vsub.f32 %v3085, %v3086
    %v3088 = vand.u32 %v3087, 4294901760
    %3089 = vmatprep.subr.mxu0 %v3088
    %v3090 = vand.u32 %v157, 4294901760
    %v3091 = vsub.f32 %v157, %v3090
    %v3092 = vand.u32 %v3091, 4294901760
    %v3093 = vsub.f32 %v3091, %v3092
    %v3094 = vand.u32 %v3093, 4294901760
    %3095 = vmatpush1.msra.mxu0 %v3094
    %v3096 = vand.u32 %v156, 4294901760
    %v3097 = vsub.f32 %v156, %v3096
    %v3098 = vand.u32 %v3097, 4294901760
    %v3099 = vsub.f32 %v3097, %v3098
    %v3100 = vand.u32 %v3099, 4294901760
    %3101 = vmatprep.subr.mxu0 %v3100
    %v3102 = vand.u32 %v155, 4294901760
    %v3103 = vsub.f32 %v155, %v3102
    %v3104 = vand.u32 %v3103, 4294901760
    %v3105 = vsub.f32 %v3103, %v3104
    %v3106 = vand.u32 %v3105, 4294901760
    %3107 = vmatpush1.msra.mxu0 %v3106
    %v3108 = vand.u32 %v154, 4294901760
    %v3109 = vsub.f32 %v154, %v3108
    %v3110 = vand.u32 %v3109, 4294901760
    %v3111 = vsub.f32 %v3109, %v3110
    %v3112 = vand.u32 %v3111, 4294901760
    %3113 = vmatprep.subr.mxu0 %v3112
    %v3114 = vand.u32 %v153, 4294901760
    %v3115 = vsub.f32 %v153, %v3114
    %v3116 = vand.u32 %v3115, 4294901760
    %v3117 = vsub.f32 %v3115, %v3116
    %v3118 = vand.u32 %v3117, 4294901760
    %3119 = vmatpush1.msra.mxu0 %v3118
    %3120 = vmatprep.subr.mxu0 0.0
    %3121 = vmatpush2.msra.mxu0 0.0
    %3122 = vmatprep.subr.mxu0 0.0
    %3123 = vmatpush2.msra.mxu0 0.0
    %3124 = vmatprep.subr.mxu0 0.0
    %3125 = vmatpush2.msra.mxu0 0.0
    %3126 = vmatprep.subr.mxu0 0.0
    %3127 = vmatpush2.msra.mxu0 0.0
    %3128 = vmatprep.subr.mxu0 0.0
    %3129 = vmatpush2.msra.mxu0 0.0
    %3130 = vmatprep.subr.mxu0 0.0
    %3131 = vmatpush2.msra.mxu0 0.0
    %3132 = vmatprep.subr.mxu0 0.0
    %3133 = vmatpush2.msra.mxu0 0.0
    %3134 = vmatprep.subr.mxu0 0.0
    %3135 = vmatpush2.msra.mxu0 0.0
    %3136 = vmatprep.subr.mxu0 0.0
    %3137 = vmatpush2.msra.mxu0 0.0
    %3138 = vmatprep.subr.mxu0 0.0
    %3139 = vmatpush2.msra.mxu0 0.0
    %3140 = vmatprep.subr.mxu0 0.0
    %3141 = vmatpush2.msra.mxu0 0.0
    %3142 = vmatprep.subr.mxu0 0.0
    %3143 = vmatpush2.msra.mxu0 0.0
    %3144 = vmatprep.subr.mxu0 0.0
    %3145 = vmatpush2.msra.mxu0 0.0
    %3146 = vmatprep.subr.mxu0 0.0
    %3147 = vmatpush2.msra.mxu0 0.0
    %3148 = vmatprep.subr.mxu0 0.0
    %3149 = vmatpush2.msra.mxu0 0.0
    %3150 = vmatprep.subr.mxu0 0.0
    %3151 = vmatpush2.msra.mxu0 0.0
    %3152 = vmatprep.mubr.f32.mxu0 0.0
    %v3153 = vand.u32 %v2819, 4294901760
    %3154 = vmatmul.mubr.f32.gmra.mxu0 %v3153
    %v3155 = vpop.f32.mrf.mxu0
    %v3156 = vadd.f32 %v2924, %v3155
    %v3157 = vpop.f32.mrf.mxu0
    %v3158 = vadd.f32 %v2926, %v3157
    %3159 = vdwg.mxu0
    %v3160 = vand.u32 %v184, 4294901760
    %v3161 = vsub.f32 %v184, %v3160
    %3162 = vmatprep.subr.mxu0 %v3161
    %v3163 = vand.u32 %v183, 4294901760
    %v3164 = vsub.f32 %v183, %v3163
    %3165 = vmatpush1.msra.mxu0 %v3164
    %v3166 = vand.u32 %v182, 4294901760
    %v3167 = vsub.f32 %v182, %v3166
    %3168 = vmatprep.subr.mxu0 %v3167
    %v3169 = vand.u32 %v181, 4294901760
    %v3170 = vsub.f32 %v181, %v3169
    %3171 = vmatpush1.msra.mxu0 %v3170
    %v3172 = vand.u32 %v180, 4294901760
    %v3173 = vsub.f32 %v180, %v3172
    %3174 = vmatprep.subr.mxu0 %v3173
    %v3175 = vand.u32 %v179, 4294901760
    %v3176 = vsub.f32 %v179, %v3175
    %3177 = vmatpush1.msra.mxu0 %v3176
    %v3178 = vand.u32 %v178, 4294901760
    %v3179 = vsub.f32 %v178, %v3178
    %3180 = vmatprep.subr.mxu0 %v3179
    %v3181 = vand.u32 %v177, 4294901760
    %v3182 = vsub.f32 %v177, %v3181
    %3183 = vmatpush1.msra.mxu0 %v3182
    %v3184 = vand.u32 %v176, 4294901760
    %v3185 = vsub.f32 %v176, %v3184
    %3186 = vmatprep.subr.mxu0 %v3185
    %v3187 = vand.u32 %v175, 4294901760
    %v3188 = vsub.f32 %v175, %v3187
    %3189 = vmatpush1.msra.mxu0 %v3188
    %v3190 = vand.u32 %v174, 4294901760
    %v3191 = vsub.f32 %v174, %v3190
    %3192 = vmatprep.subr.mxu0 %v3191
    %v3193 = vand.u32 %v173, 4294901760
    %v3194 = vsub.f32 %v173, %v3193
    %3195 = vmatpush1.msra.mxu0 %v3194
    %v3196 = vand.u32 %v172, 4294901760
    %v3197 = vsub.f32 %v172, %v3196
    %3198 = vmatprep.subr.mxu0 %v3197
    %v3199 = vand.u32 %v171, 4294901760
    %v3200 = vsub.f32 %v171, %v3199
    %3201 = vmatpush1.msra.mxu0 %v3200
    %v3202 = vand.u32 %v170, 4294901760
    %v3203 = vsub.f32 %v170, %v3202
    %3204 = vmatprep.subr.mxu0 %v3203
    %v3205 = vand.u32 %v169, 4294901760
    %v3206 = vsub.f32 %v169, %v3205
    %3207 = vmatpush1.msra.mxu0 %v3206
    %v3208 = vand.u32 %v168, 4294901760
    %v3209 = vsub.f32 %v168, %v3208
    %3210 = vmatprep.subr.mxu0 %v3209
    %v3211 = vand.u32 %v167, 4294901760
    %v3212 = vsub.f32 %v167, %v3211
    %3213 = vmatpush1.msra.mxu0 %v3212
    %v3214 = vand.u32 %v166, 4294901760
    %v3215 = vsub.f32 %v166, %v3214
    %3216 = vmatprep.subr.mxu0 %v3215
    %v3217 = vand.u32 %v165, 4294901760
    %v3218 = vsub.f32 %v165, %v3217
    %3219 = vmatpush1.msra.mxu0 %v3218
    %v3220 = vand.u32 %v164, 4294901760
    %v3221 = vsub.f32 %v164, %v3220
    %3222 = vmatprep.subr.mxu0 %v3221
    %v3223 = vand.u32 %v163, 4294901760
    %v3224 = vsub.f32 %v163, %v3223
    %3225 = vmatpush1.msra.mxu0 %v3224
    %v3226 = vand.u32 %v162, 4294901760
    %v3227 = vsub.f32 %v162, %v3226
    %3228 = vmatprep.subr.mxu0 %v3227
    %v3229 = vand.u32 %v161, 4294901760
    %v3230 = vsub.f32 %v161, %v3229
    %3231 = vmatpush1.msra.mxu0 %v3230
    %v3232 = vand.u32 %v160, 4294901760
    %v3233 = vsub.f32 %v160, %v3232
    %3234 = vmatprep.subr.mxu0 %v3233
    %v3235 = vand.u32 %v159, 4294901760
    %v3236 = vsub.f32 %v159, %v3235
    %3237 = vmatpush1.msra.mxu0 %v3236
    %v3238 = vand.u32 %v158, 4294901760
    %v3239 = vsub.f32 %v158, %v3238
    %3240 = vmatprep.subr.mxu0 %v3239
    %v3241 = vand.u32 %v157, 4294901760
    %v3242 = vsub.f32 %v157, %v3241
    %3243 = vmatpush1.msra.mxu0 %v3242
    %v3244 = vand.u32 %v156, 4294901760
    %v3245 = vsub.f32 %v156, %v3244
    %3246 = vmatprep.subr.mxu0 %v3245
    %v3247 = vand.u32 %v155, 4294901760
    %v3248 = vsub.f32 %v155, %v3247
    %3249 = vmatpush1.msra.mxu0 %v3248
    %v3250 = vand.u32 %v154, 4294901760
    %v3251 = vsub.f32 %v154, %v3250
    %3252 = vmatprep.subr.mxu0 %v3251
    %v3253 = vand.u32 %v153, 4294901760
    %v3254 = vsub.f32 %v153, %v3253
    %3255 = vmatpush1.msra.mxu0 %v3254
    %3256 = vmatprep.subr.mxu0 0.0
    %3257 = vmatpush2.msra.mxu0 0.0
    %3258 = vmatprep.subr.mxu0 0.0
    %3259 = vmatpush2.msra.mxu0 0.0
    %3260 = vmatprep.subr.mxu0 0.0
    %3261 = vmatpush2.msra.mxu0 0.0
    %3262 = vmatprep.subr.mxu0 0.0
    %3263 = vmatpush2.msra.mxu0 0.0
    %3264 = vmatprep.subr.mxu0 0.0
    %3265 = vmatpush2.msra.mxu0 0.0
    %3266 = vmatprep.subr.mxu0 0.0
    %3267 = vmatpush2.msra.mxu0 0.0
    %3268 = vmatprep.subr.mxu0 0.0
    %3269 = vmatpush2.msra.mxu0 0.0
    %3270 = vmatprep.subr.mxu0 0.0
    %3271 = vmatpush2.msra.mxu0 0.0
    %3272 = vmatprep.subr.mxu0 0.0
    %3273 = vmatpush2.msra.mxu0 0.0
    %3274 = vmatprep.subr.mxu0 0.0
    %3275 = vmatpush2.msra.mxu0 0.0
    %3276 = vmatprep.subr.mxu0 0.0
    %3277 = vmatpush2.msra.mxu0 0.0
    %3278 = vmatprep.subr.mxu0 0.0
    %3279 = vmatpush2.msra.mxu0 0.0
    %3280 = vmatprep.subr.mxu0 0.0
    %3281 = vmatpush2.msra.mxu0 0.0
    %3282 = vmatprep.subr.mxu0 0.0
    %3283 = vmatpush2.msra.mxu0 0.0
    %3284 = vmatprep.subr.mxu0 0.0
    %3285 = vmatpush2.msra.mxu0 0.0
    %3286 = vmatprep.subr.mxu0 0.0
    %3287 = vmatpush2.msra.mxu0 0.0
    %3288 = vmatprep.mubr.f32.mxu0 0.0
    %v3289 = vand.u32 %v2819, 4294901760
    %v3290 = vsub.f32 %v2819, %v3289
    %3291 = vmatmul.mubr.f32.gmra.mxu0 %v3290
    %v3292 = vpop.f32.mrf.mxu0
    %v3293 = vadd.f32 %v3156, %v3292
    %v3294 = vpop.f32.mrf.mxu0
    %v3295 = vadd.f32 %v3158, %v3294
    %3296 = vdwg.mxu0
    %v3297 = vand.u32 %v184, 4294901760
    %3298 = vmatprep.subr.mxu0 %v3297
    %v3299 = vand.u32 %v183, 4294901760
    %3300 = vmatpush1.msra.mxu0 %v3299
    %v3301 = vand.u32 %v182, 4294901760
    %3302 = vmatprep.subr.mxu0 %v3301
    %v3303 = vand.u32 %v181, 4294901760
    %3304 = vmatpush1.msra.mxu0 %v3303
    %v3305 = vand.u32 %v180, 4294901760
    %3306 = vmatprep.subr.mxu0 %v3305
    %v3307 = vand.u32 %v179, 4294901760
    %3308 = vmatpush1.msra.mxu0 %v3307
    %v3309 = vand.u32 %v178, 4294901760
    %3310 = vmatprep.subr.mxu0 %v3309
    %v3311 = vand.u32 %v177, 4294901760
    %3312 = vmatpush1.msra.mxu0 %v3311
    %v3313 = vand.u32 %v176, 4294901760
    %3314 = vmatprep.subr.mxu0 %v3313
    %v3315 = vand.u32 %v175, 4294901760
    %3316 = vmatpush1.msra.mxu0 %v3315
    %v3317 = vand.u32 %v174, 4294901760
    %3318 = vmatprep.subr.mxu0 %v3317
    %v3319 = vand.u32 %v173, 4294901760
    %3320 = vmatpush1.msra.mxu0 %v3319
    %v3321 = vand.u32 %v172, 4294901760
    %3322 = vmatprep.subr.mxu0 %v3321
    %v3323 = vand.u32 %v171, 4294901760
    %3324 = vmatpush1.msra.mxu0 %v3323
    %v3325 = vand.u32 %v170, 4294901760
    %3326 = vmatprep.subr.mxu0 %v3325
    %v3327 = vand.u32 %v169, 4294901760
    %3328 = vmatpush1.msra.mxu0 %v3327
    %v3329 = vand.u32 %v168, 4294901760
    %3330 = vmatprep.subr.mxu0 %v3329
    %v3331 = vand.u32 %v167, 4294901760
    %3332 = vmatpush1.msra.mxu0 %v3331
    %v3333 = vand.u32 %v166, 4294901760
    %3334 = vmatprep.subr.mxu0 %v3333
    %v3335 = vand.u32 %v165, 4294901760
    %3336 = vmatpush1.msra.mxu0 %v3335
    %v3337 = vand.u32 %v164, 4294901760
    %3338 = vmatprep.subr.mxu0 %v3337
    %v3339 = vand.u32 %v163, 4294901760
    %3340 = vmatpush1.msra.mxu0 %v3339
    %v3341 = vand.u32 %v162, 4294901760
    %3342 = vmatprep.subr.mxu0 %v3341
    %v3343 = vand.u32 %v161, 4294901760
    %3344 = vmatpush1.msra.mxu0 %v3343
    %v3345 = vand.u32 %v160, 4294901760
    %3346 = vmatprep.subr.mxu0 %v3345
    %v3347 = vand.u32 %v159, 4294901760
    %3348 = vmatpush1.msra.mxu0 %v3347
    %v3349 = vand.u32 %v158, 4294901760
    %3350 = vmatprep.subr.mxu0 %v3349
    %v3351 = vand.u32 %v157, 4294901760
    %3352 = vmatpush1.msra.mxu0 %v3351
    %v3353 = vand.u32 %v156, 4294901760
    %3354 = vmatprep.subr.mxu0 %v3353
    %v3355 = vand.u32 %v155, 4294901760
    %3356 = vmatpush1.msra.mxu0 %v3355
    %v3357 = vand.u32 %v154, 4294901760
    %3358 = vmatprep.subr.mxu0 %v3357
    %v3359 = vand.u32 %v153, 4294901760
    %3360 = vmatpush1.msra.mxu0 %v3359
    %3361 = vmatprep.subr.mxu0 0.0
    %3362 = vmatpush2.msra.mxu0 0.0
    %3363 = vmatprep.subr.mxu0 0.0
    %3364 = vmatpush2.msra.mxu0 0.0
    %3365 = vmatprep.subr.mxu0 0.0
    %3366 = vmatpush2.msra.mxu0 0.0
    %3367 = vmatprep.subr.mxu0 0.0
    %3368 = vmatpush2.msra.mxu0 0.0
    %3369 = vmatprep.subr.mxu0 0.0
    %3370 = vmatpush2.msra.mxu0 0.0
    %3371 = vmatprep.subr.mxu0 0.0
    %3372 = vmatpush2.msra.mxu0 0.0
    %3373 = vmatprep.subr.mxu0 0.0
    %3374 = vmatpush2.msra.mxu0 0.0
    %3375 = vmatprep.subr.mxu0 0.0
    %3376 = vmatpush2.msra.mxu0 0.0
    %3377 = vmatprep.subr.mxu0 0.0
    %3378 = vmatpush2.msra.mxu0 0.0
    %3379 = vmatprep.subr.mxu0 0.0
    %3380 = vmatpush2.msra.mxu0 0.0
    %3381 = vmatprep.subr.mxu0 0.0
    %3382 = vmatpush2.msra.mxu0 0.0
    %3383 = vmatprep.subr.mxu0 0.0
    %3384 = vmatpush2.msra.mxu0 0.0
    %3385 = vmatprep.subr.mxu0 0.0
    %3386 = vmatpush2.msra.mxu0 0.0
    %3387 = vmatprep.subr.mxu0 0.0
    %3388 = vmatpush2.msra.mxu0 0.0
    %3389 = vmatprep.subr.mxu0 0.0
    %3390 = vmatpush2.msra.mxu0 0.0
    %3391 = vmatprep.subr.mxu0 0.0
    %3392 = vmatpush2.msra.mxu0 0.0
    %3393 = vmatprep.mubr.f32.mxu0 0.0
    %v3394 = vand.u32 %v2819, 4294901760
    %v3395 = vsub.f32 %v2819, %v3394
    %v3396 = vand.u32 %v3395, 4294901760
    %3397 = vmatmul.mubr.f32.gmra.mxu0 %v3396
    %v3398 = vpop.f32.mrf.mxu0
    %v3399 = vadd.f32 %v3293, %v3398
    %v3400 = vpop.f32.mrf.mxu0
    %v3401 = vadd.f32 %v3295, %v3400
    %3402 = vdwg.mxu0
    %v3403 = vand.u32 %v184, 4294901760
    %v3404 = vsub.f32 %v184, %v3403
    %v3405 = vand.u32 %v3404, 4294901760
    %3406 = vmatprep.subr.mxu0 %v3405
    %v3407 = vand.u32 %v183, 4294901760
    %v3408 = vsub.f32 %v183, %v3407
    %v3409 = vand.u32 %v3408, 4294901760
    %3410 = vmatpush1.msra.mxu0 %v3409
    %v3411 = vand.u32 %v182, 4294901760
    %v3412 = vsub.f32 %v182, %v3411
    %v3413 = vand.u32 %v3412, 4294901760
    %3414 = vmatprep.subr.mxu0 %v3413
    %v3415 = vand.u32 %v181, 4294901760
    %v3416 = vsub.f32 %v181, %v3415
    %v3417 = vand.u32 %v3416, 4294901760
    %3418 = vmatpush1.msra.mxu0 %v3417
    %v3419 = vand.u32 %v180, 4294901760
    %v3420 = vsub.f32 %v180, %v3419
    %v3421 = vand.u32 %v3420, 4294901760
    %3422 = vmatprep.subr.mxu0 %v3421
    %v3423 = vand.u32 %v179, 4294901760
    %v3424 = vsub.f32 %v179, %v3423
    %v3425 = vand.u32 %v3424, 4294901760
    %3426 = vmatpush1.msra.mxu0 %v3425
    %v3427 = vand.u32 %v178, 4294901760
    %v3428 = vsub.f32 %v178, %v3427
    %v3429 = vand.u32 %v3428, 4294901760
    %3430 = vmatprep.subr.mxu0 %v3429
    %v3431 = vand.u32 %v177, 4294901760
    %v3432 = vsub.f32 %v177, %v3431
    %v3433 = vand.u32 %v3432, 4294901760
    %3434 = vmatpush1.msra.mxu0 %v3433
    %v3435 = vand.u32 %v176, 4294901760
    %v3436 = vsub.f32 %v176, %v3435
    %v3437 = vand.u32 %v3436, 4294901760
    %3438 = vmatprep.subr.mxu0 %v3437
    %v3439 = vand.u32 %v175, 4294901760
    %v3440 = vsub.f32 %v175, %v3439
    %v3441 = vand.u32 %v3440, 4294901760
    %3442 = vmatpush1.msra.mxu0 %v3441
    %v3443 = vand.u32 %v174, 4294901760
    %v3444 = vsub.f32 %v174, %v3443
    %v3445 = vand.u32 %v3444, 4294901760
    %3446 = vmatprep.subr.mxu0 %v3445
    %v3447 = vand.u32 %v173, 4294901760
    %v3448 = vsub.f32 %v173, %v3447
    %v3449 = vand.u32 %v3448, 4294901760
    %3450 = vmatpush1.msra.mxu0 %v3449
    %v3451 = vand.u32 %v172, 4294901760
    %v3452 = vsub.f32 %v172, %v3451
    %v3453 = vand.u32 %v3452, 4294901760
    %3454 = vmatprep.subr.mxu0 %v3453
    %v3455 = vand.u32 %v171, 4294901760
    %v3456 = vsub.f32 %v171, %v3455
    %v3457 = vand.u32 %v3456, 4294901760
    %3458 = vmatpush1.msra.mxu0 %v3457
    %v3459 = vand.u32 %v170, 4294901760
    %v3460 = vsub.f32 %v170, %v3459
    %v3461 = vand.u32 %v3460, 4294901760
    %3462 = vmatprep.subr.mxu0 %v3461
    %v3463 = vand.u32 %v169, 4294901760
    %v3464 = vsub.f32 %v169, %v3463
    %v3465 = vand.u32 %v3464, 4294901760
    %3466 = vmatpush1.msra.mxu0 %v3465
    %v3467 = vand.u32 %v168, 4294901760
    %v3468 = vsub.f32 %v168, %v3467
    %v3469 = vand.u32 %v3468, 4294901760
    %3470 = vmatprep.subr.mxu0 %v3469
    %v3471 = vand.u32 %v167, 4294901760
    %v3472 = vsub.f32 %v167, %v3471
    %v3473 = vand.u32 %v3472, 4294901760
    %3474 = vmatpush1.msra.mxu0 %v3473
    %v3475 = vand.u32 %v166, 4294901760
    %v3476 = vsub.f32 %v166, %v3475
    %v3477 = vand.u32 %v3476, 4294901760
    %3478 = vmatprep.subr.mxu0 %v3477
    %v3479 = vand.u32 %v165, 4294901760
    %v3480 = vsub.f32 %v165, %v3479
    %v3481 = vand.u32 %v3480, 4294901760
    %3482 = vmatpush1.msra.mxu0 %v3481
    %v3483 = vand.u32 %v164, 4294901760
    %v3484 = vsub.f32 %v164, %v3483
    %v3485 = vand.u32 %v3484, 4294901760
    %3486 = vmatprep.subr.mxu0 %v3485
    %v3487 = vand.u32 %v163, 4294901760
    %v3488 = vsub.f32 %v163, %v3487
    %v3489 = vand.u32 %v3488, 4294901760
    %3490 = vmatpush1.msra.mxu0 %v3489
    %v3491 = vand.u32 %v162, 4294901760
    %v3492 = vsub.f32 %v162, %v3491
    %v3493 = vand.u32 %v3492, 4294901760
    %3494 = vmatprep.subr.mxu0 %v3493
    %v3495 = vand.u32 %v161, 4294901760
    %v3496 = vsub.f32 %v161, %v3495
    %v3497 = vand.u32 %v3496, 4294901760
    %3498 = vmatpush1.msra.mxu0 %v3497
    %v3499 = vand.u32 %v160, 4294901760
    %v3500 = vsub.f32 %v160, %v3499
    %v3501 = vand.u32 %v3500, 4294901760
    %3502 = vmatprep.subr.mxu0 %v3501
    %v3503 = vand.u32 %v159, 4294901760
    %v3504 = vsub.f32 %v159, %v3503
    %v3505 = vand.u32 %v3504, 4294901760
    %3506 = vmatpush1.msra.mxu0 %v3505
    %v3507 = vand.u32 %v158, 4294901760
    %v3508 = vsub.f32 %v158, %v3507
    %v3509 = vand.u32 %v3508, 4294901760
    %3510 = vmatprep.subr.mxu0 %v3509
    %v3511 = vand.u32 %v157, 4294901760
    %v3512 = vsub.f32 %v157, %v3511
    %v3513 = vand.u32 %v3512, 4294901760
    %3514 = vmatpush1.msra.mxu0 %v3513
    %v3515 = vand.u32 %v156, 4294901760
    %v3516 = vsub.f32 %v156, %v3515
    %v3517 = vand.u32 %v3516, 4294901760
    %3518 = vmatprep.subr.mxu0 %v3517
    %v3519 = vand.u32 %v155, 4294901760
    %v3520 = vsub.f32 %v155, %v3519
    %v3521 = vand.u32 %v3520, 4294901760
    %3522 = vmatpush1.msra.mxu0 %v3521
    %v3523 = vand.u32 %v154, 4294901760
    %v3524 = vsub.f32 %v154, %v3523
    %v3525 = vand.u32 %v3524, 4294901760
    %3526 = vmatprep.subr.mxu0 %v3525
    %v3527 = vand.u32 %v153, 4294901760
    %v3528 = vsub.f32 %v153, %v3527
    %v3529 = vand.u32 %v3528, 4294901760
    %3530 = vmatpush1.msra.mxu0 %v3529
    %3531 = vmatprep.subr.mxu0 0.0
    %3532 = vmatpush2.msra.mxu0 0.0
    %3533 = vmatprep.subr.mxu0 0.0
    %3534 = vmatpush2.msra.mxu0 0.0
    %3535 = vmatprep.subr.mxu0 0.0
    %3536 = vmatpush2.msra.mxu0 0.0
    %3537 = vmatprep.subr.mxu0 0.0
    %3538 = vmatpush2.msra.mxu0 0.0
    %3539 = vmatprep.subr.mxu0 0.0
    %3540 = vmatpush2.msra.mxu0 0.0
    %3541 = vmatprep.subr.mxu0 0.0
    %3542 = vmatpush2.msra.mxu0 0.0
    %3543 = vmatprep.subr.mxu0 0.0
    %3544 = vmatpush2.msra.mxu0 0.0
    %3545 = vmatprep.subr.mxu0 0.0
    %3546 = vmatpush2.msra.mxu0 0.0
    %3547 = vmatprep.subr.mxu0 0.0
    %3548 = vmatpush2.msra.mxu0 0.0
    %3549 = vmatprep.subr.mxu0 0.0
    %3550 = vmatpush2.msra.mxu0 0.0
    %3551 = vmatprep.subr.mxu0 0.0
    %3552 = vmatpush2.msra.mxu0 0.0
    %3553 = vmatprep.subr.mxu0 0.0
    %3554 = vmatpush2.msra.mxu0 0.0
    %3555 = vmatprep.subr.mxu0 0.0
    %3556 = vmatpush2.msra.mxu0 0.0
    %3557 = vmatprep.subr.mxu0 0.0
    %3558 = vmatpush2.msra.mxu0 0.0
    %3559 = vmatprep.subr.mxu0 0.0
    %3560 = vmatpush2.msra.mxu0 0.0
    %3561 = vmatprep.subr.mxu0 0.0
    %3562 = vmatpush2.msra.mxu0 0.0
    %3563 = vmatprep.mubr.f32.mxu0 0.0
    %v3564 = vand.u32 %v2819, 4294901760
    %3565 = vmatmul.mubr.f32.gmra.mxu0 %v3564
    %v3566 = vpop.f32.mrf.mxu0
    %v3567 = vadd.f32 %v3399, %v3566
    %v3568 = vpop.f32.mrf.mxu0
    %v3569 = vadd.f32 %v3401, %v3568
    %3570 = vdwg.mxu0
    %v3571 = vand.u32 %v184, 4294901760
    %3572 = vmatprep.subr.mxu0 %v3571
    %v3573 = vand.u32 %v183, 4294901760
    %3574 = vmatpush1.msra.mxu0 %v3573
    %v3575 = vand.u32 %v182, 4294901760
    %3576 = vmatprep.subr.mxu0 %v3575
    %v3577 = vand.u32 %v181, 4294901760
    %3578 = vmatpush1.msra.mxu0 %v3577
    %v3579 = vand.u32 %v180, 4294901760
    %3580 = vmatprep.subr.mxu0 %v3579
    %v3581 = vand.u32 %v179, 4294901760
    %3582 = vmatpush1.msra.mxu0 %v3581
    %v3583 = vand.u32 %v178, 4294901760
    %3584 = vmatprep.subr.mxu0 %v3583
    %v3585 = vand.u32 %v177, 4294901760
    %3586 = vmatpush1.msra.mxu0 %v3585
    %v3587 = vand.u32 %v176, 4294901760
    %3588 = vmatprep.subr.mxu0 %v3587
    %v3589 = vand.u32 %v175, 4294901760
    %3590 = vmatpush1.msra.mxu0 %v3589
    %v3591 = vand.u32 %v174, 4294901760
    %3592 = vmatprep.subr.mxu0 %v3591
    %v3593 = vand.u32 %v173, 4294901760
    %3594 = vmatpush1.msra.mxu0 %v3593
    %v3595 = vand.u32 %v172, 4294901760
    %3596 = vmatprep.subr.mxu0 %v3595
    %v3597 = vand.u32 %v171, 4294901760
    %3598 = vmatpush1.msra.mxu0 %v3597
    %v3599 = vand.u32 %v170, 4294901760
    %3600 = vmatprep.subr.mxu0 %v3599
    %v3601 = vand.u32 %v169, 4294901760
    %3602 = vmatpush1.msra.mxu0 %v3601
    %v3603 = vand.u32 %v168, 4294901760
    %3604 = vmatprep.subr.mxu0 %v3603
    %v3605 = vand.u32 %v167, 4294901760
    %3606 = vmatpush1.msra.mxu0 %v3605
    %v3607 = vand.u32 %v166, 4294901760
    %3608 = vmatprep.subr.mxu0 %v3607
    %v3609 = vand.u32 %v165, 4294901760
    %3610 = vmatpush1.msra.mxu0 %v3609
    %v3611 = vand.u32 %v164, 4294901760
    %3612 = vmatprep.subr.mxu0 %v3611
    %v3613 = vand.u32 %v163, 4294901760
    %3614 = vmatpush1.msra.mxu0 %v3613
    %v3615 = vand.u32 %v162, 4294901760
    %3616 = vmatprep.subr.mxu0 %v3615
    %v3617 = vand.u32 %v161, 4294901760
    %3618 = vmatpush1.msra.mxu0 %v3617
    %v3619 = vand.u32 %v160, 4294901760
    %3620 = vmatprep.subr.mxu0 %v3619
    %v3621 = vand.u32 %v159, 4294901760
    %3622 = vmatpush1.msra.mxu0 %v3621
    %v3623 = vand.u32 %v158, 4294901760
    %3624 = vmatprep.subr.mxu0 %v3623
    %v3625 = vand.u32 %v157, 4294901760
    %3626 = vmatpush1.msra.mxu0 %v3625
    %v3627 = vand.u32 %v156, 4294901760
    %3628 = vmatprep.subr.mxu0 %v3627
    %v3629 = vand.u32 %v155, 4294901760
    %3630 = vmatpush1.msra.mxu0 %v3629
    %v3631 = vand.u32 %v154, 4294901760
    %3632 = vmatprep.subr.mxu0 %v3631
    %v3633 = vand.u32 %v153, 4294901760
    %3634 = vmatpush1.msra.mxu0 %v3633
    %3635 = vmatprep.subr.mxu0 0.0
    %3636 = vmatpush2.msra.mxu0 0.0
    %3637 = vmatprep.subr.mxu0 0.0
    %3638 = vmatpush2.msra.mxu0 0.0
    %3639 = vmatprep.subr.mxu0 0.0
    %3640 = vmatpush2.msra.mxu0 0.0
    %3641 = vmatprep.subr.mxu0 0.0
    %3642 = vmatpush2.msra.mxu0 0.0
    %3643 = vmatprep.subr.mxu0 0.0
    %3644 = vmatpush2.msra.mxu0 0.0
    %3645 = vmatprep.subr.mxu0 0.0
    %3646 = vmatpush2.msra.mxu0 0.0
    %3647 = vmatprep.subr.mxu0 0.0
    %3648 = vmatpush2.msra.mxu0 0.0
    %3649 = vmatprep.subr.mxu0 0.0
    %3650 = vmatpush2.msra.mxu0 0.0
    %3651 = vmatprep.subr.mxu0 0.0
    %3652 = vmatpush2.msra.mxu0 0.0
    %3653 = vmatprep.subr.mxu0 0.0
    %3654 = vmatpush2.msra.mxu0 0.0
    %3655 = vmatprep.subr.mxu0 0.0
    %3656 = vmatpush2.msra.mxu0 0.0
    %3657 = vmatprep.subr.mxu0 0.0
    %3658 = vmatpush2.msra.mxu0 0.0
    %3659 = vmatprep.subr.mxu0 0.0
    %3660 = vmatpush2.msra.mxu0 0.0
    %3661 = vmatprep.subr.mxu0 0.0
    %3662 = vmatpush2.msra.mxu0 0.0
    %3663 = vmatprep.subr.mxu0 0.0
    %3664 = vmatpush2.msra.mxu0 0.0
    %3665 = vmatprep.subr.mxu0 0.0
    %3666 = vmatpush2.msra.mxu0 0.0
    %3667 = vmatprep.mubr.f32.mxu0 0.0
    %v3668 = vand.u32 %v2819, 4294901760
    %3669 = vmatmul.mubr.f32.gmra.mxu0 %v3668
    %v3670 = vpop.f32.mrf.mxu0
    %v3671 = vadd.f32 %v3567, %v3670
    %v3672 = vpop.f32.mrf.mxu0
    %v3673 = vadd.f32 %v3569, %v3672
    %3674 = vdwg.mxu0
    %v3675 = vadd.f32 %v2806, %v3671
    %v3676 = vadd.f32 %v2807, %v3673
    %v3677 = vld [vmem:[%s5] sm:$0x3]
    %v3679 = vlaneseq
    %v3680 = vshrl.u32 %v3679, 7
    %v3681 = vsub.s32 0, %v3680
    %v3682 = vrot.slane %v3677, %v3681
    %v3683 = vlaneseq
    %v3684 = vshrl.u32 %v3683, 7
    %v3685 = vsub.s32 1, %v3684
    %v3686 = vrot.slane %v3677, %v3685
    %v3689 = vadd.f32 %v3675, %v3682
    %v3690 = vadd.f32 %v3676, %v3686
    %3691 = vst [vmem:[#allocation11] sm:$0xff] %v3689
    %3692 = vst [vmem:[#allocation11 + $0x8] sm:$0xff] %v3690
    // Predicated region
    $region46: #{tpu_custom_call.1} parent=1 // pred_check
      _
    $region47: #{tpu_custom_call.1} parent=1 // pred_check_branch
      %3694 = sbr.rel (0) target = $region49
    $region48: #{tpu_custom_call.1} parent=1 // pred_region
      %s3696 = ssub.s32 256, 256
      %3697 = vsyncadd [#allocation4], %s3696
      %s3699 = sshll.u32 [#allocation11], 4
      %s3700 = int_to_ptr.vmem [resolvable:$true] %s3699
      %3702 = dma.vmem_to_hbm [thread:$0]  %s3700, 256, %s6, [#allocation4]
    $region49: #{tpu_custom_call.1} parent=1 // pred_fallthru
      _
    // Predicated region
    $region50: #{tpu_custom_call.1} parent=1 // pred_check
      _
    $region51: #{tpu_custom_call.1} parent=1 // pred_check_branch
      %3704 = sbr.rel (0) target = $region53
    $region52: #{tpu_custom_call.1} parent=1 // pred_region
      %3705 = dma.done [#allocation4], 256
    $region53: #{tpu_custom_call.1} parent=1 // pred_fallthru
      _
    %3706 = vsyncpa [#allocation3], 1
    %3707 = vsyncpa [#allocation6], 1
    %3708 = vsyncpa [#allocation9], 1
    %3709 = vsyncpa [#allocation4], 1

</llo_original>
